<compile_context>
chip_gen: v6e
topology: v6e:2x2x1
jax: 0.10.0
libtpu: 0.0.40
codegen_flags: <defaults>
</compile_context>

<pallas_src>
import functools

import numpy as np
import jax
import jax.numpy as jnp
from jax import lax
from jax.experimental import pallas as pl
from jax.experimental.pallas import tpu as pltpu


# ---------------------------------------------------------------------------
# Constant shift matrices: (v0 @ S_t) realises the 3x3 taps of a zero-padded
# depthwise conv as plain matmuls (tap order t = ky*3 + kx, offsets ky-1,kx-1).
# ---------------------------------------------------------------------------

def _make_shift_matrices(s):
    ss = s * s
    mats = np.zeros((9, ss, ss), np.float32)
    t = 0
    for dy in (-1, 0, 1):
        for dx in (-1, 0, 1):
            for y in range(s):
                for x in range(s):
                    yy, xx = y + dy, x + dx
                    if 0 <= yy < s and 0 <= xx < s:
                        mats[t, yy * s + xx, y * s + x] = 1.0
            t += 1
    return mats


# ---------------------------------------------------------------------------
# Fused kernel: one grid step == `bt` batch elements.
# ---------------------------------------------------------------------------

def _fused_attention_kernel(x_ref, wq_ref, wk_ref, wv_ref, bq_ref, bk_ref,
                            bv_ref, wproj_ref, wexp_ref, rep_ref, shift_ref,
                            wout_ref, obias_ref, o_ref, *, num_heads, img,
                            n_seq, bt):
    f32 = jnp.float32
    x = x_ref[...]                               # (bt*N, C) — rows = (batch, seq)

    # Per-head q/k/v for the whole batch block: one matmul per head/role on the
    # flattened rows; scale is pre-folded into w_q/b_q.  No lane-axis slicing.
    qs, ks, vs = [], [], []
    for h in range(num_heads):
        qs.append(jnp.dot(x, wq_ref[h], preferred_element_type=f32) + bq_ref[h])
        ks.append(jnp.dot(x, wk_ref[h], preferred_element_type=f32) + bk_ref[h])
        vs.append(jnp.dot(x, wv_ref[h], preferred_element_type=f32) + bv_ref[h])

    rep_mat = rep_ref[...]                       # (img, 9*img) replication matrix
    shift_stack = shift_ref[...]                 # (9*img, img) stacked shift taps
    w_out = wout_ref[...]                        # (dh, C)  to_out weight (natural)
    out_bias = obias_ref[...]                    # (img, C) all tail biases folded

    # NOTE: fully unrolled Python loops are fine at bt<=8 / H=2; switch to
    # lax.fori_loop(unroll=True) with VMEM scratch if larger blocks spill.
    for b in range(bt):
        r0 = b * n_seq                           # sublane-aligned row window
        acc = jnp.zeros((n_seq, img), f32)       # rows = dh index (== seq index)
        conv_blocks = []
        for h in range(num_heads):
            q = qs[h][r0:r0 + n_seq]             # (N, kd)   scale already folded
            k = ks[h][r0:r0 + n_seq]             # (N, kd)
            v = vs[h][r0:r0 + n_seq]             # (N, d)

            # softmax(q k^T) v — scores stay in VMEM, reciprocal on the EUP.
            s = lax.dot_general(q, k, (((1,), (1,)), ((), ())),
                                preferred_element_type=f32)           # (N, N)
            s = s - jnp.max(s, axis=-1, keepdims=True)
            p = jnp.exp(s)
            p = p * pl.reciprocal(jnp.sum(p, axis=-1, keepdims=True), approx=True)
            o = jnp.dot(p, v, preferred_element_type=f32)             # (N, d)

            # proj over the sequence axis (this head's (d, img) slab).
            acc = acc + jnp.dot(o, wproj_ref[h], preferred_element_type=f32)

            # depthwise 3x3 conv branch: hardswish, then all 9 taps as a single
            # K = 9*img matmul; the per-tap lane replication of v0 is an MXU
            # matmul against a constant 0/1 matrix (no tile/concat relayouts).
            v0 = v[:img, :]                                           # (img, img)
            v0 = v0 * jnp.clip(v0 + 3.0, 0.0, 6.0) * (1.0 / 6.0)
            lhs = jnp.dot(v0, rep_mat, preferred_element_type=f32) * wexp_ref[h]
            conv_blocks.append(jnp.dot(lhs, shift_stack,
                                       preferred_element_type=f32))   # (img, img)

        # conv blocks stack to (dh, img); torch adds them row-for-row (N == dh).
        acc = acc + jnp.concatenate(conv_blocks, axis=0)
        # to_out directly in (img, C) orientation: one tiny XLU transpose, one
        # plain matmul, then the pre-folded bias.  No wrapper permute needed.
        out_b = jnp.dot(acc.T, w_out, preferred_element_type=f32) + out_bias
        o_ref[b] = out_b


# ---------------------------------------------------------------------------
# Batch-block selection (v7x has 2 TensorCores; v5e/v6e have one).
# ---------------------------------------------------------------------------

def _pick_batch_block(B, max_bt=8):
    two_core = False
    try:
        kind = jax.devices()[0].device_kind.lower()
        two_core = any(t in kind for t in ('v7', 'v5p', 'v4', 'v3'))
    except Exception:
        pass
    min_steps = 2 if two_core else 1            # keep both TCs busy on v7x
    bt = max(1, min(max_bt, B // min_steps))
    while B % bt:
        bt -= 1
    return bt


# ---------------------------------------------------------------------------
# Forward pass (single fused pallas_call, output already (B, img, C))
# ---------------------------------------------------------------------------

def attention_forward(x, kp, cfg):
    B, N, C = x.shape
    H, d, dh, img = cfg['num_heads'], cfg['d'], cfg['dh'], cfg['img_shape']
    assert N == dh and d == img, "fused kernel assumes att_shape == dh and d == img"

    bt = _pick_batch_block(B)
    steps = B // bt

    kernel = functools.partial(_fused_attention_kernel, num_heads=H, img=img,
                               n_seq=N, bt=bt)
    x2 = x.reshape(B * N, C)          # metadata-only reshape; rows = (batch, seq)

    out = pl.pallas_call(
        kernel,
        out_shape=jax.ShapeDtypeStruct((B, img, C), jnp.float32),
        grid=(steps,),
        in_specs=[
            pl.BlockSpec((bt * N, C), lambda g: (g, 0)),
            pl.BlockSpec(kp['w_q'].shape, lambda g: (0, 0, 0)),
            pl.BlockSpec(kp['w_k'].shape, lambda g: (0, 0, 0)),
            pl.BlockSpec(kp['w_v'].shape, lambda g: (0, 0, 0)),
            pl.BlockSpec(kp['b_q'].shape, lambda g: (0, 0, 0)),
            pl.BlockSpec(kp['b_k'].shape, lambda g: (0, 0, 0)),
            pl.BlockSpec(kp['b_v'].shape, lambda g: (0, 0, 0)),
            pl.BlockSpec(kp['w_proj'].shape, lambda g: (0, 0, 0)),
            pl.BlockSpec(kp['w_exp'].shape, lambda g: (0, 0, 0)),
            pl.BlockSpec(kp['rep_mat'].shape, lambda g: (0, 0)),
            pl.BlockSpec(kp['shift_stack'].shape, lambda g: (0, 0)),
            pl.BlockSpec(kp['w_out'].shape, lambda g: (0, 0)),
            pl.BlockSpec(kp['out_bias'].shape, lambda g: (0, 0)),
        ],
        out_specs=pl.BlockSpec((bt, img, C), lambda g: (g, 0, 0)),
        compiler_params=pltpu.CompilerParams(dimension_semantics=("parallel",)),
    )(x2, kp['w_q'], kp['w_k'], kp['w_v'], kp['b_q'], kp['b_k'], kp['b_v'],
      kp['w_proj'], kp['w_exp'], kp['rep_mat'], kp['shift_stack'],
      kp['w_out'], kp['out_bias'])
    return out


# ---------------------------------------------------------------------------
# One-time repack of canonical params into kernel-ready layouts.
# ---------------------------------------------------------------------------

def prepare_kernel_params(params, cfg):
    H, kd, d, dh = cfg['num_heads'], cfg['key_dim'], cfg['d'], cfg['dh']
    C, img = cfg['dim'], cfg['img_shape']
    s = int(round(img ** 0.5))
    assert s * s == img
    scale = float(kd) ** -0.5
    piece = 2 * kd + d

    # qkv weight/bias pre-split per head & role; attention scale folded into q.
    w_qkv = params['w_qkv'].reshape(C, H, piece)
    b_qkv = params['b_qkv'].reshape(H, piece)
    w_q = jnp.transpose(w_qkv[:, :, :kd], (1, 0, 2)) * scale        # (H, C, kd)
    w_k = jnp.transpose(w_qkv[:, :, kd:2 * kd], (1, 0, 2))          # (H, C, kd)
    w_v = jnp.transpose(w_qkv[:, :, 2 * kd:], (1, 0, 2))            # (H, C, d)
    b_q = (b_qkv[:, :kd] * scale)[:, None, :]                       # (H, 1, kd)
    b_k = b_qkv[:, kd:2 * kd][:, None, :]                           # (H, 1, kd)
    b_v = b_qkv[:, 2 * kd:][:, None, :]                             # (H, 1, d)

    # proj weight per head (leading-axis indexed in kernel).
    w_proj = params['w_proj'].reshape(H, d, img)                    # (H, d, img)

    # Depthwise-conv constants: stacked shift (9*img, img), lane-replication
    # matrix (img, 9*img), per-head expanded tap weights (H, img, 9*img) with
    # w_exp[h, i, t*img + j] = w_conv[t, h*img + i].
    shift = _make_shift_matrices(s)
    shift_stack = jnp.asarray(shift.reshape(9 * img, img))
    rep_mat = jnp.asarray(np.tile(np.eye(img, dtype=np.float32), (1, 9)))
    wct = params['w_conv_taps'][:, :, 0].reshape(9, H, img)
    w_exp = jnp.broadcast_to(wct[:, :, :, None], (9, H, img, img))
    w_exp = jnp.transpose(w_exp, (1, 2, 0, 3)).reshape(H, img, 9 * img)

    # to_out weight in natural (dh, C) orientation; all additive biases of the
    # proj/conv/to_out tail folded into one (img, C) constant:
    #   out_bias[m, c] = b_proj[m]*sum_r Wout[c,r] + sum_r b_conv[r]*Wout[c,r] + b_out[c]
    w_out_t = params['w_out_t']                                     # (C, dh)
    out_bias = (params['b_proj'][0][:, None] * jnp.sum(w_out_t, axis=1)[None, :]
                + (w_out_t @ params['b_conv'][:, 0])[None, :]
                + params['b_out'][:, 0][None, :])                   # (img, C)

    return dict(w_q=w_q, w_k=w_k, w_v=w_v, b_q=b_q, b_k=b_k, b_v=b_v,
                w_proj=w_proj, w_exp=w_exp, rep_mat=rep_mat,
                shift_stack=shift_stack, w_out=w_out_t.T, out_bias=out_bias)


# ---------------------------------------------------------------------------
# Deterministic parameter init (synthetic; canonical layouts)
# ---------------------------------------------------------------------------

def init_params(key, cfg):
    dim, h, dh = cfg['dim'], cfg['h'], cfg['dh']
    att, img = cfg['att_shape'], cfg['img_shape']
    ks = jax.random.split(key, 11)
    w_qkv_lin = 0.05 * jax.random.normal(ks[0], (dim, h), jnp.float32)
    bn_gamma = 1.0 + 0.1 * jax.random.normal(ks[1], (h,), jnp.float32)
    bn_beta = 0.1 * jax.random.normal(ks[2], (h,), jnp.float32)
    bn_mean = 0.1 * jax.random.normal(ks[3], (h,), jnp.float32)
    bn_var = 1.0 + 0.5 * jax.random.uniform(ks[4], (h,), jnp.float32)
    bn_scale = bn_gamma / jnp.sqrt(bn_var + 1e-5)
    return {
        'w_qkv': w_qkv_lin * bn_scale[None, :],                # (dim, h), BN fused (eval)
        'b_qkv': (bn_beta - bn_mean * bn_scale)[None, :],      # (1, h)
        'w_conv_taps': 0.2 * jax.random.normal(ks[5], (9, dh, 1), jnp.float32),
        'b_conv': 0.1 * jax.random.normal(ks[6], (dh, 1), jnp.float32),
        'w_proj': 0.05 * jax.random.normal(ks[7], (att, img), jnp.float32),
        'b_proj': 0.1 * jax.random.normal(ks[8], (1, img), jnp.float32),
        'w_out_t': 0.05 * jax.random.normal(ks[9], (dim, dh), jnp.float32),
        'b_out': 0.1 * jax.random.normal(ks[10], (dim, 1), jnp.float32),
    }


# ---------------------------------------------------------------------------
# Pure-JAX reference (mirrors the PyTorch forward)
# ---------------------------------------------------------------------------

def reference_forward(x, params, cfg):
    B, N, C = x.shape
    H, kd, d, dh = cfg['num_heads'], cfg['key_dim'], cfg['d'], cfg['dh']
    img = cfg['img_shape']
    s = int(round(img ** 0.5))
    hs = lambda t: t * jnp.clip(t + 3.0, 0.0, 6.0) / 6.0
    dot = functools.partial(jnp.einsum, precision=lax.Precision.HIGHEST)

    qkv = dot('bnc,ch->bnh', x, params['w_qkv']) + params['b_qkv']
    qkv = qkv.reshape(B, N, H, 2 * kd + d)
    q = jnp.transpose(qkv[..., :kd], (0, 2, 1, 3))
    k = jnp.transpose(qkv[..., kd:2 * kd], (0, 2, 1, 3))
    v = jnp.transpose(qkv[..., 2 * kd:], (0, 2, 1, 3))

    v0 = hs(v[:, :, :img, :].reshape(B, dh, s, s))
    w_oihw = jnp.transpose(params['w_conv_taps'][:, :, 0], (1, 0)).reshape(dh, 1, 3, 3)
    v_conv = lax.conv_general_dilated(
        v0, w_oihw, (1, 1), ((1, 1), (1, 1)),
        dimension_numbers=('NCHW', 'OIHW', 'NCHW'),
        feature_group_count=dh, precision=lax.Precision.HIGHEST)
    v_conv = (v_conv + params['b_conv'][:, 0][None, :, None, None]).reshape(B, dh, img)

    attn = dot('bhnk,bhmk->bhnm', q, k) * (kd ** -0.5)
    attn = jax.nn.softmax(attn, axis=-1)
    out = dot('bhnm,bhmd->bhnd', attn, v)
    out = jnp.transpose(out, (0, 2, 1, 3)).reshape(B, dh, N)
    out = dot('bdn,ni->bdi', out, params['w_proj']) + params['b_proj']
    out = out + v_conv
    out = jnp.transpose(out, (0, 2, 1))
    out = dot('bid,cd->bic', out, params['w_out_t']) + params['b_out'][:, 0]
    return out


if __name__ == "__main__":
    cfg = dict(dim=16, img_shape=16, att_shape=32,
               key_dim=8, num_heads=2, attn_ratio=2)
    cfg['d'] = int(cfg['attn_ratio'] * cfg['key_dim'])      # 16
    cfg['dh'] = cfg['d'] * cfg['num_heads']                  # 32
    cfg['nh_kd'] = cfg['key_dim'] * cfg['num_heads']         # 16
    cfg['h'] = cfg['dh'] + 2 * cfg['nh_kd']                  # 64

    key = jax.random.PRNGKey(0)
    kx, kparam = jax.random.split(key)
    B = 2
    x = jax.random.normal(kx, (B, cfg['att_shape'], cfg['dim']), jnp.float32)
    params = init_params(kparam, cfg)
    kernel_params = prepare_kernel_params(params, cfg)

    fwd = jax.jit(functools.partial(attention_forward, cfg=cfg))
    out = jax.block_until_ready(fwd(x, kernel_params))

    ref = reference_forward(x, params, cfg)
    assert out.shape == (B, cfg['img_shape'], cfg['dim']), out.shape
    max_err = float(jnp.max(jnp.abs(out - ref)))
    assert jnp.allclose(out, ref, atol=1e-2, rtol=1e-2), max_err
    print("KERNEL_OK")
</pallas_src>

<mosaic_0001>
module attributes {stable_mosaic.version = 11 : i64} {
  func.func @_fused_attention_kernel(%arg0: i32, %arg1: memref<64x16xf32, #tpu.memory_space<vmem>>, %arg2: memref<2x16x8xf32, #tpu.memory_space<vmem>>, %arg3: memref<2x16x8xf32, #tpu.memory_space<vmem>>, %arg4: memref<2x16x16xf32, #tpu.memory_space<vmem>>, %arg5: memref<2x1x8xf32, #tpu.memory_space<vmem>>, %arg6: memref<2x1x8xf32, #tpu.memory_space<vmem>>, %arg7: memref<2x1x16xf32, #tpu.memory_space<vmem>>, %arg8: memref<2x16x16xf32, #tpu.memory_space<vmem>>, %arg9: memref<2x16x144xf32, #tpu.memory_space<vmem>>, %arg10: memref<16x144xf32, #tpu.memory_space<vmem>>, %arg11: memref<144x16xf32, #tpu.memory_space<vmem>>, %arg12: memref<32x16xf32, #tpu.memory_space<vmem>>, %arg13: memref<16x16xf32, #tpu.memory_space<vmem>>, %arg14: memref<2x16x16xf32, #tpu.memory_space<vmem>>) attributes {dimension_semantics = [#tpu.dimension_semantics<parallel>], iteration_bounds = array<i64: 1>, scalar_prefetch = 0 : i64, scratch_operands = 0 : i64, tpu.core_type = #tpu.core_type<tc>, window_params = [{transform_indices = @transform_0, window_bounds = array<i64: 64, 16>}, {pipeline_mode = #tpu.pipeline_mode<synchronous>, transform_indices = @transform_1, window_bounds = array<i64: 2, 16, 8>}, {pipeline_mode = #tpu.pipeline_mode<synchronous>, transform_indices = @transform_2, window_bounds = array<i64: 2, 16, 8>}, {pipeline_mode = #tpu.pipeline_mode<synchronous>, transform_indices = @transform_3, window_bounds = array<i64: 2, 16, 16>}, {pipeline_mode = #tpu.pipeline_mode<synchronous>, transform_indices = @transform_4, window_bounds = array<i64: 2, 1, 8>}, {pipeline_mode = #tpu.pipeline_mode<synchronous>, transform_indices = @transform_5, window_bounds = array<i64: 2, 1, 8>}, {pipeline_mode = #tpu.pipeline_mode<synchronous>, transform_indices = @transform_6, window_bounds = array<i64: 2, 1, 16>}, {pipeline_mode = #tpu.pipeline_mode<synchronous>, transform_indices = @transform_7, window_bounds = array<i64: 2, 16, 16>}, {pipeline_mode = #tpu.pipeline_mode<synchronous>, transform_indices = @transform_8, window_bounds = array<i64: 2, 16, 144>}, {pipeline_mode = #tpu.pipeline_mode<synchronous>, transform_indices = @transform_9, window_bounds = array<i64: 16, 144>}, {pipeline_mode = #tpu.pipeline_mode<synchronous>, transform_indices = @transform_10, window_bounds = array<i64: 144, 16>}, {pipeline_mode = #tpu.pipeline_mode<synchronous>, transform_indices = @transform_11, window_bounds = array<i64: 32, 16>}, {pipeline_mode = #tpu.pipeline_mode<synchronous>, transform_indices = @transform_12, window_bounds = array<i64: 16, 16>}, {transform_indices = @transform_13, window_bounds = array<i64: 2, 16, 16>}]} {
    %c0 = arith.constant 0 : index
    %c0_0 = arith.constant 0 : index
    %0 = vector.load %arg1[%c0, %c0_0] : memref<64x16xf32, #tpu.memory_space<vmem>>, vector<64x16xf32>
    %c0_1 = arith.constant 0 : index
    %c0_2 = arith.constant 0 : index
    %c0_3 = arith.constant 0 : index
    %1 = vector.load %arg2[%c0_1, %c0_2, %c0_3] : memref<2x16x8xf32, #tpu.memory_space<vmem>>, vector<1x16x8xf32>
    %2 = vector.shape_cast %1 : vector<1x16x8xf32> to vector<16x8xf32>
    %cst = arith.constant dense<0.000000e+00> : vector<64x8xf32>
    %3 = tpu.matmul %0, %2, %cst {dimension_numbers = #tpu.dot_dimension_numbers<[1], [0], [0], [1], [0, 0, 1, 1], [], []>} : vector<64x16xf32>, vector<16x8xf32>, vector<64x8xf32> -> vector<64x8xf32>
    %c0_4 = arith.constant 0 : index
    %c0_5 = arith.constant 0 : index
    %c0_6 = arith.constant 0 : index
    %4 = vector.load %arg5[%c0_4, %c0_5, %c0_6] : memref<2x1x8xf32, #tpu.memory_space<vmem>>, vector<1x1x8xf32>
    %5 = vector.shape_cast %4 : vector<1x1x8xf32> to vector<1x8xf32>
    %6 = vector.broadcast %5 : vector<1x8xf32> to vector<64x8xf32>
    %7 = arith.addf %3, %6 : vector<64x8xf32>
    %c0_7 = arith.constant 0 : index
    %c0_8 = arith.constant 0 : index
    %c0_9 = arith.constant 0 : index
    %8 = vector.load %arg3[%c0_7, %c0_8, %c0_9] : memref<2x16x8xf32, #tpu.memory_space<vmem>>, vector<1x16x8xf32>
    %9 = vector.shape_cast %8 : vector<1x16x8xf32> to vector<16x8xf32>
    %cst_10 = arith.constant dense<0.000000e+00> : vector<64x8xf32>
    %10 = tpu.matmul %0, %9, %cst_10 {dimension_numbers = #tpu.dot_dimension_numbers<[1], [0], [0], [1], [0, 0, 1, 1], [], []>} : vector<64x16xf32>, vector<16x8xf32>, vector<64x8xf32> -> vector<64x8xf32>
    %c0_11 = arith.constant 0 : index
    %c0_12 = arith.constant 0 : index
    %c0_13 = arith.constant 0 : index
    %11 = vector.load %arg6[%c0_11, %c0_12, %c0_13] : memref<2x1x8xf32, #tpu.memory_space<vmem>>, vector<1x1x8xf32>
    %12 = vector.shape_cast %11 : vector<1x1x8xf32> to vector<1x8xf32>
    %13 = vector.broadcast %12 : vector<1x8xf32> to vector<64x8xf32>
    %14 = arith.addf %10, %13 : vector<64x8xf32>
    %c0_14 = arith.constant 0 : index
    %c0_15 = arith.constant 0 : index
    %c0_16 = arith.constant 0 : index
    %15 = vector.load %arg4[%c0_14, %c0_15, %c0_16] : memref<2x16x16xf32, #tpu.memory_space<vmem>>, vector<1x16x16xf32>
    %16 = vector.shape_cast %15 : vector<1x16x16xf32> to vector<16x16xf32>
    %cst_17 = arith.constant dense<0.000000e+00> : vector<64x16xf32>
    %17 = tpu.matmul %0, %16, %cst_17 {dimension_numbers = #tpu.dot_dimension_numbers<[1], [0], [0], [1], [0, 0, 1, 1], [], []>} : vector<64x16xf32>, vector<16x16xf32>, vector<64x16xf32> -> vector<64x16xf32>
    %c0_18 = arith.constant 0 : index
    %c0_19 = arith.constant 0 : index
    %c0_20 = arith.constant 0 : index
    %18 = vector.load %arg7[%c0_18, %c0_19, %c0_20] : memref<2x1x16xf32, #tpu.memory_space<vmem>>, vector<1x1x16xf32>
    %19 = vector.shape_cast %18 : vector<1x1x16xf32> to vector<1x16xf32>
    %20 = vector.broadcast %19 : vector<1x16xf32> to vector<64x16xf32>
    %21 = arith.addf %17, %20 : vector<64x16xf32>
    %c1 = arith.constant 1 : index
    %c0_21 = arith.constant 0 : index
    %c0_22 = arith.constant 0 : index
    %22 = vector.load %arg2[%c1, %c0_21, %c0_22] : memref<2x16x8xf32, #tpu.memory_space<vmem>>, vector<1x16x8xf32>
    %23 = vector.shape_cast %22 : vector<1x16x8xf32> to vector<16x8xf32>
    %cst_23 = arith.constant dense<0.000000e+00> : vector<64x8xf32>
    %24 = tpu.matmul %0, %23, %cst_23 {dimension_numbers = #tpu.dot_dimension_numbers<[1], [0], [0], [1], [0, 0, 1, 1], [], []>} : vector<64x16xf32>, vector<16x8xf32>, vector<64x8xf32> -> vector<64x8xf32>
    %c1_24 = arith.constant 1 : index
    %c0_25 = arith.constant 0 : index
    %c0_26 = arith.constant 0 : index
    %25 = vector.load %arg5[%c1_24, %c0_25, %c0_26] : memref<2x1x8xf32, #tpu.memory_space<vmem>>, vector<1x1x8xf32>
    %26 = vector.shape_cast %25 : vector<1x1x8xf32> to vector<1x8xf32>
    %27 = vector.broadcast %26 : vector<1x8xf32> to vector<64x8xf32>
    %28 = arith.addf %24, %27 : vector<64x8xf32>
    %c1_27 = arith.constant 1 : index
    %c0_28 = arith.constant 0 : index
    %c0_29 = arith.constant 0 : index
    %29 = vector.load %arg3[%c1_27, %c0_28, %c0_29] : memref<2x16x8xf32, #tpu.memory_space<vmem>>, vector<1x16x8xf32>
    %30 = vector.shape_cast %29 : vector<1x16x8xf32> to vector<16x8xf32>
    %cst_30 = arith.constant dense<0.000000e+00> : vector<64x8xf32>
    %31 = tpu.matmul %0, %30, %cst_30 {dimension_numbers = #tpu.dot_dimension_numbers<[1], [0], [0], [1], [0, 0, 1, 1], [], []>} : vector<64x16xf32>, vector<16x8xf32>, vector<64x8xf32> -> vector<64x8xf32>
    %c1_31 = arith.constant 1 : index
    %c0_32 = arith.constant 0 : index
    %c0_33 = arith.constant 0 : index
    %32 = vector.load %arg6[%c1_31, %c0_32, %c0_33] : memref<2x1x8xf32, #tpu.memory_space<vmem>>, vector<1x1x8xf32>
    %33 = vector.shape_cast %32 : vector<1x1x8xf32> to vector<1x8xf32>
    %34 = vector.broadcast %33 : vector<1x8xf32> to vector<64x8xf32>
    %35 = arith.addf %31, %34 : vector<64x8xf32>
    %c1_34 = arith.constant 1 : index
    %c0_35 = arith.constant 0 : index
    %c0_36 = arith.constant 0 : index
    %36 = vector.load %arg4[%c1_34, %c0_35, %c0_36] : memref<2x16x16xf32, #tpu.memory_space<vmem>>, vector<1x16x16xf32>
    %37 = vector.shape_cast %36 : vector<1x16x16xf32> to vector<16x16xf32>
    %cst_37 = arith.constant dense<0.000000e+00> : vector<64x16xf32>
    %38 = tpu.matmul %0, %37, %cst_37 {dimension_numbers = #tpu.dot_dimension_numbers<[1], [0], [0], [1], [0, 0, 1, 1], [], []>} : vector<64x16xf32>, vector<16x16xf32>, vector<64x16xf32> -> vector<64x16xf32>
    %c1_38 = arith.constant 1 : index
    %c0_39 = arith.constant 0 : index
    %c0_40 = arith.constant 0 : index
    %39 = vector.load %arg7[%c1_38, %c0_39, %c0_40] : memref<2x1x16xf32, #tpu.memory_space<vmem>>, vector<1x1x16xf32>
    %40 = vector.shape_cast %39 : vector<1x1x16xf32> to vector<1x16xf32>
    %41 = vector.broadcast %40 : vector<1x16xf32> to vector<64x16xf32>
    %42 = arith.addf %38, %41 : vector<64x16xf32>
    %c0_41 = arith.constant 0 : index
    %c0_42 = arith.constant 0 : index
    %43 = vector.load %arg10[%c0_41, %c0_42] : memref<16x144xf32, #tpu.memory_space<vmem>>, vector<16x144xf32>
    %c0_43 = arith.constant 0 : index
    %c0_44 = arith.constant 0 : index
    %44 = vector.load %arg11[%c0_43, %c0_44] : memref<144x16xf32, #tpu.memory_space<vmem>>, vector<144x16xf32>
    %c0_45 = arith.constant 0 : index
    %c0_46 = arith.constant 0 : index
    %45 = vector.load %arg12[%c0_45, %c0_46] : memref<32x16xf32, #tpu.memory_space<vmem>>, vector<32x16xf32>
    %c0_47 = arith.constant 0 : index
    %c0_48 = arith.constant 0 : index
    %46 = vector.load %arg13[%c0_47, %c0_48] : memref<16x16xf32, #tpu.memory_space<vmem>>, vector<16x16xf32>
    %cst_49 = arith.constant 0.000000e+00 : f32
    %47 = vector.broadcast %cst_49 : f32 to vector<32x16xf32>
    %48 = vector.extract_strided_slice %7 {offsets = [0, 0], sizes = [32, 8], strides = [1, 1]} : vector<64x8xf32> to vector<32x8xf32>
    %49 = vector.extract_strided_slice %14 {offsets = [0, 0], sizes = [32, 8], strides = [1, 1]} : vector<64x8xf32> to vector<32x8xf32>
    %50 = vector.extract_strided_slice %21 {offsets = [0, 0], sizes = [32, 16], strides = [1, 1]} : vector<64x16xf32> to vector<32x16xf32>
    %cst_50 = arith.constant dense<0.000000e+00> : vector<32x32xf32>
    %51 = tpu.matmul %48, %49, %cst_50 {dimension_numbers = #tpu.dot_dimension_numbers<[1], [1], [0], [0], [0, 0, 1, 0], [], []>} : vector<32x8xf32>, vector<32x8xf32>, vector<32x32xf32> -> vector<32x32xf32>
    %cst_51 = arith.constant dense<0xFF800000> : vector<32xf32>
    %52 = vector.multi_reduction <maximumf>, %51, %cst_51 [1] : vector<32x32xf32> to vector<32xf32>
    %53 = vector.shape_cast %52 : vector<32xf32> to vector<32x1xf32>
    %54 = vector.broadcast %53 : vector<32x1xf32> to vector<32x32xf32>
    %55 = arith.subf %51, %54 : vector<32x32xf32>
    %56 = math.exp %55 : vector<32x32xf32>
    %cst_52 = arith.constant dense<0.000000e+00> : vector<32xf32>
    %57 = vector.multi_reduction <add>, %56, %cst_52 [1] : vector<32x32xf32> to vector<32xf32>
    %58 = vector.shape_cast %57 : vector<32xf32> to vector<32x1xf32>
    %59 = tpu.reciprocal %58 {approx = true} : vector<32x1xf32> -> vector<32x1xf32>
    %60 = vector.broadcast %59 : vector<32x1xf32> to vector<32x32xf32>
    %61 = arith.mulf %56, %60 : vector<32x32xf32>
    %cst_53 = arith.constant dense<0.000000e+00> : vector<32x16xf32>
    %62 = tpu.matmul %61, %50, %cst_53 {dimension_numbers = #tpu.dot_dimension_numbers<[1], [0], [0], [1], [0, 0, 1, 1], [], []>} : vector<32x32xf32>, vector<32x16xf32>, vector<32x16xf32> -> vector<32x16xf32>
    %c0_54 = arith.constant 0 : index
    %c0_55 = arith.constant 0 : index
    %c0_56 = arith.constant 0 : index
    %63 = vector.load %arg8[%c0_54, %c0_55, %c0_56] : memref<2x16x16xf32, #tpu.memory_space<vmem>>, vector<1x16x16xf32>
    %64 = vector.shape_cast %63 : vector<1x16x16xf32> to vector<16x16xf32>
    %cst_57 = arith.constant dense<0.000000e+00> : vector<32x16xf32>
    %65 = tpu.matmul %62, %64, %cst_57 {dimension_numbers = #tpu.dot_dimension_numbers<[1], [0], [0], [1], [0, 0, 1, 1], [], []>} : vector<32x16xf32>, vector<16x16xf32>, vector<32x16xf32> -> vector<32x16xf32>
    %66 = arith.addf %47, %65 : vector<32x16xf32>
    %67 = vector.extract_strided_slice %50 {offsets = [0, 0], sizes = [16, 16], strides = [1, 1]} : vector<32x16xf32> to vector<16x16xf32>
    %cst_58 = arith.constant 3.000000e+00 : f32
    %68 = vector.broadcast %cst_58 : f32 to vector<16x16xf32>
    %69 = arith.addf %67, %68 : vector<16x16xf32>
    %cst_59 = arith.constant 0.000000e+00 : f32
    %cst_60 = arith.constant 6.000000e+00 : f32
    %70 = vector.broadcast %cst_59 : f32 to vector<16x16xf32>
    %71 = arith.maximumf %70, %69 : vector<16x16xf32>
    %72 = vector.broadcast %cst_60 : f32 to vector<16x16xf32>
    %73 = arith.minimumf %72, %71 : vector<16x16xf32>
    %74 = arith.mulf %67, %73 : vector<16x16xf32>
    %cst_61 = arith.constant 0.166666672 : f32
    %75 = vector.broadcast %cst_61 : f32 to vector<16x16xf32>
    %76 = arith.mulf %74, %75 : vector<16x16xf32>
    %cst_62 = arith.constant dense<0.000000e+00> : vector<16x144xf32>
    %77 = tpu.matmul %76, %43, %cst_62 {dimension_numbers = #tpu.dot_dimension_numbers<[1], [0], [0], [1], [0, 0, 1, 1], [], []>} : vector<16x16xf32>, vector<16x144xf32>, vector<16x144xf32> -> vector<16x144xf32>
    %c0_63 = arith.constant 0 : index
    %c0_64 = arith.constant 0 : index
    %c0_65 = arith.constant 0 : index
    %78 = vector.load %arg9[%c0_63, %c0_64, %c0_65] : memref<2x16x144xf32, #tpu.memory_space<vmem>>, vector<1x16x144xf32>
    %79 = vector.shape_cast %78 : vector<1x16x144xf32> to vector<16x144xf32>
    %80 = arith.mulf %77, %79 : vector<16x144xf32>
    %cst_66 = arith.constant dense<0.000000e+00> : vector<16x16xf32>
    %81 = tpu.matmul %80, %44, %cst_66 {dimension_numbers = #tpu.dot_dimension_numbers<[1], [0], [0], [1], [0, 0, 1, 1], [], []>} : vector<16x144xf32>, vector<144x16xf32>, vector<16x16xf32> -> vector<16x16xf32>
    %82 = vector.extract_strided_slice %28 {offsets = [0, 0], sizes = [32, 8], strides = [1, 1]} : vector<64x8xf32> to vector<32x8xf32>
    %83 = vector.extract_strided_slice %35 {offsets = [0, 0], sizes = [32, 8], strides = [1, 1]} : vector<64x8xf32> to vector<32x8xf32>
    %84 = vector.extract_strided_slice %42 {offsets = [0, 0], sizes = [32, 16], strides = [1, 1]} : vector<64x16xf32> to vector<32x16xf32>
    %cst_67 = arith.constant dense<0.000000e+00> : vector<32x32xf32>
    %85 = tpu.matmul %82, %83, %cst_67 {dimension_numbers = #tpu.dot_dimension_numbers<[1], [1], [0], [0], [0, 0, 1, 0], [], []>} : vector<32x8xf32>, vector<32x8xf32>, vector<32x32xf32> -> vector<32x32xf32>
    %cst_68 = arith.constant dense<0xFF800000> : vector<32xf32>
    %86 = vector.multi_reduction <maximumf>, %85, %cst_68 [1] : vector<32x32xf32> to vector<32xf32>
    %87 = vector.shape_cast %86 : vector<32xf32> to vector<32x1xf32>
    %88 = vector.broadcast %87 : vector<32x1xf32> to vector<32x32xf32>
    %89 = arith.subf %85, %88 : vector<32x32xf32>
    %90 = math.exp %89 : vector<32x32xf32>
    %cst_69 = arith.constant dense<0.000000e+00> : vector<32xf32>
    %91 = vector.multi_reduction <add>, %90, %cst_69 [1] : vector<32x32xf32> to vector<32xf32>
    %92 = vector.shape_cast %91 : vector<32xf32> to vector<32x1xf32>
    %93 = tpu.reciprocal %92 {approx = true} : vector<32x1xf32> -> vector<32x1xf32>
    %94 = vector.broadcast %93 : vector<32x1xf32> to vector<32x32xf32>
    %95 = arith.mulf %90, %94 : vector<32x32xf32>
    %cst_70 = arith.constant dense<0.000000e+00> : vector<32x16xf32>
    %96 = tpu.matmul %95, %84, %cst_70 {dimension_numbers = #tpu.dot_dimension_numbers<[1], [0], [0], [1], [0, 0, 1, 1], [], []>} : vector<32x32xf32>, vector<32x16xf32>, vector<32x16xf32> -> vector<32x16xf32>
    %c1_71 = arith.constant 1 : index
    %c0_72 = arith.constant 0 : index
    %c0_73 = arith.constant 0 : index
    %97 = vector.load %arg8[%c1_71, %c0_72, %c0_73] : memref<2x16x16xf32, #tpu.memory_space<vmem>>, vector<1x16x16xf32>
    %98 = vector.shape_cast %97 : vector<1x16x16xf32> to vector<16x16xf32>
    %cst_74 = arith.constant dense<0.000000e+00> : vector<32x16xf32>
    %99 = tpu.matmul %96, %98, %cst_74 {dimension_numbers = #tpu.dot_dimension_numbers<[1], [0], [0], [1], [0, 0, 1, 1], [], []>} : vector<32x16xf32>, vector<16x16xf32>, vector<32x16xf32> -> vector<32x16xf32>
    %100 = arith.addf %66, %99 : vector<32x16xf32>
    %101 = vector.extract_strided_slice %84 {offsets = [0, 0], sizes = [16, 16], strides = [1, 1]} : vector<32x16xf32> to vector<16x16xf32>
    %cst_75 = arith.constant 3.000000e+00 : f32
    %102 = vector.broadcast %cst_75 : f32 to vector<16x16xf32>
    %103 = arith.addf %101, %102 : vector<16x16xf32>
    %cst_76 = arith.constant 0.000000e+00 : f32
    %cst_77 = arith.constant 6.000000e+00 : f32
    %104 = vector.broadcast %cst_76 : f32 to vector<16x16xf32>
    %105 = arith.maximumf %104, %103 : vector<16x16xf32>
    %106 = vector.broadcast %cst_77 : f32 to vector<16x16xf32>
    %107 = arith.minimumf %106, %105 : vector<16x16xf32>
    %108 = arith.mulf %101, %107 : vector<16x16xf32>
    %cst_78 = arith.constant 0.166666672 : f32
    %109 = vector.broadcast %cst_78 : f32 to vector<16x16xf32>
    %110 = arith.mulf %108, %109 : vector<16x16xf32>
    %cst_79 = arith.constant dense<0.000000e+00> : vector<16x144xf32>
    %111 = tpu.matmul %110, %43, %cst_79 {dimension_numbers = #tpu.dot_dimension_numbers<[1], [0], [0], [1], [0, 0, 1, 1], [], []>} : vector<16x16xf32>, vector<16x144xf32>, vector<16x144xf32> -> vector<16x144xf32>
    %c1_80 = arith.constant 1 : index
    %c0_81 = arith.constant 0 : index
    %c0_82 = arith.constant 0 : index
    %112 = vector.load %arg9[%c1_80, %c0_81, %c0_82] : memref<2x16x144xf32, #tpu.memory_space<vmem>>, vector<1x16x144xf32>
    %113 = vector.shape_cast %112 : vector<1x16x144xf32> to vector<16x144xf32>
    %114 = arith.mulf %111, %113 : vector<16x144xf32>
    %cst_83 = arith.constant dense<0.000000e+00> : vector<16x16xf32>
    %115 = tpu.matmul %114, %44, %cst_83 {dimension_numbers = #tpu.dot_dimension_numbers<[1], [0], [0], [1], [0, 0, 1, 1], [], []>} : vector<16x144xf32>, vector<144x16xf32>, vector<16x16xf32> -> vector<16x16xf32>
    %116 = tpu.concatenate %81, %115 in 0 : vector<16x16xf32>, vector<16x16xf32> -> vector<32x16xf32>
    %117 = arith.addf %100, %116 : vector<32x16xf32>
    %118 = tpu.transpose %117, [1, 0] : vector<32x16xf32> -> vector<16x32xf32>
    %cst_84 = arith.constant dense<0.000000e+00> : vector<16x16xf32>
    %119 = tpu.matmul %118, %45, %cst_84 {dimension_numbers = #tpu.dot_dimension_numbers<[1], [0], [0], [1], [0, 0, 1, 1], [], []>} : vector<16x32xf32>, vector<32x16xf32>, vector<16x16xf32> -> vector<16x16xf32>
    %120 = arith.addf %119, %46 : vector<16x16xf32>
    %c0_85 = arith.constant 0 : index
    %c0_86 = arith.constant 0 : index
    %c0_87 = arith.constant 0 : index
    %121 = vector.load %arg14[%c0_85, %c0_86, %c0_87] : memref<2x16x16xf32, #tpu.memory_space<vmem>>, vector<1x16x16xf32>
    %122 = vector.shape_cast %121 : vector<1x16x16xf32> to vector<16x16xf32>
    %123 = vector.shape_cast %120 : vector<16x16xf32> to vector<1x16x16xf32>
    tpu.vector_store %arg14[%c0_85, %c0_86, %c0_87], %123 {strides = array<i32>} : memref<2x16x16xf32, #tpu.memory_space<vmem>>, vector<1x16x16xf32>,
    %cst_88 = arith.constant 0.000000e+00 : f32
    %124 = vector.broadcast %cst_88 : f32 to vector<32x16xf32>
    %125 = vector.extract_strided_slice %7 {offsets = [32, 0], sizes = [32, 8], strides = [1, 1]} : vector<64x8xf32> to vector<32x8xf32>
    %126 = vector.extract_strided_slice %14 {offsets = [32, 0], sizes = [32, 8], strides = [1, 1]} : vector<64x8xf32> to vector<32x8xf32>
    %127 = vector.extract_strided_slice %21 {offsets = [32, 0], sizes = [32, 16], strides = [1, 1]} : vector<64x16xf32> to vector<32x16xf32>
    %cst_89 = arith.constant dense<0.000000e+00> : vector<32x32xf32>
    %128 = tpu.matmul %125, %126, %cst_89 {dimension_numbers = #tpu.dot_dimension_numbers<[1], [1], [0], [0], [0, 0, 1, 0], [], []>} : vector<32x8xf32>, vector<32x8xf32>, vector<32x32xf32> -> vector<32x32xf32>
    %cst_90 = arith.constant dense<0xFF800000> : vector<32xf32>
    %129 = vector.multi_reduction <maximumf>, %128, %cst_90 [1] : vector<32x32xf32> to vector<32xf32>
    %130 = vector.shape_cast %129 : vector<32xf32> to vector<32x1xf32>
    %131 = vector.broadcast %130 : vector<32x1xf32> to vector<32x32xf32>
    %132 = arith.subf %128, %131 : vector<32x32xf32>
    %133 = math.exp %132 : vector<32x32xf32>
    %cst_91 = arith.constant dense<0.000000e+00> : vector<32xf32>
    %134 = vector.multi_reduction <add>, %133, %cst_91 [1] : vector<32x32xf32> to vector<32xf32>
    %135 = vector.shape_cast %134 : vector<32xf32> to vector<32x1xf32>
    %136 = tpu.reciprocal %135 {approx = true} : vector<32x1xf32> -> vector<32x1xf32>
    %137 = vector.broadcast %136 : vector<32x1xf32> to vector<32x32xf32>
    %138 = arith.mulf %133, %137 : vector<32x32xf32>
    %cst_92 = arith.constant dense<0.000000e+00> : vector<32x16xf32>
    %139 = tpu.matmul %138, %127, %cst_92 {dimension_numbers = #tpu.dot_dimension_numbers<[1], [0], [0], [1], [0, 0, 1, 1], [], []>} : vector<32x32xf32>, vector<32x16xf32>, vector<32x16xf32> -> vector<32x16xf32>
    %c0_93 = arith.constant 0 : index
    %c0_94 = arith.constant 0 : index
    %c0_95 = arith.constant 0 : index
    %140 = vector.load %arg8[%c0_93, %c0_94, %c0_95] : memref<2x16x16xf32, #tpu.memory_space<vmem>>, vector<1x16x16xf32>
    %141 = vector.shape_cast %140 : vector<1x16x16xf32> to vector<16x16xf32>
    %cst_96 = arith.constant dense<0.000000e+00> : vector<32x16xf32>
    %142 = tpu.matmul %139, %141, %cst_96 {dimension_numbers = #tpu.dot_dimension_numbers<[1], [0], [0], [1], [0, 0, 1, 1], [], []>} : vector<32x16xf32>, vector<16x16xf32>, vector<32x16xf32> -> vector<32x16xf32>
    %143 = arith.addf %124, %142 : vector<32x16xf32>
    %144 = vector.extract_strided_slice %127 {offsets = [0, 0], sizes = [16, 16], strides = [1, 1]} : vector<32x16xf32> to vector<16x16xf32>
    %cst_97 = arith.constant 3.000000e+00 : f32
    %145 = vector.broadcast %cst_97 : f32 to vector<16x16xf32>
    %146 = arith.addf %144, %145 : vector<16x16xf32>
    %cst_98 = arith.constant 0.000000e+00 : f32
    %cst_99 = arith.constant 6.000000e+00 : f32
    %147 = vector.broadcast %cst_98 : f32 to vector<16x16xf32>
    %148 = arith.maximumf %147, %146 : vector<16x16xf32>
    %149 = vector.broadcast %cst_99 : f32 to vector<16x16xf32>
    %150 = arith.minimumf %149, %148 : vector<16x16xf32>
    %151 = arith.mulf %144, %150 : vector<16x16xf32>
    %cst_100 = arith.constant 0.166666672 : f32
    %152 = vector.broadcast %cst_100 : f32 to vector<16x16xf32>
    %153 = arith.mulf %151, %152 : vector<16x16xf32>
    %cst_101 = arith.constant dense<0.000000e+00> : vector<16x144xf32>
    %154 = tpu.matmul %153, %43, %cst_101 {dimension_numbers = #tpu.dot_dimension_numbers<[1], [0], [0], [1], [0, 0, 1, 1], [], []>} : vector<16x16xf32>, vector<16x144xf32>, vector<16x144xf32> -> vector<16x144xf32>
    %c0_102 = arith.constant 0 : index
    %c0_103 = arith.constant 0 : index
    %c0_104 = arith.constant 0 : index
    %155 = vector.load %arg9[%c0_102, %c0_103, %c0_104] : memref<2x16x144xf32, #tpu.memory_space<vmem>>, vector<1x16x144xf32>
    %156 = vector.shape_cast %155 : vector<1x16x144xf32> to vector<16x144xf32>
    %157 = arith.mulf %154, %156 : vector<16x144xf32>
    %cst_105 = arith.constant dense<0.000000e+00> : vector<16x16xf32>
    %158 = tpu.matmul %157, %44, %cst_105 {dimension_numbers = #tpu.dot_dimension_numbers<[1], [0], [0], [1], [0, 0, 1, 1], [], []>} : vector<16x144xf32>, vector<144x16xf32>, vector<16x16xf32> -> vector<16x16xf32>
    %159 = vector.extract_strided_slice %28 {offsets = [32, 0], sizes = [32, 8], strides = [1, 1]} : vector<64x8xf32> to vector<32x8xf32>
    %160 = vector.extract_strided_slice %35 {offsets = [32, 0], sizes = [32, 8], strides = [1, 1]} : vector<64x8xf32> to vector<32x8xf32>
    %161 = vector.extract_strided_slice %42 {offsets = [32, 0], sizes = [32, 16], strides = [1, 1]} : vector<64x16xf32> to vector<32x16xf32>
    %cst_106 = arith.constant dense<0.000000e+00> : vector<32x32xf32>
    %162 = tpu.matmul %159, %160, %cst_106 {dimension_numbers = #tpu.dot_dimension_numbers<[1], [1], [0], [0], [0, 0, 1, 0], [], []>} : vector<32x8xf32>, vector<32x8xf32>, vector<32x32xf32> -> vector<32x32xf32>
    %cst_107 = arith.constant dense<0xFF800000> : vector<32xf32>
    %163 = vector.multi_reduction <maximumf>, %162, %cst_107 [1] : vector<32x32xf32> to vector<32xf32>
    %164 = vector.shape_cast %163 : vector<32xf32> to vector<32x1xf32>
    %165 = vector.broadcast %164 : vector<32x1xf32> to vector<32x32xf32>
    %166 = arith.subf %162, %165 : vector<32x32xf32>
    %167 = math.exp %166 : vector<32x32xf32>
    %cst_108 = arith.constant dense<0.000000e+00> : vector<32xf32>
    %168 = vector.multi_reduction <add>, %167, %cst_108 [1] : vector<32x32xf32> to vector<32xf32>
    %169 = vector.shape_cast %168 : vector<32xf32> to vector<32x1xf32>
    %170 = tpu.reciprocal %169 {approx = true} : vector<32x1xf32> -> vector<32x1xf32>
    %171 = vector.broadcast %170 : vector<32x1xf32> to vector<32x32xf32>
    %172 = arith.mulf %167, %171 : vector<32x32xf32>
    %cst_109 = arith.constant dense<0.000000e+00> : vector<32x16xf32>
    %173 = tpu.matmul %172, %161, %cst_109 {dimension_numbers = #tpu.dot_dimension_numbers<[1], [0], [0], [1], [0, 0, 1, 1], [], []>} : vector<32x32xf32>, vector<32x16xf32>, vector<32x16xf32> -> vector<32x16xf32>
    %c1_110 = arith.constant 1 : index
    %c0_111 = arith.constant 0 : index
    %c0_112 = arith.constant 0 : index
    %174 = vector.load %arg8[%c1_110, %c0_111, %c0_112] : memref<2x16x16xf32, #tpu.memory_space<vmem>>, vector<1x16x16xf32>
    %175 = vector.shape_cast %174 : vector<1x16x16xf32> to vector<16x16xf32>
    %cst_113 = arith.constant dense<0.000000e+00> : vector<32x16xf32>
    %176 = tpu.matmul %173, %175, %cst_113 {dimension_numbers = #tpu.dot_dimension_numbers<[1], [0], [0], [1], [0, 0, 1, 1], [], []>} : vector<32x16xf32>, vector<16x16xf32>, vector<32x16xf32> -> vector<32x16xf32>
    %177 = arith.addf %143, %176 : vector<32x16xf32>
    %178 = vector.extract_strided_slice %161 {offsets = [0, 0], sizes = [16, 16], strides = [1, 1]} : vector<32x16xf32> to vector<16x16xf32>
    %cst_114 = arith.constant 3.000000e+00 : f32
    %179 = vector.broadcast %cst_114 : f32 to vector<16x16xf32>
    %180 = arith.addf %178, %179 : vector<16x16xf32>
    %cst_115 = arith.constant 0.000000e+00 : f32
    %cst_116 = arith.constant 6.000000e+00 : f32
    %181 = vector.broadcast %cst_115 : f32 to vector<16x16xf32>
    %182 = arith.maximumf %181, %180 : vector<16x16xf32>
    %183 = vector.broadcast %cst_116 : f32 to vector<16x16xf32>
    %184 = arith.minimumf %183, %182 : vector<16x16xf32>
    %185 = arith.mulf %178, %184 : vector<16x16xf32>
    %cst_117 = arith.constant 0.166666672 : f32
    %186 = vector.broadcast %cst_117 : f32 to vector<16x16xf32>
    %187 = arith.mulf %185, %186 : vector<16x16xf32>
    %cst_118 = arith.constant dense<0.000000e+00> : vector<16x144xf32>
    %188 = tpu.matmul %187, %43, %cst_118 {dimension_numbers = #tpu.dot_dimension_numbers<[1], [0], [0], [1], [0, 0, 1, 1], [], []>} : vector<16x16xf32>, vector<16x144xf32>, vector<16x144xf32> -> vector<16x144xf32>
    %c1_119 = arith.constant 1 : index
    %c0_120 = arith.constant 0 : index
    %c0_121 = arith.constant 0 : index
    %189 = vector.load %arg9[%c1_119, %c0_120, %c0_121] : memref<2x16x144xf32, #tpu.memory_space<vmem>>, vector<1x16x144xf32>
    %190 = vector.shape_cast %189 : vector<1x16x144xf32> to vector<16x144xf32>
    %191 = arith.mulf %188, %190 : vector<16x144xf32>
    %cst_122 = arith.constant dense<0.000000e+00> : vector<16x16xf32>
    %192 = tpu.matmul %191, %44, %cst_122 {dimension_numbers = #tpu.dot_dimension_numbers<[1], [0], [0], [1], [0, 0, 1, 1], [], []>} : vector<16x144xf32>, vector<144x16xf32>, vector<16x16xf32> -> vector<16x16xf32>
    %193 = tpu.concatenate %158, %192 in 0 : vector<16x16xf32>, vector<16x16xf32> -> vector<32x16xf32>
    %194 = arith.addf %177, %193 : vector<32x16xf32>
    %195 = tpu.transpose %194, [1, 0] : vector<32x16xf32> -> vector<16x32xf32>
    %cst_123 = arith.constant dense<0.000000e+00> : vector<16x16xf32>
    %196 = tpu.matmul %195, %45, %cst_123 {dimension_numbers = #tpu.dot_dimension_numbers<[1], [0], [0], [1], [0, 0, 1, 1], [], []>} : vector<16x32xf32>, vector<32x16xf32>, vector<16x16xf32> -> vector<16x16xf32>
    %197 = arith.addf %196, %46 : vector<16x16xf32>
    %c1_124 = arith.constant 1 : index
    %c0_125 = arith.constant 0 : index
    %c0_126 = arith.constant 0 : index
    %198 = vector.load %arg14[%c1_124, %c0_125, %c0_126] : memref<2x16x16xf32, #tpu.memory_space<vmem>>, vector<1x16x16xf32>
    %199 = vector.shape_cast %198 : vector<1x16x16xf32> to vector<16x16xf32>
    %200 = vector.shape_cast %197 : vector<16x16xf32> to vector<1x16x16xf32>
    tpu.vector_store %arg14[%c1_124, %c0_125, %c0_126], %200 {strides = array<i32>} : memref<2x16x16xf32, #tpu.memory_space<vmem>>, vector<1x16x16xf32>,
    return
  }
  func.func @transform_0(%arg0: i32) -> (i32, i32) {
    %c0_i32 = arith.constant 0 : i32
    %c0_i32_0 = arith.constant 0 : i32
    return %arg0, %c0_i32 : i32, i32
  }
  func.func @transform_1(%arg0: i32) -> (i32, i32, i32) {
    %c0_i32 = arith.constant 0 : i32
    %c0_i32_0 = arith.constant 0 : i32
    %c0_i32_1 = arith.constant 0 : i32
    %c0_i32_2 = arith.constant 0 : i32
    return %c0_i32, %c0_i32_0, %c0_i32_1 : i32, i32, i32
  }
  func.func @transform_2(%arg0: i32) -> (i32, i32, i32) {
    %c0_i32 = arith.constant 0 : i32
    %c0_i32_0 = arith.constant 0 : i32
    %c0_i32_1 = arith.constant 0 : i32
    %c0_i32_2 = arith.constant 0 : i32
    return %c0_i32, %c0_i32_0, %c0_i32_1 : i32, i32, i32
  }
  func.func @transform_3(%arg0: i32) -> (i32, i32, i32) {
    %c0_i32 = arith.constant 0 : i32
    %c0_i32_0 = arith.constant 0 : i32
    %c0_i32_1 = arith.constant 0 : i32
    %c0_i32_2 = arith.constant 0 : i32
    return %c0_i32, %c0_i32_0, %c0_i32_1 : i32, i32, i32
  }
  func.func @transform_4(%arg0: i32) -> (i32, i32, i32) {
    %c0_i32 = arith.constant 0 : i32
    %c0_i32_0 = arith.constant 0 : i32
    %c0_i32_1 = arith.constant 0 : i32
    %c0_i32_2 = arith.constant 0 : i32
    return %c0_i32, %c0_i32_0, %c0_i32_1 : i32, i32, i32
  }
  func.func @transform_5(%arg0: i32) -> (i32, i32, i32) {
    %c0_i32 = arith.constant 0 : i32
    %c0_i32_0 = arith.constant 0 : i32
    %c0_i32_1 = arith.constant 0 : i32
    %c0_i32_2 = arith.constant 0 : i32
    return %c0_i32, %c0_i32_0, %c0_i32_1 : i32, i32, i32
  }
  func.func @transform_6(%arg0: i32) -> (i32, i32, i32) {
    %c0_i32 = arith.constant 0 : i32
    %c0_i32_0 = arith.constant 0 : i32
    %c0_i32_1 = arith.constant 0 : i32
    %c0_i32_2 = arith.constant 0 : i32
    return %c0_i32, %c0_i32_0, %c0_i32_1 : i32, i32, i32
  }
  func.func @transform_7(%arg0: i32) -> (i32, i32, i32) {
    %c0_i32 = arith.constant 0 : i32
    %c0_i32_0 = arith.constant 0 : i32
    %c0_i32_1 = arith.constant 0 : i32
    %c0_i32_2 = arith.constant 0 : i32
    return %c0_i32, %c0_i32_0, %c0_i32_1 : i32, i32, i32
  }
  func.func @transform_8(%arg0: i32) -> (i32, i32, i32) {
    %c0_i32 = arith.constant 0 : i32
    %c0_i32_0 = arith.constant 0 : i32
    %c0_i32_1 = arith.constant 0 : i32
    %c0_i32_2 = arith.constant 0 : i32
    return %c0_i32, %c0_i32_0, %c0_i32_1 : i32, i32, i32
  }
  func.func @transform_9(%arg0: i32) -> (i32, i32) {
    %c0_i32 = arith.constant 0 : i32
    %c0_i32_0 = arith.constant 0 : i32
    %c0_i32_1 = arith.constant 0 : i32
    return %c0_i32, %c0_i32_0 : i32, i32
  }
  func.func @transform_10(%arg0: i32) -> (i32, i32) {
    %c0_i32 = arith.constant 0 : i32
    %c0_i32_0 = arith.constant 0 : i32
    %c0_i32_1 = arith.constant 0 : i32
    return %c0_i32, %c0_i32_0 : i32, i32
  }
  func.func @transform_11(%arg0: i32) -> (i32, i32) {
    %c0_i32 = arith.constant 0 : i32
    %c0_i32_0 = arith.constant 0 : i32
    %c0_i32_1 = arith.constant 0 : i32
    return %c0_i32, %c0_i32_0 : i32, i32
  }
  func.func @transform_12(%arg0: i32) -> (i32, i32) {
    %c0_i32 = arith.constant 0 : i32
    %c0_i32_0 = arith.constant 0 : i32
    %c0_i32_1 = arith.constant 0 : i32
    return %c0_i32, %c0_i32_0 : i32, i32
  }
  func.func @transform_13(%arg0: i32) -> (i32, i32, i32) {
    %c0_i32 = arith.constant 0 : i32
    %c0_i32_0 = arith.constant 0 : i32
    %c0_i32_1 = arith.constant 0 : i32
    return %arg0, %c0_i32, %c0_i32_0 : i32, i32, i32
  }
}

</mosaic_0001>

<llo_original>
// kernel: attention_forward.1
$region0: #{attention_forward.1}
  #allocation0 [shape = 'u32[]', space=smem, size = 0x4, offset = 0x4, fixed_abs, tag = 'smem constant byte address 0x4 - core index']
  #allocation1 [shape = 'u32[144,128]{1,0:T(1,128)}', space=vmem, size = 0x12000, scoped, tag = 'internal scratch']
  %s0 = inlined_call_operand.vmem [shape: f32[64,16], index: 0, kind: input, shape index: {}]
  %s1 = inlined_call_operand.vmem [shape: f32[2,16,8], index: 1, kind: input, shape index: {}]
  %s2 = inlined_call_operand.vmem [shape: f32[2,16,8], index: 2, kind: input, shape index: {}]
  %s3 = inlined_call_operand.vmem [shape: f32[2,16,16], index: 3, kind: input, shape index: {}]
  %s4 = inlined_call_operand.vmem [shape: f32[2,1,8], index: 4, kind: input, shape index: {}]
  %s5 = inlined_call_operand.vmem [shape: f32[2,1,8], index: 5, kind: input, shape index: {}]
  %s6 = inlined_call_operand.vmem [shape: f32[2,1,16], index: 6, kind: input, shape index: {}]
  %s7 = inlined_call_operand.vmem [shape: f32[2,16,16], index: 7, kind: input, shape index: {}]
  %s8 = inlined_call_operand.vmem [shape: f32[2,16,144], index: 8, kind: input, shape index: {}]
  %s9 = inlined_call_operand.vmem [shape: f32[16,144], index: 9, kind: input, shape index: {}]
  %s10 = inlined_call_operand.vmem [shape: f32[144,16], index: 10, kind: input, shape index: {}]
  %s11 = inlined_call_operand.vmem [shape: f32[32,16], index: 11, kind: input, shape index: {}]
  %s12 = inlined_call_operand.vmem [shape: f32[16,16], index: 12, kind: input, shape index: {}]
  %s13 = inlined_call_operand.hbm [shape: f32[2,16,16], index: 13, kind: output, shape index: {}]
  %s14 = sld [smem:[#allocation0]]
  $region62: #{attention_forward.1} parent=0
    _
  %s16 = ssub.s32 1, %s14
  %s17 = scalar_select 0, %s16, %s14
  $region1: #{attention_forward.1} parent=0
    #allocation2 [shape = 'u8[16384]{0}', space=vmem, size = 0x4000, scoped, tag = 'output window, operand 0, single buffered']
    #allocation3 [shape = 's32[1]{0}', space=sflag, size = 0x4, scoped, tag = 'scoped memory for attention_forward.1']
    %18 = vsyncpa [#allocation3], 0
    // Predicated region
    $region2: #{attention_forward.1} parent=1 // pred_check
      _
    $region3: #{attention_forward.1} parent=1 // pred_check_branch
      %20 = sbr.rel (0) target = $region5
    $region4: #{attention_forward.1} parent=1 // pred_region
      _
    $region5: #{attention_forward.1} parent=1 // pred_fallthru
      _
    // Predicated region
    $region6: #{attention_forward.1} parent=1 // pred_check
      _
    $region7: #{attention_forward.1} parent=1 // pred_check_branch
      %22 = sbr.rel (0) target = $region9
    $region8: #{attention_forward.1} parent=1 // pred_region
      _
    $region9: #{attention_forward.1} parent=1 // pred_fallthru
      _
    // Predicated region
    $region10: #{attention_forward.1} parent=1 // pred_check
      _
    $region11: #{attention_forward.1} parent=1 // pred_check_branch
      %24 = sbr.rel (0) target = $region13
    $region12: #{attention_forward.1} parent=1 // pred_region
      _
    $region13: #{attention_forward.1} parent=1 // pred_fallthru
      _
    // Predicated region
    $region14: #{attention_forward.1} parent=1 // pred_check
      _
    $region15: #{attention_forward.1} parent=1 // pred_check_branch
      %26 = sbr.rel (0) target = $region17
    $region16: #{attention_forward.1} parent=1 // pred_region
      _
    $region17: #{attention_forward.1} parent=1 // pred_fallthru
      _
    // Predicated region
    $region18: #{attention_forward.1} parent=1 // pred_check
      _
    $region19: #{attention_forward.1} parent=1 // pred_check_branch
      %28 = sbr.rel (0) target = $region21
    $region20: #{attention_forward.1} parent=1 // pred_region
      _
    $region21: #{attention_forward.1} parent=1 // pred_fallthru
      _
    // Predicated region
    $region22: #{attention_forward.1} parent=1 // pred_check
      _
    $region23: #{attention_forward.1} parent=1 // pred_check_branch
      %30 = sbr.rel (0) target = $region25
    $region24: #{attention_forward.1} parent=1 // pred_region
      _
    $region25: #{attention_forward.1} parent=1 // pred_fallthru
      _
    // Predicated region
    $region26: #{attention_forward.1} parent=1 // pred_check
      _
    $region27: #{attention_forward.1} parent=1 // pred_check_branch
      %32 = sbr.rel (0) target = $region29
    $region28: #{attention_forward.1} parent=1 // pred_region
      _
    $region29: #{attention_forward.1} parent=1 // pred_fallthru
      _
    // Predicated region
    $region30: #{attention_forward.1} parent=1 // pred_check
      _
    $region31: #{attention_forward.1} parent=1 // pred_check_branch
      %34 = sbr.rel (0) target = $region33
    $region32: #{attention_forward.1} parent=1 // pred_region
      _
    $region33: #{attention_forward.1} parent=1 // pred_fallthru
      _
    // Predicated region
    $region34: #{attention_forward.1} parent=1 // pred_check
      _
    $region35: #{attention_forward.1} parent=1 // pred_check_branch
      %36 = sbr.rel (0) target = $region37
    $region36: #{attention_forward.1} parent=1 // pred_region
      _
    $region37: #{attention_forward.1} parent=1 // pred_fallthru
      _
    // Predicated region
    $region38: #{attention_forward.1} parent=1 // pred_check
      _
    $region39: #{attention_forward.1} parent=1 // pred_check_branch
      %38 = sbr.rel (0) target = $region41
    $region40: #{attention_forward.1} parent=1 // pred_region
      _
    $region41: #{attention_forward.1} parent=1 // pred_fallthru
      _
    // Predicated region
    $region42: #{attention_forward.1} parent=1 // pred_check
      _
    $region43: #{attention_forward.1} parent=1 // pred_check_branch
      %40 = sbr.rel (0) target = $region45
    $region44: #{attention_forward.1} parent=1 // pred_region
      _
    $region45: #{attention_forward.1} parent=1 // pred_fallthru
      _
    // Predicated region
    $region46: #{attention_forward.1} parent=1 // pred_check
      _
    $region47: #{attention_forward.1} parent=1 // pred_check_branch
      %42 = sbr.rel (0) target = $region49
    $region48: #{attention_forward.1} parent=1 // pred_region
      _
    $region49: #{attention_forward.1} parent=1 // pred_fallthru
      _
    // Predicated region
    $region50: #{attention_forward.1} parent=1 // pred_check
      _
    $region51: #{attention_forward.1} parent=1 // pred_check_branch
      %44 = sbr.rel (0) target = $region53
    $region52: #{attention_forward.1} parent=1 // pred_region
      _
    $region53: #{attention_forward.1} parent=1 // pred_fallthru
      _
    %v45 = vld [vmem:[%s0] sm:$0xff]
    %v46 = vld [vmem:[%s0 + $0x8] sm:$0xff]
    %v47 = vld [vmem:[%s0 + $0x10] sm:$0xff]
    %v48 = vld [vmem:[%s0 + $0x18] sm:$0xff]
    %v49 = vld [vmem:[%s0 + $0x20] sm:$0xff]
    %v50 = vld [vmem:[%s0 + $0x28] sm:$0xff]
    %v51 = vld [vmem:[%s0 + $0x30] sm:$0xff]
    %v52 = vld [vmem:[%s0 + $0x38] sm:$0xff]
    %v53 = vld [vmem:[%s1] sm:$0xff]
    %v54 = vld [vmem:[%s1 + $0x8] sm:$0xff]
    %v55 = vld [vmem:[%s4] sm:$0x1]
    %v57 = vlaneseq
    %v58 = vshrl.u32 %v57, 7
    %v59 = vsub.s32 0, %v58
    %v60 = vrot.slane %v55, %v59
    %vm62 = vcmask 130048
    %v64 = vsel %vm62, %v45, 0
    %v67 = vsel %vm62, %v46, 0
    %v70 = vsel %vm62, %v47, 0
    %v73 = vsel %vm62, %v48, 0
    %v76 = vsel %vm62, %v49, 0
    %v79 = vsel %vm62, %v50, 0
    %v82 = vsel %vm62, %v51, 0
    %v85 = vsel %vm62, %v52, 0
    %87 = vmatprep.subr.mxu0 0.0
    %88 = vmatpush1.msra.mxu0 0.0
    %89 = vmatprep.subr.mxu0 0.0
    %90 = vmatpush1.msra.mxu0 0.0
    %91 = vmatprep.subr.mxu0 0.0
    %92 = vmatpush1.msra.mxu0 0.0
    %93 = vmatprep.subr.mxu0 0.0
    %94 = vmatpush1.msra.mxu0 0.0
    %95 = vmatprep.subr.mxu0 0.0
    %96 = vmatpush1.msra.mxu0 0.0
    %97 = vmatprep.subr.mxu0 0.0
    %98 = vmatpush1.msra.mxu0 0.0
    %99 = vmatprep.subr.mxu0 0.0
    %100 = vmatpush1.msra.mxu0 0.0
    %101 = vmatprep.subr.mxu0 0.0
    %102 = vmatpush1.msra.mxu0 0.0
    %103 = vmatprep.subr.mxu0 0.0
    %104 = vmatpush1.msra.mxu0 0.0
    %105 = vmatprep.subr.mxu0 0.0
    %106 = vmatpush1.msra.mxu0 0.0
    %107 = vmatprep.subr.mxu0 0.0
    %108 = vmatpush1.msra.mxu0 0.0
    %109 = vmatprep.subr.mxu0 0.0
    %110 = vmatpush1.msra.mxu0 0.0
    %111 = vmatprep.subr.mxu0 0.0
    %112 = vmatpush1.msra.mxu0 0.0
    %113 = vmatprep.subr.mxu0 0.0
    %114 = vmatpush1.msra.mxu0 0.0
    %115 = vmatprep.subr.mxu0 0.0
    %116 = vmatpush1.msra.mxu0 %v54
    %117 = vmatprep.subr.mxu0 0.0
    %118 = vmatpush1.msra.mxu0 %v53
    %119 = vmatprep.subr.mxu0 0.0
    %120 = vmatpush2.msra.mxu0 0.0
    %121 = vmatprep.subr.mxu0 0.0
    %122 = vmatpush2.msra.mxu0 0.0
    %123 = vmatprep.subr.mxu0 0.0
    %124 = vmatpush2.msra.mxu0 0.0
    %125 = vmatprep.subr.mxu0 0.0
    %126 = vmatpush2.msra.mxu0 0.0
    %127 = vmatprep.subr.mxu0 0.0
    %128 = vmatpush2.msra.mxu0 0.0
    %129 = vmatprep.subr.mxu0 0.0
    %130 = vmatpush2.msra.mxu0 0.0
    %131 = vmatprep.subr.mxu0 0.0
    %132 = vmatpush2.msra.mxu0 0.0
    %133 = vmatprep.subr.mxu0 0.0
    %134 = vmatpush2.msra.mxu0 0.0
    %135 = vmatprep.subr.mxu0 0.0
    %136 = vmatpush2.msra.mxu0 0.0
    %137 = vmatprep.subr.mxu0 0.0
    %138 = vmatpush2.msra.mxu0 0.0
    %139 = vmatprep.subr.mxu0 0.0
    %140 = vmatpush2.msra.mxu0 0.0
    %141 = vmatprep.subr.mxu0 0.0
    %142 = vmatpush2.msra.mxu0 0.0
    %143 = vmatprep.subr.mxu0 0.0
    %144 = vmatpush2.msra.mxu0 0.0
    %145 = vmatprep.subr.mxu0 0.0
    %146 = vmatpush2.msra.mxu0 0.0
    %147 = vmatprep.subr.mxu0 0.0
    %148 = vmatpush2.msra.mxu0 0.0
    %149 = vmatprep.subr.mxu0 0.0
    %150 = vmatpush2.msra.mxu0 0.0
    %151 = vmatprep.mubr.f32.mxu0 0.0
    %152 = vmatmul.mubr.f32.gmra.mxu0 %v64
    %v153 = vpop.f32.mrf.mxu0
    %v154 = vadd.f32 %v60, %v153
    %v155 = vpop.f32.mrf.mxu0
    %156 = vmatprep.mubr.f32.mxu0 0.0
    %157 = vmatmul.mubr.f32.gmra.mxu0 %v67
    %v158 = vpop.f32.mrf.mxu0
    %v159 = vadd.f32 %v60, %v158
    %v160 = vpop.f32.mrf.mxu0
    %161 = vmatprep.mubr.f32.mxu0 0.0
    %162 = vmatmul.mubr.f32.gmra.mxu0 %v70
    %v163 = vpop.f32.mrf.mxu0
    %v164 = vadd.f32 %v60, %v163
    %v165 = vpop.f32.mrf.mxu0
    %166 = vmatprep.mubr.f32.mxu0 0.0
    %167 = vmatmul.mubr.f32.gmra.mxu0 %v73
    %v168 = vpop.f32.mrf.mxu0
    %v169 = vadd.f32 %v60, %v168
    %v170 = vpop.f32.mrf.mxu0
    %171 = vmatprep.mubr.f32.mxu0 0.0
    %172 = vmatmul.mubr.f32.gmra.mxu0 %v76
    %v173 = vpop.f32.mrf.mxu0
    %v174 = vadd.f32 %v60, %v173
    %v175 = vpop.f32.mrf.mxu0
    %176 = vmatprep.mubr.f32.mxu0 0.0
    %177 = vmatmul.mubr.f32.gmra.mxu0 %v79
    %v178 = vpop.f32.mrf.mxu0
    %v179 = vadd.f32 %v60, %v178
    %v180 = vpop.f32.mrf.mxu0
    %181 = vmatprep.mubr.f32.mxu0 0.0
    %182 = vmatmul.mubr.f32.gmra.mxu0 %v82
    %v183 = vpop.f32.mrf.mxu0
    %v184 = vadd.f32 %v60, %v183
    %v185 = vpop.f32.mrf.mxu0
    %186 = vmatprep.mubr.f32.mxu0 0.0
    %187 = vmatmul.mubr.f32.gmra.mxu0 %v85
    %v188 = vpop.f32.mrf.mxu0
    %v189 = vadd.f32 %v60, %v188
    %v190 = vpop.f32.mrf.mxu0
    %191 = vdwg.mxu0
    %v192 = vld [vmem:[%s2] sm:$0xff]
    %v193 = vld [vmem:[%s2 + $0x8] sm:$0xff]
    %v194 = vld [vmem:[%s5] sm:$0x1]
    %v196 = vlaneseq
    %v197 = vshrl.u32 %v196, 7
    %v198 = vsub.s32 0, %v197
    %v199 = vrot.slane %v194, %v198
    %201 = vmatprep.subr.mxu0 0.0
    %202 = vmatpush1.msra.mxu0 0.0
    %203 = vmatprep.subr.mxu0 0.0
    %204 = vmatpush1.msra.mxu0 0.0
    %205 = vmatprep.subr.mxu0 0.0
    %206 = vmatpush1.msra.mxu0 0.0
    %207 = vmatprep.subr.mxu0 0.0
    %208 = vmatpush1.msra.mxu0 0.0
    %209 = vmatprep.subr.mxu0 0.0
    %210 = vmatpush1.msra.mxu0 0.0
    %211 = vmatprep.subr.mxu0 0.0
    %212 = vmatpush1.msra.mxu0 0.0
    %213 = vmatprep.subr.mxu0 0.0
    %214 = vmatpush1.msra.mxu0 0.0
    %215 = vmatprep.subr.mxu0 0.0
    %216 = vmatpush1.msra.mxu0 0.0
    %217 = vmatprep.subr.mxu0 0.0
    %218 = vmatpush1.msra.mxu0 0.0
    %219 = vmatprep.subr.mxu0 0.0
    %220 = vmatpush1.msra.mxu0 0.0
    %221 = vmatprep.subr.mxu0 0.0
    %222 = vmatpush1.msra.mxu0 0.0
    %223 = vmatprep.subr.mxu0 0.0
    %224 = vmatpush1.msra.mxu0 0.0
    %225 = vmatprep.subr.mxu0 0.0
    %226 = vmatpush1.msra.mxu0 0.0
    %227 = vmatprep.subr.mxu0 0.0
    %228 = vmatpush1.msra.mxu0 0.0
    %229 = vmatprep.subr.mxu0 0.0
    %230 = vmatpush1.msra.mxu0 %v193
    %231 = vmatprep.subr.mxu0 0.0
    %232 = vmatpush1.msra.mxu0 %v192
    %233 = vmatprep.subr.mxu0 0.0
    %234 = vmatpush2.msra.mxu0 0.0
    %235 = vmatprep.subr.mxu0 0.0
    %236 = vmatpush2.msra.mxu0 0.0
    %237 = vmatprep.subr.mxu0 0.0
    %238 = vmatpush2.msra.mxu0 0.0
    %239 = vmatprep.subr.mxu0 0.0
    %240 = vmatpush2.msra.mxu0 0.0
    %241 = vmatprep.subr.mxu0 0.0
    %242 = vmatpush2.msra.mxu0 0.0
    %243 = vmatprep.subr.mxu0 0.0
    %244 = vmatpush2.msra.mxu0 0.0
    %245 = vmatprep.subr.mxu0 0.0
    %246 = vmatpush2.msra.mxu0 0.0
    %247 = vmatprep.subr.mxu0 0.0
    %248 = vmatpush2.msra.mxu0 0.0
    %249 = vmatprep.subr.mxu0 0.0
    %250 = vmatpush2.msra.mxu0 0.0
    %251 = vmatprep.subr.mxu0 0.0
    %252 = vmatpush2.msra.mxu0 0.0
    %253 = vmatprep.subr.mxu0 0.0
    %254 = vmatpush2.msra.mxu0 0.0
    %255 = vmatprep.subr.mxu0 0.0
    %256 = vmatpush2.msra.mxu0 0.0
    %257 = vmatprep.subr.mxu0 0.0
    %258 = vmatpush2.msra.mxu0 0.0
    %259 = vmatprep.subr.mxu0 0.0
    %260 = vmatpush2.msra.mxu0 0.0
    %261 = vmatprep.subr.mxu0 0.0
    %262 = vmatpush2.msra.mxu0 0.0
    %263 = vmatprep.subr.mxu0 0.0
    %264 = vmatpush2.msra.mxu0 0.0
    %265 = vmatprep.mubr.f32.mxu0 0.0
    %266 = vmatmul.mubr.f32.gmra.mxu0 %v64
    %v267 = vpop.f32.mrf.mxu0
    %v268 = vadd.f32 %v199, %v267
    %v269 = vpop.f32.mrf.mxu0
    %270 = vmatprep.mubr.f32.mxu0 0.0
    %271 = vmatmul.mubr.f32.gmra.mxu0 %v67
    %v272 = vpop.f32.mrf.mxu0
    %v273 = vadd.f32 %v199, %v272
    %v274 = vpop.f32.mrf.mxu0
    %275 = vmatprep.mubr.f32.mxu0 0.0
    %276 = vmatmul.mubr.f32.gmra.mxu0 %v70
    %v277 = vpop.f32.mrf.mxu0
    %v278 = vadd.f32 %v199, %v277
    %v279 = vpop.f32.mrf.mxu0
    %280 = vmatprep.mubr.f32.mxu0 0.0
    %281 = vmatmul.mubr.f32.gmra.mxu0 %v73
    %v282 = vpop.f32.mrf.mxu0
    %v283 = vadd.f32 %v199, %v282
    %v284 = vpop.f32.mrf.mxu0
    %285 = vmatprep.mubr.f32.mxu0 0.0
    %286 = vmatmul.mubr.f32.gmra.mxu0 %v76
    %v287 = vpop.f32.mrf.mxu0
    %v288 = vadd.f32 %v199, %v287
    %v289 = vpop.f32.mrf.mxu0
    %290 = vmatprep.mubr.f32.mxu0 0.0
    %291 = vmatmul.mubr.f32.gmra.mxu0 %v79
    %v292 = vpop.f32.mrf.mxu0
    %v293 = vadd.f32 %v199, %v292
    %v294 = vpop.f32.mrf.mxu0
    %295 = vmatprep.mubr.f32.mxu0 0.0
    %296 = vmatmul.mubr.f32.gmra.mxu0 %v82
    %v297 = vpop.f32.mrf.mxu0
    %v298 = vadd.f32 %v199, %v297
    %v299 = vpop.f32.mrf.mxu0
    %300 = vmatprep.mubr.f32.mxu0 0.0
    %301 = vmatmul.mubr.f32.gmra.mxu0 %v85
    %v302 = vpop.f32.mrf.mxu0
    %v303 = vadd.f32 %v199, %v302
    %v304 = vpop.f32.mrf.mxu0
    %305 = vdwg.mxu0
    %v306 = vld [vmem:[%s3] sm:$0xff]
    %v307 = vld [vmem:[%s3 + $0x8] sm:$0xff]
    %v308 = vld [vmem:[%s6] sm:$0x1]
    %v310 = vlaneseq
    %v311 = vshrl.u32 %v310, 7
    %v312 = vsub.s32 0, %v311
    %v313 = vrot.slane %v308, %v312
    %315 = vmatprep.subr.mxu0 0.0
    %316 = vmatpush1.msra.mxu0 0.0
    %317 = vmatprep.subr.mxu0 0.0
    %318 = vmatpush1.msra.mxu0 0.0
    %319 = vmatprep.subr.mxu0 0.0
    %320 = vmatpush1.msra.mxu0 0.0
    %321 = vmatprep.subr.mxu0 0.0
    %322 = vmatpush1.msra.mxu0 0.0
    %323 = vmatprep.subr.mxu0 0.0
    %324 = vmatpush1.msra.mxu0 0.0
    %325 = vmatprep.subr.mxu0 0.0
    %326 = vmatpush1.msra.mxu0 0.0
    %327 = vmatprep.subr.mxu0 0.0
    %328 = vmatpush1.msra.mxu0 0.0
    %329 = vmatprep.subr.mxu0 0.0
    %330 = vmatpush1.msra.mxu0 0.0
    %331 = vmatprep.subr.mxu0 0.0
    %332 = vmatpush1.msra.mxu0 0.0
    %333 = vmatprep.subr.mxu0 0.0
    %334 = vmatpush1.msra.mxu0 0.0
    %335 = vmatprep.subr.mxu0 0.0
    %336 = vmatpush1.msra.mxu0 0.0
    %337 = vmatprep.subr.mxu0 0.0
    %338 = vmatpush1.msra.mxu0 0.0
    %339 = vmatprep.subr.mxu0 0.0
    %340 = vmatpush1.msra.mxu0 0.0
    %341 = vmatprep.subr.mxu0 0.0
    %342 = vmatpush1.msra.mxu0 0.0
    %343 = vmatprep.subr.mxu0 0.0
    %344 = vmatpush1.msra.mxu0 %v307
    %345 = vmatprep.subr.mxu0 0.0
    %346 = vmatpush1.msra.mxu0 %v306
    %347 = vmatprep.subr.mxu0 0.0
    %348 = vmatpush2.msra.mxu0 0.0
    %349 = vmatprep.subr.mxu0 0.0
    %350 = vmatpush2.msra.mxu0 0.0
    %351 = vmatprep.subr.mxu0 0.0
    %352 = vmatpush2.msra.mxu0 0.0
    %353 = vmatprep.subr.mxu0 0.0
    %354 = vmatpush2.msra.mxu0 0.0
    %355 = vmatprep.subr.mxu0 0.0
    %356 = vmatpush2.msra.mxu0 0.0
    %357 = vmatprep.subr.mxu0 0.0
    %358 = vmatpush2.msra.mxu0 0.0
    %359 = vmatprep.subr.mxu0 0.0
    %360 = vmatpush2.msra.mxu0 0.0
    %361 = vmatprep.subr.mxu0 0.0
    %362 = vmatpush2.msra.mxu0 0.0
    %363 = vmatprep.subr.mxu0 0.0
    %364 = vmatpush2.msra.mxu0 0.0
    %365 = vmatprep.subr.mxu0 0.0
    %366 = vmatpush2.msra.mxu0 0.0
    %367 = vmatprep.subr.mxu0 0.0
    %368 = vmatpush2.msra.mxu0 0.0
    %369 = vmatprep.subr.mxu0 0.0
    %370 = vmatpush2.msra.mxu0 0.0
    %371 = vmatprep.subr.mxu0 0.0
    %372 = vmatpush2.msra.mxu0 0.0
    %373 = vmatprep.subr.mxu0 0.0
    %374 = vmatpush2.msra.mxu0 0.0
    %375 = vmatprep.subr.mxu0 0.0
    %376 = vmatpush2.msra.mxu0 0.0
    %377 = vmatprep.subr.mxu0 0.0
    %378 = vmatpush2.msra.mxu0 0.0
    %379 = vmatprep.mubr.f32.mxu0 0.0
    %380 = vmatmul.mubr.f32.gmra.mxu0 %v64
    %v381 = vpop.f32.mrf.mxu0
    %v382 = vadd.f32 %v313, %v381
    %v383 = vpop.f32.mrf.mxu0
    %384 = vmatprep.mubr.f32.mxu0 0.0
    %385 = vmatmul.mubr.f32.gmra.mxu0 %v67
    %v386 = vpop.f32.mrf.mxu0
    %v387 = vadd.f32 %v313, %v386
    %v388 = vpop.f32.mrf.mxu0
    %389 = vmatprep.mubr.f32.mxu0 0.0
    %390 = vmatmul.mubr.f32.gmra.mxu0 %v70
    %v391 = vpop.f32.mrf.mxu0
    %v392 = vadd.f32 %v313, %v391
    %v393 = vpop.f32.mrf.mxu0
    %394 = vmatprep.mubr.f32.mxu0 0.0
    %395 = vmatmul.mubr.f32.gmra.mxu0 %v73
    %v396 = vpop.f32.mrf.mxu0
    %v397 = vadd.f32 %v313, %v396
    %v398 = vpop.f32.mrf.mxu0
    %399 = vmatprep.mubr.f32.mxu0 0.0
    %400 = vmatmul.mubr.f32.gmra.mxu0 %v76
    %v401 = vpop.f32.mrf.mxu0
    %v402 = vadd.f32 %v313, %v401
    %v403 = vpop.f32.mrf.mxu0
    %404 = vmatprep.mubr.f32.mxu0 0.0
    %405 = vmatmul.mubr.f32.gmra.mxu0 %v79
    %v406 = vpop.f32.mrf.mxu0
    %v407 = vadd.f32 %v313, %v406
    %v408 = vpop.f32.mrf.mxu0
    %409 = vmatprep.mubr.f32.mxu0 0.0
    %410 = vmatmul.mubr.f32.gmra.mxu0 %v82
    %v411 = vpop.f32.mrf.mxu0
    %v412 = vadd.f32 %v313, %v411
    %v413 = vpop.f32.mrf.mxu0
    %414 = vmatprep.mubr.f32.mxu0 0.0
    %415 = vmatmul.mubr.f32.gmra.mxu0 %v85
    %v416 = vpop.f32.mrf.mxu0
    %v417 = vadd.f32 %v313, %v416
    %v418 = vpop.f32.mrf.mxu0
    %419 = vdwg.mxu0
    %s420 = scalar_lea.vmem %s1, 16
    %v421 = vld [vmem:[%s420] sm:$0xff]
    %v422 = vld [vmem:[%s420 + $0x8] sm:$0xff]
    %s423 = scalar_lea.vmem %s4, 1
    %v424 = vld [vmem:[%s423] sm:$0x1]
    %v426 = vlaneseq
    %v427 = vshrl.u32 %v426, 7
    %v428 = vsub.s32 0, %v427
    %v429 = vrot.slane %v424, %v428
    %431 = vmatprep.subr.mxu0 0.0
    %432 = vmatpush1.msra.mxu0 0.0
    %433 = vmatprep.subr.mxu0 0.0
    %434 = vmatpush1.msra.mxu0 0.0
    %435 = vmatprep.subr.mxu0 0.0
    %436 = vmatpush1.msra.mxu0 0.0
    %437 = vmatprep.subr.mxu0 0.0
    %438 = vmatpush1.msra.mxu0 0.0
    %439 = vmatprep.subr.mxu0 0.0
    %440 = vmatpush1.msra.mxu0 0.0
    %441 = vmatprep.subr.mxu0 0.0
    %442 = vmatpush1.msra.mxu0 0.0
    %443 = vmatprep.subr.mxu0 0.0
    %444 = vmatpush1.msra.mxu0 0.0
    %445 = vmatprep.subr.mxu0 0.0
    %446 = vmatpush1.msra.mxu0 0.0
    %447 = vmatprep.subr.mxu0 0.0
    %448 = vmatpush1.msra.mxu0 0.0
    %449 = vmatprep.subr.mxu0 0.0
    %450 = vmatpush1.msra.mxu0 0.0
    %451 = vmatprep.subr.mxu0 0.0
    %452 = vmatpush1.msra.mxu0 0.0
    %453 = vmatprep.subr.mxu0 0.0
    %454 = vmatpush1.msra.mxu0 0.0
    %455 = vmatprep.subr.mxu0 0.0
    %456 = vmatpush1.msra.mxu0 0.0
    %457 = vmatprep.subr.mxu0 0.0
    %458 = vmatpush1.msra.mxu0 0.0
    %459 = vmatprep.subr.mxu0 0.0
    %460 = vmatpush1.msra.mxu0 %v422
    %461 = vmatprep.subr.mxu0 0.0
    %462 = vmatpush1.msra.mxu0 %v421
    %463 = vmatprep.subr.mxu0 0.0
    %464 = vmatpush2.msra.mxu0 0.0
    %465 = vmatprep.subr.mxu0 0.0
    %466 = vmatpush2.msra.mxu0 0.0
    %467 = vmatprep.subr.mxu0 0.0
    %468 = vmatpush2.msra.mxu0 0.0
    %469 = vmatprep.subr.mxu0 0.0
    %470 = vmatpush2.msra.mxu0 0.0
    %471 = vmatprep.subr.mxu0 0.0
    %472 = vmatpush2.msra.mxu0 0.0
    %473 = vmatprep.subr.mxu0 0.0
    %474 = vmatpush2.msra.mxu0 0.0
    %475 = vmatprep.subr.mxu0 0.0
    %476 = vmatpush2.msra.mxu0 0.0
    %477 = vmatprep.subr.mxu0 0.0
    %478 = vmatpush2.msra.mxu0 0.0
    %479 = vmatprep.subr.mxu0 0.0
    %480 = vmatpush2.msra.mxu0 0.0
    %481 = vmatprep.subr.mxu0 0.0
    %482 = vmatpush2.msra.mxu0 0.0
    %483 = vmatprep.subr.mxu0 0.0
    %484 = vmatpush2.msra.mxu0 0.0
    %485 = vmatprep.subr.mxu0 0.0
    %486 = vmatpush2.msra.mxu0 0.0
    %487 = vmatprep.subr.mxu0 0.0
    %488 = vmatpush2.msra.mxu0 0.0
    %489 = vmatprep.subr.mxu0 0.0
    %490 = vmatpush2.msra.mxu0 0.0
    %491 = vmatprep.subr.mxu0 0.0
    %492 = vmatpush2.msra.mxu0 0.0
    %493 = vmatprep.subr.mxu0 0.0
    %494 = vmatpush2.msra.mxu0 0.0
    %495 = vmatprep.mubr.f32.mxu0 0.0
    %496 = vmatmul.mubr.f32.gmra.mxu0 %v64
    %v497 = vpop.f32.mrf.mxu0
    %v498 = vadd.f32 %v429, %v497
    %v499 = vpop.f32.mrf.mxu0
    %500 = vmatprep.mubr.f32.mxu0 0.0
    %501 = vmatmul.mubr.f32.gmra.mxu0 %v67
    %v502 = vpop.f32.mrf.mxu0
    %v503 = vadd.f32 %v429, %v502
    %v504 = vpop.f32.mrf.mxu0
    %505 = vmatprep.mubr.f32.mxu0 0.0
    %506 = vmatmul.mubr.f32.gmra.mxu0 %v70
    %v507 = vpop.f32.mrf.mxu0
    %v508 = vadd.f32 %v429, %v507
    %v509 = vpop.f32.mrf.mxu0
    %510 = vmatprep.mubr.f32.mxu0 0.0
    %511 = vmatmul.mubr.f32.gmra.mxu0 %v73
    %v512 = vpop.f32.mrf.mxu0
    %v513 = vadd.f32 %v429, %v512
    %v514 = vpop.f32.mrf.mxu0
    %515 = vmatprep.mubr.f32.mxu0 0.0
    %516 = vmatmul.mubr.f32.gmra.mxu0 %v76
    %v517 = vpop.f32.mrf.mxu0
    %v518 = vadd.f32 %v429, %v517
    %v519 = vpop.f32.mrf.mxu0
    %520 = vmatprep.mubr.f32.mxu0 0.0
    %521 = vmatmul.mubr.f32.gmra.mxu0 %v79
    %v522 = vpop.f32.mrf.mxu0
    %v523 = vadd.f32 %v429, %v522
    %v524 = vpop.f32.mrf.mxu0
    %525 = vmatprep.mubr.f32.mxu0 0.0
    %526 = vmatmul.mubr.f32.gmra.mxu0 %v82
    %v527 = vpop.f32.mrf.mxu0
    %v528 = vadd.f32 %v429, %v527
    %v529 = vpop.f32.mrf.mxu0
    %530 = vmatprep.mubr.f32.mxu0 0.0
    %531 = vmatmul.mubr.f32.gmra.mxu0 %v85
    %v532 = vpop.f32.mrf.mxu0
    %v533 = vadd.f32 %v429, %v532
    %v534 = vpop.f32.mrf.mxu0
    %535 = vdwg.mxu0
    %s536 = scalar_lea.vmem %s2, 16
    %v537 = vld [vmem:[%s536] sm:$0xff]
    %v538 = vld [vmem:[%s536 + $0x8] sm:$0xff]
    %s539 = scalar_lea.vmem %s5, 1
    %v540 = vld [vmem:[%s539] sm:$0x1]
    %v542 = vlaneseq
    %v543 = vshrl.u32 %v542, 7
    %v544 = vsub.s32 0, %v543
    %v545 = vrot.slane %v540, %v544
    %547 = vmatprep.subr.mxu0 0.0
    %548 = vmatpush1.msra.mxu0 0.0
    %549 = vmatprep.subr.mxu0 0.0
    %550 = vmatpush1.msra.mxu0 0.0
    %551 = vmatprep.subr.mxu0 0.0
    %552 = vmatpush1.msra.mxu0 0.0
    %553 = vmatprep.subr.mxu0 0.0
    %554 = vmatpush1.msra.mxu0 0.0
    %555 = vmatprep.subr.mxu0 0.0
    %556 = vmatpush1.msra.mxu0 0.0
    %557 = vmatprep.subr.mxu0 0.0
    %558 = vmatpush1.msra.mxu0 0.0
    %559 = vmatprep.subr.mxu0 0.0
    %560 = vmatpush1.msra.mxu0 0.0
    %561 = vmatprep.subr.mxu0 0.0
    %562 = vmatpush1.msra.mxu0 0.0
    %563 = vmatprep.subr.mxu0 0.0
    %564 = vmatpush1.msra.mxu0 0.0
    %565 = vmatprep.subr.mxu0 0.0
    %566 = vmatpush1.msra.mxu0 0.0
    %567 = vmatprep.subr.mxu0 0.0
    %568 = vmatpush1.msra.mxu0 0.0
    %569 = vmatprep.subr.mxu0 0.0
    %570 = vmatpush1.msra.mxu0 0.0
    %571 = vmatprep.subr.mxu0 0.0
    %572 = vmatpush1.msra.mxu0 0.0
    %573 = vmatprep.subr.mxu0 0.0
    %574 = vmatpush1.msra.mxu0 0.0
    %575 = vmatprep.subr.mxu0 0.0
    %576 = vmatpush1.msra.mxu0 %v538
    %577 = vmatprep.subr.mxu0 0.0
    %578 = vmatpush1.msra.mxu0 %v537
    %579 = vmatprep.subr.mxu0 0.0
    %580 = vmatpush2.msra.mxu0 0.0
    %581 = vmatprep.subr.mxu0 0.0
    %582 = vmatpush2.msra.mxu0 0.0
    %583 = vmatprep.subr.mxu0 0.0
    %584 = vmatpush2.msra.mxu0 0.0
    %585 = vmatprep.subr.mxu0 0.0
    %586 = vmatpush2.msra.mxu0 0.0
    %587 = vmatprep.subr.mxu0 0.0
    %588 = vmatpush2.msra.mxu0 0.0
    %589 = vmatprep.subr.mxu0 0.0
    %590 = vmatpush2.msra.mxu0 0.0
    %591 = vmatprep.subr.mxu0 0.0
    %592 = vmatpush2.msra.mxu0 0.0
    %593 = vmatprep.subr.mxu0 0.0
    %594 = vmatpush2.msra.mxu0 0.0
    %595 = vmatprep.subr.mxu0 0.0
    %596 = vmatpush2.msra.mxu0 0.0
    %597 = vmatprep.subr.mxu0 0.0
    %598 = vmatpush2.msra.mxu0 0.0
    %599 = vmatprep.subr.mxu0 0.0
    %600 = vmatpush2.msra.mxu0 0.0
    %601 = vmatprep.subr.mxu0 0.0
    %602 = vmatpush2.msra.mxu0 0.0
    %603 = vmatprep.subr.mxu0 0.0
    %604 = vmatpush2.msra.mxu0 0.0
    %605 = vmatprep.subr.mxu0 0.0
    %606 = vmatpush2.msra.mxu0 0.0
    %607 = vmatprep.subr.mxu0 0.0
    %608 = vmatpush2.msra.mxu0 0.0
    %609 = vmatprep.subr.mxu0 0.0
    %610 = vmatpush2.msra.mxu0 0.0
    %611 = vmatprep.mubr.f32.mxu0 0.0
    %612 = vmatmul.mubr.f32.gmra.mxu0 %v64
    %v613 = vpop.f32.mrf.mxu0
    %v614 = vadd.f32 %v545, %v613
    %v615 = vpop.f32.mrf.mxu0
    %616 = vmatprep.mubr.f32.mxu0 0.0
    %617 = vmatmul.mubr.f32.gmra.mxu0 %v67
    %v618 = vpop.f32.mrf.mxu0
    %v619 = vadd.f32 %v545, %v618
    %v620 = vpop.f32.mrf.mxu0
    %621 = vmatprep.mubr.f32.mxu0 0.0
    %622 = vmatmul.mubr.f32.gmra.mxu0 %v70
    %v623 = vpop.f32.mrf.mxu0
    %v624 = vadd.f32 %v545, %v623
    %v625 = vpop.f32.mrf.mxu0
    %626 = vmatprep.mubr.f32.mxu0 0.0
    %627 = vmatmul.mubr.f32.gmra.mxu0 %v73
    %v628 = vpop.f32.mrf.mxu0
    %v629 = vadd.f32 %v545, %v628
    %v630 = vpop.f32.mrf.mxu0
    %631 = vmatprep.mubr.f32.mxu0 0.0
    %632 = vmatmul.mubr.f32.gmra.mxu0 %v76
    %v633 = vpop.f32.mrf.mxu0
    %v634 = vadd.f32 %v545, %v633
    %v635 = vpop.f32.mrf.mxu0
    %636 = vmatprep.mubr.f32.mxu0 0.0
    %637 = vmatmul.mubr.f32.gmra.mxu0 %v79
    %v638 = vpop.f32.mrf.mxu0
    %v639 = vadd.f32 %v545, %v638
    %v640 = vpop.f32.mrf.mxu0
    %641 = vmatprep.mubr.f32.mxu0 0.0
    %642 = vmatmul.mubr.f32.gmra.mxu0 %v82
    %v643 = vpop.f32.mrf.mxu0
    %v644 = vadd.f32 %v545, %v643
    %v645 = vpop.f32.mrf.mxu0
    %646 = vmatprep.mubr.f32.mxu0 0.0
    %647 = vmatmul.mubr.f32.gmra.mxu0 %v85
    %v648 = vpop.f32.mrf.mxu0
    %v649 = vadd.f32 %v545, %v648
    %v650 = vpop.f32.mrf.mxu0
    %651 = vdwg.mxu0
    %s652 = scalar_lea.vmem %s3, 16
    %v653 = vld [vmem:[%s652] sm:$0xff]
    %v654 = vld [vmem:[%s652 + $0x8] sm:$0xff]
    %s655 = scalar_lea.vmem %s6, 1
    %v656 = vld [vmem:[%s655] sm:$0x1]
    %v658 = vlaneseq
    %v659 = vshrl.u32 %v658, 7
    %v660 = vsub.s32 0, %v659
    %v661 = vrot.slane %v656, %v660
    %663 = vmatprep.subr.mxu0 0.0
    %664 = vmatpush1.msra.mxu0 0.0
    %665 = vmatprep.subr.mxu0 0.0
    %666 = vmatpush1.msra.mxu0 0.0
    %667 = vmatprep.subr.mxu0 0.0
    %668 = vmatpush1.msra.mxu0 0.0
    %669 = vmatprep.subr.mxu0 0.0
    %670 = vmatpush1.msra.mxu0 0.0
    %671 = vmatprep.subr.mxu0 0.0
    %672 = vmatpush1.msra.mxu0 0.0
    %673 = vmatprep.subr.mxu0 0.0
    %674 = vmatpush1.msra.mxu0 0.0
    %675 = vmatprep.subr.mxu0 0.0
    %676 = vmatpush1.msra.mxu0 0.0
    %677 = vmatprep.subr.mxu0 0.0
    %678 = vmatpush1.msra.mxu0 0.0
    %679 = vmatprep.subr.mxu0 0.0
    %680 = vmatpush1.msra.mxu0 0.0
    %681 = vmatprep.subr.mxu0 0.0
    %682 = vmatpush1.msra.mxu0 0.0
    %683 = vmatprep.subr.mxu0 0.0
    %684 = vmatpush1.msra.mxu0 0.0
    %685 = vmatprep.subr.mxu0 0.0
    %686 = vmatpush1.msra.mxu0 0.0
    %687 = vmatprep.subr.mxu0 0.0
    %688 = vmatpush1.msra.mxu0 0.0
    %689 = vmatprep.subr.mxu0 0.0
    %690 = vmatpush1.msra.mxu0 0.0
    %691 = vmatprep.subr.mxu0 0.0
    %692 = vmatpush1.msra.mxu0 %v654
    %693 = vmatprep.subr.mxu0 0.0
    %694 = vmatpush1.msra.mxu0 %v653
    %695 = vmatprep.subr.mxu0 0.0
    %696 = vmatpush2.msra.mxu0 0.0
    %697 = vmatprep.subr.mxu0 0.0
    %698 = vmatpush2.msra.mxu0 0.0
    %699 = vmatprep.subr.mxu0 0.0
    %700 = vmatpush2.msra.mxu0 0.0
    %701 = vmatprep.subr.mxu0 0.0
    %702 = vmatpush2.msra.mxu0 0.0
    %703 = vmatprep.subr.mxu0 0.0
    %704 = vmatpush2.msra.mxu0 0.0
    %705 = vmatprep.subr.mxu0 0.0
    %706 = vmatpush2.msra.mxu0 0.0
    %707 = vmatprep.subr.mxu0 0.0
    %708 = vmatpush2.msra.mxu0 0.0
    %709 = vmatprep.subr.mxu0 0.0
    %710 = vmatpush2.msra.mxu0 0.0
    %711 = vmatprep.subr.mxu0 0.0
    %712 = vmatpush2.msra.mxu0 0.0
    %713 = vmatprep.subr.mxu0 0.0
    %714 = vmatpush2.msra.mxu0 0.0
    %715 = vmatprep.subr.mxu0 0.0
    %716 = vmatpush2.msra.mxu0 0.0
    %717 = vmatprep.subr.mxu0 0.0
    %718 = vmatpush2.msra.mxu0 0.0
    %719 = vmatprep.subr.mxu0 0.0
    %720 = vmatpush2.msra.mxu0 0.0
    %721 = vmatprep.subr.mxu0 0.0
    %722 = vmatpush2.msra.mxu0 0.0
    %723 = vmatprep.subr.mxu0 0.0
    %724 = vmatpush2.msra.mxu0 0.0
    %725 = vmatprep.subr.mxu0 0.0
    %726 = vmatpush2.msra.mxu0 0.0
    %727 = vmatprep.mubr.f32.mxu0 0.0
    %728 = vmatmul.mubr.f32.gmra.mxu0 %v64
    %v729 = vpop.f32.mrf.mxu0
    %v730 = vadd.f32 %v661, %v729
    %v731 = vpop.f32.mrf.mxu0
    %732 = vmatprep.mubr.f32.mxu0 0.0
    %733 = vmatmul.mubr.f32.gmra.mxu0 %v67
    %v734 = vpop.f32.mrf.mxu0
    %v735 = vadd.f32 %v661, %v734
    %v736 = vpop.f32.mrf.mxu0
    %737 = vmatprep.mubr.f32.mxu0 0.0
    %738 = vmatmul.mubr.f32.gmra.mxu0 %v70
    %v739 = vpop.f32.mrf.mxu0
    %v740 = vadd.f32 %v661, %v739
    %v741 = vpop.f32.mrf.mxu0
    %742 = vmatprep.mubr.f32.mxu0 0.0
    %743 = vmatmul.mubr.f32.gmra.mxu0 %v73
    %v744 = vpop.f32.mrf.mxu0
    %v745 = vadd.f32 %v661, %v744
    %v746 = vpop.f32.mrf.mxu0
    %747 = vmatprep.mubr.f32.mxu0 0.0
    %748 = vmatmul.mubr.f32.gmra.mxu0 %v76
    %v749 = vpop.f32.mrf.mxu0
    %v750 = vadd.f32 %v661, %v749
    %v751 = vpop.f32.mrf.mxu0
    %752 = vmatprep.mubr.f32.mxu0 0.0
    %753 = vmatmul.mubr.f32.gmra.mxu0 %v79
    %v754 = vpop.f32.mrf.mxu0
    %v755 = vadd.f32 %v661, %v754
    %v756 = vpop.f32.mrf.mxu0
    %757 = vmatprep.mubr.f32.mxu0 0.0
    %758 = vmatmul.mubr.f32.gmra.mxu0 %v82
    %v759 = vpop.f32.mrf.mxu0
    %v760 = vadd.f32 %v661, %v759
    %v761 = vpop.f32.mrf.mxu0
    %762 = vmatprep.mubr.f32.mxu0 0.0
    %763 = vmatmul.mubr.f32.gmra.mxu0 %v85
    %v764 = vpop.f32.mrf.mxu0
    %v765 = vadd.f32 %v661, %v764
    %v766 = vpop.f32.mrf.mxu0
    %767 = vdwg.mxu0
    %v768 = vld [vmem:[%s9] sm:$0xff]
    %v769 = vld [vmem:[%s9 + $0x8] sm:$0xff]
    %v770 = vld [vmem:[%s9 + $0x10] sm:$0xff]
    %v771 = vld [vmem:[%s9 + $0x18] sm:$0xff]
    %v772 = vld [vmem:[%s10] sm:$0xff]
    %v773 = vld [vmem:[%s10 + $0x8] sm:$0xff]
    %v774 = vld [vmem:[%s10 + $0x10] sm:$0xff]
    %v775 = vld [vmem:[%s10 + $0x18] sm:$0xff]
    %v776 = vld [vmem:[%s10 + $0x20] sm:$0xff]
    %v777 = vld [vmem:[%s10 + $0x28] sm:$0xff]
    %v778 = vld [vmem:[%s10 + $0x30] sm:$0xff]
    %v779 = vld [vmem:[%s10 + $0x38] sm:$0xff]
    %v780 = vld [vmem:[%s10 + $0x40] sm:$0xff]
    %v781 = vld [vmem:[%s10 + $0x48] sm:$0xff]
    %v782 = vld [vmem:[%s10 + $0x50] sm:$0xff]
    %v783 = vld [vmem:[%s10 + $0x58] sm:$0xff]
    %v784 = vld [vmem:[%s10 + $0x60] sm:$0xff]
    %v785 = vld [vmem:[%s10 + $0x68] sm:$0xff]
    %v786 = vld [vmem:[%s10 + $0x70] sm:$0xff]
    %v787 = vld [vmem:[%s10 + $0x78] sm:$0xff]
    %v788 = vld [vmem:[%s10 + $0x80] sm:$0xff]
    %v789 = vld [vmem:[%s10 + $0x88] sm:$0xff]
    %v790 = vld [vmem:[%s11] sm:$0xff]
    %v791 = vld [vmem:[%s11 + $0x8] sm:$0xff]
    %v792 = vld [vmem:[%s11 + $0x10] sm:$0xff]
    %v793 = vld [vmem:[%s11 + $0x18] sm:$0xff]
    %v794 = vld [vmem:[%s12] sm:$0xff]
    %v795 = vld [vmem:[%s12 + $0x8] sm:$0xff]
    %vm796 = vcmask 64512
    %v798 = vsel %vm796, %v154, 0
    %v801 = vsel %vm796, %v159, 0
    %v804 = vsel %vm796, %v164, 0
    %v807 = vsel %vm796, %v169, 0
    %v810 = vsel %vm796, %v268, 0
    %v813 = vsel %vm796, %v273, 0
    %v816 = vsel %vm796, %v278, 0
    %v819 = vsel %vm796, %v283, 0
    %821 = vmatprep.subr.mxu0 0.0
    %822 = vmatpush1.xpose.msra.mxu0 0.0
    %823 = vmatprep.subr.mxu0 0.0
    %824 = vmatpush1.xpose.msra.mxu0 0.0
    %825 = vmatprep.subr.mxu0 0.0
    %826 = vmatpush1.xpose.msra.mxu0 0.0
    %827 = vmatprep.subr.mxu0 0.0
    %828 = vmatpush1.xpose.msra.mxu0 0.0
    %829 = vmatprep.subr.mxu0 0.0
    %830 = vmatpush1.xpose.msra.mxu0 0.0
    %831 = vmatprep.subr.mxu0 0.0
    %832 = vmatpush1.xpose.msra.mxu0 0.0
    %833 = vmatprep.subr.mxu0 0.0
    %834 = vmatpush1.xpose.msra.mxu0 0.0
    %835 = vmatprep.subr.mxu0 0.0
    %836 = vmatpush1.xpose.msra.mxu0 0.0
    %837 = vmatprep.subr.mxu0 0.0
    %838 = vmatpush1.xpose.msra.mxu0 0.0
    %839 = vmatprep.subr.mxu0 0.0
    %840 = vmatpush1.xpose.msra.mxu0 0.0
    %841 = vmatprep.subr.mxu0 0.0
    %842 = vmatpush1.xpose.msra.mxu0 0.0
    %843 = vmatprep.subr.mxu0 0.0
    %844 = vmatpush1.xpose.msra.mxu0 0.0
    %845 = vmatprep.subr.mxu0 0.0
    %846 = vmatpush1.xpose.msra.mxu0 %v819
    %847 = vmatprep.subr.mxu0 0.0
    %848 = vmatpush1.xpose.msra.mxu0 %v816
    %849 = vmatprep.subr.mxu0 0.0
    %850 = vmatpush1.xpose.msra.mxu0 %v813
    %851 = vmatprep.subr.mxu0 0.0
    %852 = vmatpush1.xpose.msra.mxu0 %v810
    %853 = vmatprep.subr.mxu0 0.0
    %854 = vmatpush2.xpose.msra.mxu0 0.0
    %855 = vmatprep.subr.mxu0 0.0
    %856 = vmatpush2.xpose.msra.mxu0 0.0
    %857 = vmatprep.subr.mxu0 0.0
    %858 = vmatpush2.xpose.msra.mxu0 0.0
    %859 = vmatprep.subr.mxu0 0.0
    %860 = vmatpush2.xpose.msra.mxu0 0.0
    %861 = vmatprep.subr.mxu0 0.0
    %862 = vmatpush2.xpose.msra.mxu0 0.0
    %863 = vmatprep.subr.mxu0 0.0
    %864 = vmatpush2.xpose.msra.mxu0 0.0
    %865 = vmatprep.subr.mxu0 0.0
    %866 = vmatpush2.xpose.msra.mxu0 0.0
    %867 = vmatprep.subr.mxu0 0.0
    %868 = vmatpush2.xpose.msra.mxu0 0.0
    %869 = vmatprep.subr.mxu0 0.0
    %870 = vmatpush2.xpose.msra.mxu0 0.0
    %871 = vmatprep.subr.mxu0 0.0
    %872 = vmatpush2.xpose.msra.mxu0 0.0
    %873 = vmatprep.subr.mxu0 0.0
    %874 = vmatpush2.xpose.msra.mxu0 0.0
    %875 = vmatprep.subr.mxu0 0.0
    %876 = vmatpush2.xpose.msra.mxu0 0.0
    %877 = vmatprep.subr.mxu0 0.0
    %878 = vmatpush2.xpose.msra.mxu0 0.0
    %879 = vmatprep.subr.mxu0 0.0
    %880 = vmatpush2.xpose.msra.mxu0 0.0
    %881 = vmatprep.subr.mxu0 0.0
    %882 = vmatpush2.xpose.msra.mxu0 0.0
    %883 = vmatprep.subr.mxu0 0.0
    %884 = vmatpush2.xpose.msra.mxu0 0.0
    %885 = vmatprep.mubr.f32.mxu0 0.0
    %886 = vmatmul.mubr.f32.gmra.mxu0 %v798
    %v887 = vpop.f32.mrf.mxu0
    %v888 = vadd.f32 0.0, %v887
    %v889 = vpop.f32.mrf.mxu0
    %890 = vmatprep.mubr.f32.mxu0 0.0
    %891 = vmatmul.mubr.f32.gmra.mxu0 %v801
    %v892 = vpop.f32.mrf.mxu0
    %v893 = vadd.f32 0.0, %v892
    %v894 = vpop.f32.mrf.mxu0
    %895 = vmatprep.mubr.f32.mxu0 0.0
    %896 = vmatmul.mubr.f32.gmra.mxu0 %v804
    %v897 = vpop.f32.mrf.mxu0
    %v898 = vadd.f32 0.0, %v897
    %v899 = vpop.f32.mrf.mxu0
    %900 = vmatprep.mubr.f32.mxu0 0.0
    %901 = vmatmul.mubr.f32.gmra.mxu0 %v807
    %v902 = vpop.f32.mrf.mxu0
    %v903 = vadd.f32 0.0, %v902
    %v904 = vpop.f32.mrf.mxu0
    %905 = vdwg.mxu0
    %vm906 = vcmask 261120
    %v907 = vsel %vm906, %v888, -inf
    %908 = vmax.xlane.f32.xlu0 %v907
    %v909 = vpop.xlane.xlu0 %908
    %v910 = vsel %vm906, %v893, -inf
    %911 = vmax.xlane.f32.xlu0 %v910
    %v912 = vpop.xlane.xlu0 %911
    %v913 = vsel %vm906, %v898, -inf
    %914 = vmax.xlane.f32.xlu0 %v913
    %v915 = vpop.xlane.xlu0 %914
    %v916 = vsel %vm906, %v903, -inf
    %917 = vmax.xlane.f32.xlu0 %v916
    %v918 = vpop.xlane.xlu0 %917
    %v919 = vsub.f32 %v888, %v909
    %v920 = vsub.f32 %v893, %v912
    %v921 = vsub.f32 %v898, %v915
    %v922 = vsub.f32 %v903, %v918
    %v923 = vmul.f32 %v919, 1.442695
    %v924 = vpow.pop %v923
    %v925 = vmul.f32 %v920, 1.442695
    %v926 = vpow.pop %v925
    %v927 = vmul.f32 %v921, 1.442695
    %v928 = vpow.pop %v927
    %v929 = vmul.f32 %v922, 1.442695
    %v930 = vpow.pop %v929
    %v931 = vsel %vm906, %v924, 0.0
    %932 = vadd.xlane.f32.xlu0 %v931
    %v933 = vpop.xlane.xlu0 %932
    %v934 = vsel %vm906, %v926, 0.0
    %935 = vadd.xlane.f32.xlu0 %v934
    %v936 = vpop.xlane.xlu0 %935
    %v937 = vsel %vm906, %v928, 0.0
    %938 = vadd.xlane.f32.xlu0 %v937
    %v939 = vpop.xlane.xlu0 %938
    %v940 = vsel %vm906, %v930, 0.0
    %941 = vadd.xlane.f32.xlu0 %v940
    %v942 = vpop.xlane.xlu0 %941
    %v943 = vrcp.pop %v933
    %v944 = vrcp.pop %v936
    %v945 = vrcp.pop %v939
    %v946 = vrcp.pop %v942
    %v947 = vmul.f32 %v924, %v943
    %v948 = vmul.f32 %v926, %v944
    %v949 = vmul.f32 %v928, %v945
    %v950 = vmul.f32 %v930, %v946
    %v952 = vsel %vm906, %v947, 0
    %v955 = vsel %vm906, %v948, 0
    %v958 = vsel %vm906, %v949, 0
    %v961 = vsel %vm906, %v950, 0
    %963 = vmatprep.subr.mxu0 0.0
    %964 = vmatpush1.msra.mxu0 0.0
    %965 = vmatprep.subr.mxu0 0.0
    %966 = vmatpush1.msra.mxu0 0.0
    %967 = vmatprep.subr.mxu0 0.0
    %968 = vmatpush1.msra.mxu0 0.0
    %969 = vmatprep.subr.mxu0 0.0
    %970 = vmatpush1.msra.mxu0 0.0
    %971 = vmatprep.subr.mxu0 0.0
    %972 = vmatpush1.msra.mxu0 0.0
    %973 = vmatprep.subr.mxu0 0.0
    %974 = vmatpush1.msra.mxu0 0.0
    %975 = vmatprep.subr.mxu0 0.0
    %976 = vmatpush1.msra.mxu0 0.0
    %977 = vmatprep.subr.mxu0 0.0
    %978 = vmatpush1.msra.mxu0 0.0
    %979 = vmatprep.subr.mxu0 0.0
    %980 = vmatpush1.msra.mxu0 0.0
    %981 = vmatprep.subr.mxu0 0.0
    %982 = vmatpush1.msra.mxu0 0.0
    %983 = vmatprep.subr.mxu0 0.0
    %984 = vmatpush1.msra.mxu0 0.0
    %985 = vmatprep.subr.mxu0 0.0
    %986 = vmatpush1.msra.mxu0 0.0
    %987 = vmatprep.subr.mxu0 0.0
    %988 = vmatpush1.msra.mxu0 %v397
    %989 = vmatprep.subr.mxu0 0.0
    %990 = vmatpush1.msra.mxu0 %v392
    %991 = vmatprep.subr.mxu0 0.0
    %992 = vmatpush1.msra.mxu0 %v387
    %993 = vmatprep.subr.mxu0 0.0
    %994 = vmatpush1.msra.mxu0 %v382
    %995 = vmatprep.subr.mxu0 0.0
    %996 = vmatpush2.msra.mxu0 0.0
    %997 = vmatprep.subr.mxu0 0.0
    %998 = vmatpush2.msra.mxu0 0.0
    %999 = vmatprep.subr.mxu0 0.0
    %1000 = vmatpush2.msra.mxu0 0.0
    %1001 = vmatprep.subr.mxu0 0.0
    %1002 = vmatpush2.msra.mxu0 0.0
    %1003 = vmatprep.subr.mxu0 0.0
    %1004 = vmatpush2.msra.mxu0 0.0
    %1005 = vmatprep.subr.mxu0 0.0
    %1006 = vmatpush2.msra.mxu0 0.0
    %1007 = vmatprep.subr.mxu0 0.0
    %1008 = vmatpush2.msra.mxu0 0.0
    %1009 = vmatprep.subr.mxu0 0.0
    %1010 = vmatpush2.msra.mxu0 0.0
    %1011 = vmatprep.subr.mxu0 0.0
    %1012 = vmatpush2.msra.mxu0 0.0
    %1013 = vmatprep.subr.mxu0 0.0
    %1014 = vmatpush2.msra.mxu0 0.0
    %1015 = vmatprep.subr.mxu0 0.0
    %1016 = vmatpush2.msra.mxu0 0.0
    %1017 = vmatprep.subr.mxu0 0.0
    %1018 = vmatpush2.msra.mxu0 0.0
    %1019 = vmatprep.subr.mxu0 0.0
    %1020 = vmatpush2.msra.mxu0 0.0
    %1021 = vmatprep.subr.mxu0 0.0
    %1022 = vmatpush2.msra.mxu0 0.0
    %1023 = vmatprep.subr.mxu0 0.0
    %1024 = vmatpush2.msra.mxu0 0.0
    %1025 = vmatprep.subr.mxu0 0.0
    %1026 = vmatpush2.msra.mxu0 0.0
    %1027 = vmatprep.mubr.f32.mxu0 0.0
    %1028 = vmatmul.mubr.f32.gmra.mxu0 %v952
    %v1029 = vpop.f32.mrf.mxu0
    %v1030 = vadd.f32 0.0, %v1029
    %v1031 = vpop.f32.mrf.mxu0
    %1032 = vmatprep.mubr.f32.mxu0 0.0
    %1033 = vmatmul.mubr.f32.gmra.mxu0 %v955
    %v1034 = vpop.f32.mrf.mxu0
    %v1035 = vadd.f32 0.0, %v1034
    %v1036 = vpop.f32.mrf.mxu0
    %1037 = vmatprep.mubr.f32.mxu0 0.0
    %1038 = vmatmul.mubr.f32.gmra.mxu0 %v958
    %v1039 = vpop.f32.mrf.mxu0
    %v1040 = vadd.f32 0.0, %v1039
    %v1041 = vpop.f32.mrf.mxu0
    %1042 = vmatprep.mubr.f32.mxu0 0.0
    %1043 = vmatmul.mubr.f32.gmra.mxu0 %v961
    %v1044 = vpop.f32.mrf.mxu0
    %v1045 = vadd.f32 0.0, %v1044
    %v1046 = vpop.f32.mrf.mxu0
    %1047 = vdwg.mxu0
    %v1048 = vld [vmem:[%s7] sm:$0xff]
    %v1049 = vld [vmem:[%s7 + $0x8] sm:$0xff]
    %v1050 = vadd.f32 %v382, 3.0
    %v1051 = vadd.f32 %v387, 3.0
    %v1052 = vmax.f32 %v1050, 0.0
    %v1053 = vmax.f32 %v1051, 0.0
    %v1054 = vmin.f32 %v1052, 6.0
    %v1055 = vmin.f32 %v1053, 6.0
    %v1056 = vmul.f32 %v382, %v1054
    %v1057 = vmul.f32 %v387, %v1055
    %v1058 = vmul.f32 %v1056, 0.16666667
    %v1059 = vmul.f32 %v1057, 0.16666667
    %v1061 = vsel %vm62, %v1058, 0
    %v1064 = vsel %vm62, %v1059, 0
    %1066 = vmatprep.subr.mxu0 0.0
    %1067 = vmatpush1.msra.mxu0 0.0
    %1068 = vmatprep.subr.mxu0 0.0
    %1069 = vmatpush1.msra.mxu0 0.0
    %1070 = vmatprep.subr.mxu0 0.0
    %1071 = vmatpush1.msra.mxu0 0.0
    %1072 = vmatprep.subr.mxu0 0.0
    %1073 = vmatpush1.msra.mxu0 0.0
    %1074 = vmatprep.subr.mxu0 0.0
    %1075 = vmatpush1.msra.mxu0 0.0
    %1076 = vmatprep.subr.mxu0 0.0
    %1077 = vmatpush1.msra.mxu0 0.0
    %1078 = vmatprep.subr.mxu0 0.0
    %1079 = vmatpush1.msra.mxu0 0.0
    %1080 = vmatprep.subr.mxu0 0.0
    %1081 = vmatpush1.msra.mxu0 0.0
    %1082 = vmatprep.subr.mxu0 0.0
    %1083 = vmatpush1.msra.mxu0 0.0
    %1084 = vmatprep.subr.mxu0 0.0
    %1085 = vmatpush1.msra.mxu0 0.0
    %1086 = vmatprep.subr.mxu0 0.0
    %1087 = vmatpush1.msra.mxu0 0.0
    %1088 = vmatprep.subr.mxu0 0.0
    %1089 = vmatpush1.msra.mxu0 0.0
    %1090 = vmatprep.subr.mxu0 0.0
    %1091 = vmatpush1.msra.mxu0 0.0
    %1092 = vmatprep.subr.mxu0 0.0
    %1093 = vmatpush1.msra.mxu0 0.0
    %1094 = vmatprep.subr.mxu0 %v771
    %1095 = vmatpush1.msra.mxu0 %v770
    %1096 = vmatprep.subr.mxu0 %v769
    %1097 = vmatpush1.msra.mxu0 %v768
    %1098 = vmatprep.subr.mxu0 0.0
    %1099 = vmatpush2.msra.mxu0 0.0
    %1100 = vmatprep.subr.mxu0 0.0
    %1101 = vmatpush2.msra.mxu0 0.0
    %1102 = vmatprep.subr.mxu0 0.0
    %1103 = vmatpush2.msra.mxu0 0.0
    %1104 = vmatprep.subr.mxu0 0.0
    %1105 = vmatpush2.msra.mxu0 0.0
    %1106 = vmatprep.subr.mxu0 0.0
    %1107 = vmatpush2.msra.mxu0 0.0
    %1108 = vmatprep.subr.mxu0 0.0
    %1109 = vmatpush2.msra.mxu0 0.0
    %1110 = vmatprep.subr.mxu0 0.0
    %1111 = vmatpush2.msra.mxu0 0.0
    %1112 = vmatprep.subr.mxu0 0.0
    %1113 = vmatpush2.msra.mxu0 0.0
    %1114 = vmatprep.subr.mxu0 0.0
    %1115 = vmatpush2.msra.mxu0 0.0
    %1116 = vmatprep.subr.mxu0 0.0
    %1117 = vmatpush2.msra.mxu0 0.0
    %1118 = vmatprep.subr.mxu0 0.0
    %1119 = vmatpush2.msra.mxu0 0.0
    %1120 = vmatprep.subr.mxu0 0.0
    %1121 = vmatpush2.msra.mxu0 0.0
    %1122 = vmatprep.subr.mxu0 0.0
    %1123 = vmatpush2.msra.mxu0 0.0
    %1124 = vmatprep.subr.mxu0 0.0
    %1125 = vmatpush2.msra.mxu0 0.0
    %1126 = vmatprep.subr.mxu0 0.0
    %1127 = vmatpush2.msra.mxu0 0.0
    %1128 = vmatprep.subr.mxu0 0.0
    %1129 = vmatpush2.msra.mxu0 0.0
    %1130 = vmatprep.mubr.f32.mxu0 0.0
    %1131 = vmatmul.mubr.f32.gmra.mxu0 %v1061
    %v1132 = vpop.f32.mrf.mxu0
    %v1133 = vadd.f32 0.0, %v1132
    %v1134 = vpop.f32.mrf.mxu0
    %v1135 = vadd.f32 0.0, %v1134
    %1136 = vmatprep.mubr.f32.mxu0 0.0
    %1137 = vmatmul.mubr.f32.gmra.mxu0 %v1064
    %v1138 = vpop.f32.mrf.mxu0
    %v1139 = vadd.f32 0.0, %v1138
    %v1140 = vpop.f32.mrf.mxu0
    %v1141 = vadd.f32 0.0, %v1140
    %1142 = vdwg.mxu0
    %v1143 = vld [vmem:[%s8] sm:$0xff]
    %v1144 = vld [vmem:[%s8 + $0x8] sm:$0xff]
    %v1145 = vld [vmem:[%s8 + $0x10] sm:$0xff]
    %v1146 = vld [vmem:[%s8 + $0x18] sm:$0xff]
    %v1147 = vmul.f32 %v1133, %v1143
    %v1148 = vmul.f32 %v1135, %v1144
    %v1149 = vmul.f32 %v1139, %v1145
    %v1150 = vmul.f32 %v1141, %v1146
    %v1152 = vsel %vm62, %v1148, 0
    %v1155 = vsel %vm62, %v1150, 0
    %1157 = vmatprep.subr.mxu0 0.0
    %1158 = vmatpush1.msra.mxu0 %v787
    %1159 = vmatprep.subr.mxu0 0.0
    %1160 = vmatpush1.msra.mxu0 %v786
    %1161 = vmatprep.subr.mxu0 0.0
    %1162 = vmatpush1.msra.mxu0 %v785
    %1163 = vmatprep.subr.mxu0 0.0
    %1164 = vmatpush1.msra.mxu0 %v784
    %1165 = vmatprep.subr.mxu0 0.0
    %1166 = vmatpush1.msra.mxu0 %v783
    %1167 = vmatprep.subr.mxu0 0.0
    %1168 = vmatpush1.msra.mxu0 %v782
    %1169 = vmatprep.subr.mxu0 0.0
    %1170 = vmatpush1.msra.mxu0 %v781
    %1171 = vmatprep.subr.mxu0 0.0
    %1172 = vmatpush1.msra.mxu0 %v780
    %1173 = vmatprep.subr.mxu0 0.0
    %1174 = vmatpush1.msra.mxu0 %v779
    %1175 = vmatprep.subr.mxu0 0.0
    %1176 = vmatpush1.msra.mxu0 %v778
    %1177 = vmatprep.subr.mxu0 0.0
    %1178 = vmatpush1.msra.mxu0 %v777
    %1179 = vmatprep.subr.mxu0 0.0
    %1180 = vmatpush1.msra.mxu0 %v776
    %1181 = vmatprep.subr.mxu0 0.0
    %1182 = vmatpush1.msra.mxu0 %v775
    %1183 = vmatprep.subr.mxu0 0.0
    %1184 = vmatpush1.msra.mxu0 %v774
    %1185 = vmatprep.subr.mxu0 0.0
    %1186 = vmatpush1.msra.mxu0 %v773
    %1187 = vmatprep.subr.mxu0 0.0
    %1188 = vmatpush1.msra.mxu0 %v772
    %1189 = vmatprep.subr.mxu0 0.0
    %1190 = vmatpush2.msra.mxu0 0.0
    %1191 = vmatprep.subr.mxu0 0.0
    %1192 = vmatpush2.msra.mxu0 0.0
    %1193 = vmatprep.subr.mxu0 0.0
    %1194 = vmatpush2.msra.mxu0 0.0
    %1195 = vmatprep.subr.mxu0 0.0
    %1196 = vmatpush2.msra.mxu0 0.0
    %1197 = vmatprep.subr.mxu0 0.0
    %1198 = vmatpush2.msra.mxu0 0.0
    %1199 = vmatprep.subr.mxu0 0.0
    %1200 = vmatpush2.msra.mxu0 0.0
    %1201 = vmatprep.subr.mxu0 0.0
    %1202 = vmatpush2.msra.mxu0 0.0
    %1203 = vmatprep.subr.mxu0 0.0
    %1204 = vmatpush2.msra.mxu0 0.0
    %1205 = vmatprep.subr.mxu0 0.0
    %1206 = vmatpush2.msra.mxu0 0.0
    %1207 = vmatprep.subr.mxu0 0.0
    %1208 = vmatpush2.msra.mxu0 0.0
    %1209 = vmatprep.subr.mxu0 0.0
    %1210 = vmatpush2.msra.mxu0 0.0
    %1211 = vmatprep.subr.mxu0 0.0
    %1212 = vmatpush2.msra.mxu0 0.0
    %1213 = vmatprep.subr.mxu0 0.0
    %1214 = vmatpush2.msra.mxu0 0.0
    %1215 = vmatprep.subr.mxu0 0.0
    %1216 = vmatpush2.msra.mxu0 0.0
    %1217 = vmatprep.subr.mxu0 0.0
    %1218 = vmatpush2.msra.mxu0 %v789
    %1219 = vmatprep.subr.mxu0 0.0
    %1220 = vmatpush2.msra.mxu0 %v788
    %1221 = vmatprep.mubr.f32.mxu0 %v1152
    %1222 = vmatmul.mubr.f32.gmra.mxu0 %v1147
    %v1223 = vpop.f32.mrf.mxu0
    %v1224 = vadd.f32 0.0, %v1223
    %v1225 = vpop.f32.mrf.mxu0
    %1226 = vmatprep.mubr.f32.mxu0 %v1155
    %1227 = vmatmul.mubr.f32.gmra.mxu0 %v1149
    %v1228 = vpop.f32.mrf.mxu0
    %v1229 = vadd.f32 0.0, %v1228
    %v1230 = vpop.f32.mrf.mxu0
    %1231 = vdwg.mxu0
    %v1233 = vsel %vm796, %v498, 0
    %v1236 = vsel %vm796, %v503, 0
    %v1239 = vsel %vm796, %v508, 0
    %v1242 = vsel %vm796, %v513, 0
    %v1245 = vsel %vm796, %v614, 0
    %v1248 = vsel %vm796, %v619, 0
    %v1251 = vsel %vm796, %v624, 0
    %v1254 = vsel %vm796, %v629, 0
    %1256 = vmatprep.subr.mxu0 0.0
    %1257 = vmatpush1.xpose.msra.mxu0 0.0
    %1258 = vmatprep.subr.mxu0 0.0
    %1259 = vmatpush1.xpose.msra.mxu0 0.0
    %1260 = vmatprep.subr.mxu0 0.0
    %1261 = vmatpush1.xpose.msra.mxu0 0.0
    %1262 = vmatprep.subr.mxu0 0.0
    %1263 = vmatpush1.xpose.msra.mxu0 0.0
    %1264 = vmatprep.subr.mxu0 0.0
    %1265 = vmatpush1.xpose.msra.mxu0 0.0
    %1266 = vmatprep.subr.mxu0 0.0
    %1267 = vmatpush1.xpose.msra.mxu0 0.0
    %1268 = vmatprep.subr.mxu0 0.0
    %1269 = vmatpush1.xpose.msra.mxu0 0.0
    %1270 = vmatprep.subr.mxu0 0.0
    %1271 = vmatpush1.xpose.msra.mxu0 0.0
    %1272 = vmatprep.subr.mxu0 0.0
    %1273 = vmatpush1.xpose.msra.mxu0 0.0
    %1274 = vmatprep.subr.mxu0 0.0
    %1275 = vmatpush1.xpose.msra.mxu0 0.0
    %1276 = vmatprep.subr.mxu0 0.0
    %1277 = vmatpush1.xpose.msra.mxu0 0.0
    %1278 = vmatprep.subr.mxu0 0.0
    %1279 = vmatpush1.xpose.msra.mxu0 0.0
    %1280 = vmatprep.subr.mxu0 0.0
    %1281 = vmatpush1.xpose.msra.mxu0 %v1254
    %1282 = vmatprep.subr.mxu0 0.0
    %1283 = vmatpush1.xpose.msra.mxu0 %v1251
    %1284 = vmatprep.subr.mxu0 0.0
    %1285 = vmatpush1.xpose.msra.mxu0 %v1248
    %1286 = vmatprep.subr.mxu0 0.0
    %1287 = vmatpush1.xpose.msra.mxu0 %v1245
    %1288 = vmatprep.subr.mxu0 0.0
    %1289 = vmatpush2.xpose.msra.mxu0 0.0
    %1290 = vmatprep.subr.mxu0 0.0
    %1291 = vmatpush2.xpose.msra.mxu0 0.0
    %1292 = vmatprep.subr.mxu0 0.0
    %1293 = vmatpush2.xpose.msra.mxu0 0.0
    %1294 = vmatprep.subr.mxu0 0.0
    %1295 = vmatpush2.xpose.msra.mxu0 0.0
    %1296 = vmatprep.subr.mxu0 0.0
    %1297 = vmatpush2.xpose.msra.mxu0 0.0
    %1298 = vmatprep.subr.mxu0 0.0
    %1299 = vmatpush2.xpose.msra.mxu0 0.0
    %1300 = vmatprep.subr.mxu0 0.0
    %1301 = vmatpush2.xpose.msra.mxu0 0.0
    %1302 = vmatprep.subr.mxu0 0.0
    %1303 = vmatpush2.xpose.msra.mxu0 0.0
    %1304 = vmatprep.subr.mxu0 0.0
    %1305 = vmatpush2.xpose.msra.mxu0 0.0
    %1306 = vmatprep.subr.mxu0 0.0
    %1307 = vmatpush2.xpose.msra.mxu0 0.0
    %1308 = vmatprep.subr.mxu0 0.0
    %1309 = vmatpush2.xpose.msra.mxu0 0.0
    %1310 = vmatprep.subr.mxu0 0.0
    %1311 = vmatpush2.xpose.msra.mxu0 0.0
    %1312 = vmatprep.subr.mxu0 0.0
    %1313 = vmatpush2.xpose.msra.mxu0 0.0
    %1314 = vmatprep.subr.mxu0 0.0
    %1315 = vmatpush2.xpose.msra.mxu0 0.0
    %1316 = vmatprep.subr.mxu0 0.0
    %1317 = vmatpush2.xpose.msra.mxu0 0.0
    %1318 = vmatprep.subr.mxu0 0.0
    %1319 = vmatpush2.xpose.msra.mxu0 0.0
    %1320 = vmatprep.mubr.f32.mxu0 0.0
    %1321 = vmatmul.mubr.f32.gmra.mxu0 %v1233
    %v1322 = vpop.f32.mrf.mxu0
    %v1323 = vadd.f32 0.0, %v1322
    %v1324 = vpop.f32.mrf.mxu0
    %1325 = vmatprep.mubr.f32.mxu0 0.0
    %1326 = vmatmul.mubr.f32.gmra.mxu0 %v1236
    %v1327 = vpop.f32.mrf.mxu0
    %v1328 = vadd.f32 0.0, %v1327
    %v1329 = vpop.f32.mrf.mxu0
    %1330 = vmatprep.mubr.f32.mxu0 0.0
    %1331 = vmatmul.mubr.f32.gmra.mxu0 %v1239
    %v1332 = vpop.f32.mrf.mxu0
    %v1333 = vadd.f32 0.0, %v1332
    %v1334 = vpop.f32.mrf.mxu0
    %1335 = vmatprep.mubr.f32.mxu0 0.0
    %1336 = vmatmul.mubr.f32.gmra.mxu0 %v1242
    %v1337 = vpop.f32.mrf.mxu0
    %v1338 = vadd.f32 0.0, %v1337
    %v1339 = vpop.f32.mrf.mxu0
    %1340 = vdwg.mxu0
    %v1341 = vsel %vm906, %v1323, -inf
    %1342 = vmax.xlane.f32.xlu0 %v1341
    %v1343 = vpop.xlane.xlu0 %1342
    %v1344 = vsel %vm906, %v1328, -inf
    %1345 = vmax.xlane.f32.xlu0 %v1344
    %v1346 = vpop.xlane.xlu0 %1345
    %v1347 = vsel %vm906, %v1333, -inf
    %1348 = vmax.xlane.f32.xlu0 %v1347
    %v1349 = vpop.xlane.xlu0 %1348
    %v1350 = vsel %vm906, %v1338, -inf
    %1351 = vmax.xlane.f32.xlu0 %v1350
    %v1352 = vpop.xlane.xlu0 %1351
    %v1353 = vsub.f32 %v1323, %v1343
    %v1354 = vsub.f32 %v1328, %v1346
    %v1355 = vsub.f32 %v1333, %v1349
    %v1356 = vsub.f32 %v1338, %v1352
    %v1357 = vmul.f32 %v1353, 1.442695
    %v1358 = vpow.pop %v1357
    %v1359 = vmul.f32 %v1354, 1.442695
    %v1360 = vpow.pop %v1359
    %v1361 = vmul.f32 %v1355, 1.442695
    %v1362 = vpow.pop %v1361
    %v1363 = vmul.f32 %v1356, 1.442695
    %v1364 = vpow.pop %v1363
    %v1365 = vsel %vm906, %v1358, 0.0
    %1366 = vadd.xlane.f32.xlu0 %v1365
    %v1367 = vpop.xlane.xlu0 %1366
    %v1368 = vsel %vm906, %v1360, 0.0
    %1369 = vadd.xlane.f32.xlu0 %v1368
    %v1370 = vpop.xlane.xlu0 %1369
    %v1371 = vsel %vm906, %v1362, 0.0
    %1372 = vadd.xlane.f32.xlu0 %v1371
    %v1373 = vpop.xlane.xlu0 %1372
    %v1374 = vsel %vm906, %v1364, 0.0
    %1375 = vadd.xlane.f32.xlu0 %v1374
    %v1376 = vpop.xlane.xlu0 %1375
    %v1377 = vrcp.pop %v1367
    %v1378 = vrcp.pop %v1370
    %v1379 = vrcp.pop %v1373
    %v1380 = vrcp.pop %v1376
    %v1381 = vmul.f32 %v1358, %v1377
    %v1382 = vmul.f32 %v1360, %v1378
    %v1383 = vmul.f32 %v1362, %v1379
    %v1384 = vmul.f32 %v1364, %v1380
    %v1386 = vsel %vm906, %v1381, 0
    %v1389 = vsel %vm906, %v1382, 0
    %v1392 = vsel %vm906, %v1383, 0
    %v1395 = vsel %vm906, %v1384, 0
    %1397 = vmatprep.subr.mxu0 0.0
    %1398 = vmatpush1.msra.mxu0 0.0
    %1399 = vmatprep.subr.mxu0 0.0
    %1400 = vmatpush1.msra.mxu0 0.0
    %1401 = vmatprep.subr.mxu0 0.0
    %1402 = vmatpush1.msra.mxu0 0.0
    %1403 = vmatprep.subr.mxu0 0.0
    %1404 = vmatpush1.msra.mxu0 0.0
    %1405 = vmatprep.subr.mxu0 0.0
    %1406 = vmatpush1.msra.mxu0 0.0
    %1407 = vmatprep.subr.mxu0 0.0
    %1408 = vmatpush1.msra.mxu0 0.0
    %1409 = vmatprep.subr.mxu0 0.0
    %1410 = vmatpush1.msra.mxu0 0.0
    %1411 = vmatprep.subr.mxu0 0.0
    %1412 = vmatpush1.msra.mxu0 0.0
    %1413 = vmatprep.subr.mxu0 0.0
    %1414 = vmatpush1.msra.mxu0 0.0
    %1415 = vmatprep.subr.mxu0 0.0
    %1416 = vmatpush1.msra.mxu0 0.0
    %1417 = vmatprep.subr.mxu0 0.0
    %1418 = vmatpush1.msra.mxu0 0.0
    %1419 = vmatprep.subr.mxu0 0.0
    %1420 = vmatpush1.msra.mxu0 0.0
    %1421 = vmatprep.subr.mxu0 0.0
    %1422 = vmatpush1.msra.mxu0 %v745
    %1423 = vmatprep.subr.mxu0 0.0
    %1424 = vmatpush1.msra.mxu0 %v740
    %1425 = vmatprep.subr.mxu0 0.0
    %1426 = vmatpush1.msra.mxu0 %v735
    %1427 = vmatprep.subr.mxu0 0.0
    %1428 = vmatpush1.msra.mxu0 %v730
    %1429 = vmatprep.subr.mxu0 0.0
    %1430 = vmatpush2.msra.mxu0 0.0
    %1431 = vmatprep.subr.mxu0 0.0
    %1432 = vmatpush2.msra.mxu0 0.0
    %1433 = vmatprep.subr.mxu0 0.0
    %1434 = vmatpush2.msra.mxu0 0.0
    %1435 = vmatprep.subr.mxu0 0.0
    %1436 = vmatpush2.msra.mxu0 0.0
    %1437 = vmatprep.subr.mxu0 0.0
    %1438 = vmatpush2.msra.mxu0 0.0
    %1439 = vmatprep.subr.mxu0 0.0
    %1440 = vmatpush2.msra.mxu0 0.0
    %1441 = vmatprep.subr.mxu0 0.0
    %1442 = vmatpush2.msra.mxu0 0.0
    %1443 = vmatprep.subr.mxu0 0.0
    %1444 = vmatpush2.msra.mxu0 0.0
    %1445 = vmatprep.subr.mxu0 0.0
    %1446 = vmatpush2.msra.mxu0 0.0
    %1447 = vmatprep.subr.mxu0 0.0
    %1448 = vmatpush2.msra.mxu0 0.0
    %1449 = vmatprep.subr.mxu0 0.0
    %1450 = vmatpush2.msra.mxu0 0.0
    %1451 = vmatprep.subr.mxu0 0.0
    %1452 = vmatpush2.msra.mxu0 0.0
    %1453 = vmatprep.subr.mxu0 0.0
    %1454 = vmatpush2.msra.mxu0 0.0
    %1455 = vmatprep.subr.mxu0 0.0
    %1456 = vmatpush2.msra.mxu0 0.0
    %1457 = vmatprep.subr.mxu0 0.0
    %1458 = vmatpush2.msra.mxu0 0.0
    %1459 = vmatprep.subr.mxu0 0.0
    %1460 = vmatpush2.msra.mxu0 0.0
    %1461 = vmatprep.mubr.f32.mxu0 0.0
    %1462 = vmatmul.mubr.f32.gmra.mxu0 %v1386
    %v1463 = vpop.f32.mrf.mxu0
    %v1464 = vadd.f32 0.0, %v1463
    %v1465 = vpop.f32.mrf.mxu0
    %1466 = vmatprep.mubr.f32.mxu0 0.0
    %1467 = vmatmul.mubr.f32.gmra.mxu0 %v1389
    %v1468 = vpop.f32.mrf.mxu0
    %v1469 = vadd.f32 0.0, %v1468
    %v1470 = vpop.f32.mrf.mxu0
    %1471 = vmatprep.mubr.f32.mxu0 0.0
    %1472 = vmatmul.mubr.f32.gmra.mxu0 %v1392
    %v1473 = vpop.f32.mrf.mxu0
    %v1474 = vadd.f32 0.0, %v1473
    %v1475 = vpop.f32.mrf.mxu0
    %1476 = vmatprep.mubr.f32.mxu0 0.0
    %1477 = vmatmul.mubr.f32.gmra.mxu0 %v1395
    %v1478 = vpop.f32.mrf.mxu0
    %v1479 = vadd.f32 0.0, %v1478
    %v1480 = vpop.f32.mrf.mxu0
    %1481 = vdwg.mxu0
    %s1482 = scalar_lea.vmem %s7, 16
    %v1483 = vld [vmem:[%s1482] sm:$0xff]
    %v1484 = vld [vmem:[%s1482 + $0x8] sm:$0xff]
    %v1486 = vsel %vm62, %v1464, 0
    %v1489 = vsel %vm62, %v1469, 0
    %v1492 = vsel %vm62, %v1474, 0
    %v1495 = vsel %vm62, %v1479, 0
    %1497 = vmatprep.subr.mxu0 0.0
    %1498 = vmatpush1.msra.mxu0 0.0
    %1499 = vmatprep.subr.mxu0 0.0
    %1500 = vmatpush1.msra.mxu0 0.0
    %1501 = vmatprep.subr.mxu0 0.0
    %1502 = vmatpush1.msra.mxu0 0.0
    %1503 = vmatprep.subr.mxu0 0.0
    %1504 = vmatpush1.msra.mxu0 0.0
    %1505 = vmatprep.subr.mxu0 0.0
    %1506 = vmatpush1.msra.mxu0 0.0
    %1507 = vmatprep.subr.mxu0 0.0
    %1508 = vmatpush1.msra.mxu0 0.0
    %1509 = vmatprep.subr.mxu0 0.0
    %1510 = vmatpush1.msra.mxu0 0.0
    %1511 = vmatprep.subr.mxu0 0.0
    %1512 = vmatpush1.msra.mxu0 0.0
    %1513 = vmatprep.subr.mxu0 0.0
    %1514 = vmatpush1.msra.mxu0 0.0
    %1515 = vmatprep.subr.mxu0 0.0
    %1516 = vmatpush1.msra.mxu0 0.0
    %1517 = vmatprep.subr.mxu0 0.0
    %1518 = vmatpush1.msra.mxu0 0.0
    %1519 = vmatprep.subr.mxu0 0.0
    %1520 = vmatpush1.msra.mxu0 0.0
    %1521 = vmatprep.subr.mxu0 0.0
    %1522 = vmatpush1.msra.mxu0 0.0
    %1523 = vmatprep.subr.mxu0 0.0
    %1524 = vmatpush1.msra.mxu0 0.0
    %1525 = vmatprep.subr.mxu0 0.0
    %1526 = vmatpush1.msra.mxu0 %v1484
    %1527 = vmatprep.subr.mxu0 0.0
    %1528 = vmatpush1.msra.mxu0 %v1483
    %1529 = vmatprep.subr.mxu0 0.0
    %1530 = vmatpush2.msra.mxu0 0.0
    %1531 = vmatprep.subr.mxu0 0.0
    %1532 = vmatpush2.msra.mxu0 0.0
    %1533 = vmatprep.subr.mxu0 0.0
    %1534 = vmatpush2.msra.mxu0 0.0
    %1535 = vmatprep.subr.mxu0 0.0
    %1536 = vmatpush2.msra.mxu0 0.0
    %1537 = vmatprep.subr.mxu0 0.0
    %1538 = vmatpush2.msra.mxu0 0.0
    %1539 = vmatprep.subr.mxu0 0.0
    %1540 = vmatpush2.msra.mxu0 0.0
    %1541 = vmatprep.subr.mxu0 0.0
    %1542 = vmatpush2.msra.mxu0 0.0
    %1543 = vmatprep.subr.mxu0 0.0
    %1544 = vmatpush2.msra.mxu0 0.0
    %1545 = vmatprep.subr.mxu0 0.0
    %1546 = vmatpush2.msra.mxu0 0.0
    %1547 = vmatprep.subr.mxu0 0.0
    %1548 = vmatpush2.msra.mxu0 0.0
    %1549 = vmatprep.subr.mxu0 0.0
    %1550 = vmatpush2.msra.mxu0 0.0
    %1551 = vmatprep.subr.mxu0 0.0
    %1552 = vmatpush2.msra.mxu0 0.0
    %1553 = vmatprep.subr.mxu0 0.0
    %1554 = vmatpush2.msra.mxu0 0.0
    %1555 = vmatprep.subr.mxu0 0.0
    %1556 = vmatpush2.msra.mxu0 0.0
    %1557 = vmatprep.subr.mxu0 0.0
    %1558 = vmatpush2.msra.mxu0 0.0
    %1559 = vmatprep.subr.mxu0 0.0
    %1560 = vmatpush2.msra.mxu0 0.0
    %1561 = vmatprep.mubr.f32.mxu0 0.0
    %1562 = vmatmul.mubr.f32.gmra.mxu0 %v1486
    %v1563 = vpop.f32.mrf.mxu0
    %v1564 = vadd.f32 0.0, %v1563
    %v1565 = vpop.f32.mrf.mxu0
    %1566 = vmatprep.mubr.f32.mxu0 0.0
    %1567 = vmatmul.mubr.f32.gmra.mxu0 %v1489
    %v1568 = vpop.f32.mrf.mxu0
    %v1569 = vadd.f32 0.0, %v1568
    %v1570 = vpop.f32.mrf.mxu0
    %1571 = vmatprep.mubr.f32.mxu0 0.0
    %1572 = vmatmul.mubr.f32.gmra.mxu0 %v1492
    %v1573 = vpop.f32.mrf.mxu0
    %v1574 = vadd.f32 0.0, %v1573
    %v1575 = vpop.f32.mrf.mxu0
    %1576 = vmatprep.mubr.f32.mxu0 0.0
    %1577 = vmatmul.mubr.f32.gmra.mxu0 %v1495
    %v1578 = vpop.f32.mrf.mxu0
    %v1579 = vadd.f32 0.0, %v1578
    %v1580 = vpop.f32.mrf.mxu0
    %1581 = vdwg.mxu0
    %v1583 = vsel %vm62, %v1030, 0
    %v1586 = vsel %vm62, %v1035, 0
    %v1589 = vsel %vm62, %v1040, 0
    %v1592 = vsel %vm62, %v1045, 0
    %1594 = vmatprep.subr.mxu0 0.0
    %1595 = vmatpush1.msra.mxu0 0.0
    %1596 = vmatprep.subr.mxu0 0.0
    %1597 = vmatpush1.msra.mxu0 0.0
    %1598 = vmatprep.subr.mxu0 0.0
    %1599 = vmatpush1.msra.mxu0 0.0
    %1600 = vmatprep.subr.mxu0 0.0
    %1601 = vmatpush1.msra.mxu0 0.0
    %1602 = vmatprep.subr.mxu0 0.0
    %1603 = vmatpush1.msra.mxu0 0.0
    %1604 = vmatprep.subr.mxu0 0.0
    %1605 = vmatpush1.msra.mxu0 0.0
    %1606 = vmatprep.subr.mxu0 0.0
    %1607 = vmatpush1.msra.mxu0 0.0
    %1608 = vmatprep.subr.mxu0 0.0
    %1609 = vmatpush1.msra.mxu0 0.0
    %1610 = vmatprep.subr.mxu0 0.0
    %1611 = vmatpush1.msra.mxu0 0.0
    %1612 = vmatprep.subr.mxu0 0.0
    %1613 = vmatpush1.msra.mxu0 0.0
    %1614 = vmatprep.subr.mxu0 0.0
    %1615 = vmatpush1.msra.mxu0 0.0
    %1616 = vmatprep.subr.mxu0 0.0
    %1617 = vmatpush1.msra.mxu0 0.0
    %1618 = vmatprep.subr.mxu0 0.0
    %1619 = vmatpush1.msra.mxu0 0.0
    %1620 = vmatprep.subr.mxu0 0.0
    %1621 = vmatpush1.msra.mxu0 0.0
    %1622 = vmatprep.subr.mxu0 0.0
    %1623 = vmatpush1.msra.mxu0 %v1049
    %1624 = vmatprep.subr.mxu0 0.0
    %1625 = vmatpush1.msra.mxu0 %v1048
    %1626 = vmatprep.subr.mxu0 0.0
    %1627 = vmatpush2.msra.mxu0 0.0
    %1628 = vmatprep.subr.mxu0 0.0
    %1629 = vmatpush2.msra.mxu0 0.0
    %1630 = vmatprep.subr.mxu0 0.0
    %1631 = vmatpush2.msra.mxu0 0.0
    %1632 = vmatprep.subr.mxu0 0.0
    %1633 = vmatpush2.msra.mxu0 0.0
    %1634 = vmatprep.subr.mxu0 0.0
    %1635 = vmatpush2.msra.mxu0 0.0
    %1636 = vmatprep.subr.mxu0 0.0
    %1637 = vmatpush2.msra.mxu0 0.0
    %1638 = vmatprep.subr.mxu0 0.0
    %1639 = vmatpush2.msra.mxu0 0.0
    %1640 = vmatprep.subr.mxu0 0.0
    %1641 = vmatpush2.msra.mxu0 0.0
    %1642 = vmatprep.subr.mxu0 0.0
    %1643 = vmatpush2.msra.mxu0 0.0
    %1644 = vmatprep.subr.mxu0 0.0
    %1645 = vmatpush2.msra.mxu0 0.0
    %1646 = vmatprep.subr.mxu0 0.0
    %1647 = vmatpush2.msra.mxu0 0.0
    %1648 = vmatprep.subr.mxu0 0.0
    %1649 = vmatpush2.msra.mxu0 0.0
    %1650 = vmatprep.subr.mxu0 0.0
    %1651 = vmatpush2.msra.mxu0 0.0
    %1652 = vmatprep.subr.mxu0 0.0
    %1653 = vmatpush2.msra.mxu0 0.0
    %1654 = vmatprep.subr.mxu0 0.0
    %1655 = vmatpush2.msra.mxu0 0.0
    %1656 = vmatprep.subr.mxu0 0.0
    %1657 = vmatpush2.msra.mxu0 0.0
    %1658 = vmatprep.mubr.f32.mxu0 0.0
    %1659 = vmatmul.mubr.f32.gmra.mxu0 %v1583
    %v1660 = vpop.f32.mrf.mxu0
    %v1661 = vadd.f32 %v1564, %v1660
    %v1662 = vpop.f32.mrf.mxu0
    %1663 = vmatprep.mubr.f32.mxu0 0.0
    %1664 = vmatmul.mubr.f32.gmra.mxu0 %v1586
    %v1665 = vpop.f32.mrf.mxu0
    %v1666 = vadd.f32 %v1569, %v1665
    %v1667 = vpop.f32.mrf.mxu0
    %1668 = vmatprep.mubr.f32.mxu0 0.0
    %1669 = vmatmul.mubr.f32.gmra.mxu0 %v1589
    %v1670 = vpop.f32.mrf.mxu0
    %v1671 = vadd.f32 %v1574, %v1670
    %v1672 = vpop.f32.mrf.mxu0
    %1673 = vmatprep.mubr.f32.mxu0 0.0
    %1674 = vmatmul.mubr.f32.gmra.mxu0 %v1592
    %v1675 = vpop.f32.mrf.mxu0
    %v1676 = vadd.f32 %v1579, %v1675
    %v1677 = vpop.f32.mrf.mxu0
    %1678 = vdwg.mxu0
    %v1679 = vadd.f32 %v730, 3.0
    %v1680 = vadd.f32 %v735, 3.0
    %v1681 = vmax.f32 %v1679, 0.0
    %v1682 = vmax.f32 %v1680, 0.0
    %v1683 = vmin.f32 %v1681, 6.0
    %v1684 = vmin.f32 %v1682, 6.0
    %v1685 = vmul.f32 %v730, %v1683
    %v1686 = vmul.f32 %v735, %v1684
    %v1687 = vmul.f32 %v1685, 0.16666667
    %v1688 = vmul.f32 %v1686, 0.16666667
    %v1690 = vsel %vm62, %v1687, 0
    %v1693 = vsel %vm62, %v1688, 0
    %1695 = vmatprep.subr.mxu0 0.0
    %1696 = vmatpush1.msra.mxu0 0.0
    %1697 = vmatprep.subr.mxu0 0.0
    %1698 = vmatpush1.msra.mxu0 0.0
    %1699 = vmatprep.subr.mxu0 0.0
    %1700 = vmatpush1.msra.mxu0 0.0
    %1701 = vmatprep.subr.mxu0 0.0
    %1702 = vmatpush1.msra.mxu0 0.0
    %1703 = vmatprep.subr.mxu0 0.0
    %1704 = vmatpush1.msra.mxu0 0.0
    %1705 = vmatprep.subr.mxu0 0.0
    %1706 = vmatpush1.msra.mxu0 0.0
    %1707 = vmatprep.subr.mxu0 0.0
    %1708 = vmatpush1.msra.mxu0 0.0
    %1709 = vmatprep.subr.mxu0 0.0
    %1710 = vmatpush1.msra.mxu0 0.0
    %1711 = vmatprep.subr.mxu0 0.0
    %1712 = vmatpush1.msra.mxu0 0.0
    %1713 = vmatprep.subr.mxu0 0.0
    %1714 = vmatpush1.msra.mxu0 0.0
    %1715 = vmatprep.subr.mxu0 0.0
    %1716 = vmatpush1.msra.mxu0 0.0
    %1717 = vmatprep.subr.mxu0 0.0
    %1718 = vmatpush1.msra.mxu0 0.0
    %1719 = vmatprep.subr.mxu0 0.0
    %1720 = vmatpush1.msra.mxu0 0.0
    %1721 = vmatprep.subr.mxu0 0.0
    %1722 = vmatpush1.msra.mxu0 0.0
    %1723 = vmatprep.subr.mxu0 %v771
    %1724 = vmatpush1.msra.mxu0 %v770
    %1725 = vmatprep.subr.mxu0 %v769
    %1726 = vmatpush1.msra.mxu0 %v768
    %1727 = vmatprep.subr.mxu0 0.0
    %1728 = vmatpush2.msra.mxu0 0.0
    %1729 = vmatprep.subr.mxu0 0.0
    %1730 = vmatpush2.msra.mxu0 0.0
    %1731 = vmatprep.subr.mxu0 0.0
    %1732 = vmatpush2.msra.mxu0 0.0
    %1733 = vmatprep.subr.mxu0 0.0
    %1734 = vmatpush2.msra.mxu0 0.0
    %1735 = vmatprep.subr.mxu0 0.0
    %1736 = vmatpush2.msra.mxu0 0.0
    %1737 = vmatprep.subr.mxu0 0.0
    %1738 = vmatpush2.msra.mxu0 0.0
    %1739 = vmatprep.subr.mxu0 0.0
    %1740 = vmatpush2.msra.mxu0 0.0
    %1741 = vmatprep.subr.mxu0 0.0
    %1742 = vmatpush2.msra.mxu0 0.0
    %1743 = vmatprep.subr.mxu0 0.0
    %1744 = vmatpush2.msra.mxu0 0.0
    %1745 = vmatprep.subr.mxu0 0.0
    %1746 = vmatpush2.msra.mxu0 0.0
    %1747 = vmatprep.subr.mxu0 0.0
    %1748 = vmatpush2.msra.mxu0 0.0
    %1749 = vmatprep.subr.mxu0 0.0
    %1750 = vmatpush2.msra.mxu0 0.0
    %1751 = vmatprep.subr.mxu0 0.0
    %1752 = vmatpush2.msra.mxu0 0.0
    %1753 = vmatprep.subr.mxu0 0.0
    %1754 = vmatpush2.msra.mxu0 0.0
    %1755 = vmatprep.subr.mxu0 0.0
    %1756 = vmatpush2.msra.mxu0 0.0
    %1757 = vmatprep.subr.mxu0 0.0
    %1758 = vmatpush2.msra.mxu0 0.0
    %1759 = vmatprep.mubr.f32.mxu0 0.0
    %1760 = vmatmul.mubr.f32.gmra.mxu0 %v1690
    %v1761 = vpop.f32.mrf.mxu0
    %v1762 = vadd.f32 0.0, %v1761
    %v1763 = vpop.f32.mrf.mxu0
    %v1764 = vadd.f32 0.0, %v1763
    %1765 = vmatprep.mubr.f32.mxu0 0.0
    %1766 = vmatmul.mubr.f32.gmra.mxu0 %v1693
    %v1767 = vpop.f32.mrf.mxu0
    %v1768 = vadd.f32 0.0, %v1767
    %v1769 = vpop.f32.mrf.mxu0
    %v1770 = vadd.f32 0.0, %v1769
    %1771 = vdwg.mxu0
    %s1772 = scalar_lea.vmem %s8, 32
    %v1773 = vld [vmem:[%s1772] sm:$0xff]
    %v1774 = vld [vmem:[%s1772 + $0x8] sm:$0xff]
    %v1775 = vld [vmem:[%s1772 + $0x10] sm:$0xff]
    %v1776 = vld [vmem:[%s1772 + $0x18] sm:$0xff]
    %v1777 = vmul.f32 %v1762, %v1773
    %v1778 = vmul.f32 %v1764, %v1774
    %v1779 = vmul.f32 %v1768, %v1775
    %v1780 = vmul.f32 %v1770, %v1776
    %v1782 = vsel %vm62, %v1778, 0
    %v1785 = vsel %vm62, %v1780, 0
    %1787 = vmatprep.subr.mxu0 0.0
    %1788 = vmatpush1.msra.mxu0 %v787
    %1789 = vmatprep.subr.mxu0 0.0
    %1790 = vmatpush1.msra.mxu0 %v786
    %1791 = vmatprep.subr.mxu0 0.0
    %1792 = vmatpush1.msra.mxu0 %v785
    %1793 = vmatprep.subr.mxu0 0.0
    %1794 = vmatpush1.msra.mxu0 %v784
    %1795 = vmatprep.subr.mxu0 0.0
    %1796 = vmatpush1.msra.mxu0 %v783
    %1797 = vmatprep.subr.mxu0 0.0
    %1798 = vmatpush1.msra.mxu0 %v782
    %1799 = vmatprep.subr.mxu0 0.0
    %1800 = vmatpush1.msra.mxu0 %v781
    %1801 = vmatprep.subr.mxu0 0.0
    %1802 = vmatpush1.msra.mxu0 %v780
    %1803 = vmatprep.subr.mxu0 0.0
    %1804 = vmatpush1.msra.mxu0 %v779
    %1805 = vmatprep.subr.mxu0 0.0
    %1806 = vmatpush1.msra.mxu0 %v778
    %1807 = vmatprep.subr.mxu0 0.0
    %1808 = vmatpush1.msra.mxu0 %v777
    %1809 = vmatprep.subr.mxu0 0.0
    %1810 = vmatpush1.msra.mxu0 %v776
    %1811 = vmatprep.subr.mxu0 0.0
    %1812 = vmatpush1.msra.mxu0 %v775
    %1813 = vmatprep.subr.mxu0 0.0
    %1814 = vmatpush1.msra.mxu0 %v774
    %1815 = vmatprep.subr.mxu0 0.0
    %1816 = vmatpush1.msra.mxu0 %v773
    %1817 = vmatprep.subr.mxu0 0.0
    %1818 = vmatpush1.msra.mxu0 %v772
    %1819 = vmatprep.subr.mxu0 0.0
    %1820 = vmatpush2.msra.mxu0 0.0
    %1821 = vmatprep.subr.mxu0 0.0
    %1822 = vmatpush2.msra.mxu0 0.0
    %1823 = vmatprep.subr.mxu0 0.0
    %1824 = vmatpush2.msra.mxu0 0.0
    %1825 = vmatprep.subr.mxu0 0.0
    %1826 = vmatpush2.msra.mxu0 0.0
    %1827 = vmatprep.subr.mxu0 0.0
    %1828 = vmatpush2.msra.mxu0 0.0
    %1829 = vmatprep.subr.mxu0 0.0
    %1830 = vmatpush2.msra.mxu0 0.0
    %1831 = vmatprep.subr.mxu0 0.0
    %1832 = vmatpush2.msra.mxu0 0.0
    %1833 = vmatprep.subr.mxu0 0.0
    %1834 = vmatpush2.msra.mxu0 0.0
    %1835 = vmatprep.subr.mxu0 0.0
    %1836 = vmatpush2.msra.mxu0 0.0
    %1837 = vmatprep.subr.mxu0 0.0
    %1838 = vmatpush2.msra.mxu0 0.0
    %1839 = vmatprep.subr.mxu0 0.0
    %1840 = vmatpush2.msra.mxu0 0.0
    %1841 = vmatprep.subr.mxu0 0.0
    %1842 = vmatpush2.msra.mxu0 0.0
    %1843 = vmatprep.subr.mxu0 0.0
    %1844 = vmatpush2.msra.mxu0 0.0
    %1845 = vmatprep.subr.mxu0 0.0
    %1846 = vmatpush2.msra.mxu0 0.0
    %1847 = vmatprep.subr.mxu0 0.0
    %1848 = vmatpush2.msra.mxu0 %v789
    %1849 = vmatprep.subr.mxu0 0.0
    %1850 = vmatpush2.msra.mxu0 %v788
    %1851 = vmatprep.mubr.f32.mxu0 %v1782
    %1852 = vmatmul.mubr.f32.gmra.mxu0 %v1777
    %v1853 = vpop.f32.mrf.mxu0
    %v1854 = vadd.f32 0.0, %v1853
    %v1855 = vpop.f32.mrf.mxu0
    %1856 = vmatprep.mubr.f32.mxu0 %v1785
    %1857 = vmatmul.mubr.f32.gmra.mxu0 %v1779
    %v1858 = vpop.f32.mrf.mxu0
    %v1859 = vadd.f32 0.0, %v1858
    %v1860 = vpop.f32.mrf.mxu0
    %1861 = vdwg.mxu0
    %v1862 = vadd.f32 %v1661, %v1224
    %v1863 = vadd.f32 %v1666, %v1229
    %v1864 = vadd.f32 %v1671, %v1854
    %v1865 = vadd.f32 %v1676, %v1859
    %1866 = vxpose.xlu0.b32.start [1/16] %v1862, 128
    %1867 = vxpose.xlu0.b32.cont [2/16] %v1863, 128
    %1868 = vxpose.xlu0.b32.cont [3/16] %v1864, 128
    %1869 = vxpose.xlu0.b32.cont [4/16] %v1865, 128
    %1870 = vxpose.xlu0.b32.cont [5/16] 0.0, 128
    %1871 = vxpose.xlu0.b32.cont [6/16] 0.0, 128
    %1872 = vxpose.xlu0.b32.cont [7/16] 0.0, 128
    %1873 = vxpose.xlu0.b32.cont [8/16] 0.0, 128
    %1874 = vxpose.xlu0.b32.cont [9/16] 0.0, 128
    %1875 = vxpose.xlu0.b32.cont [10/16] 0.0, 128
    %1876 = vxpose.xlu0.b32.cont [11/16] 0.0, 128
    %1877 = vxpose.xlu0.b32.cont [12/16] 0.0, 128
    %1878 = vxpose.xlu0.b32.cont [13/16] 0.0, 128
    %1879 = vxpose.xlu0.b32.cont [14/16] 0.0, 128
    %1880 = vxpose.xlu0.b32.cont [15/16] 0.0, 128
    %1881 = vxpose.xlu0.b32.end [16/16] 0.0, 128
    %v1882 = vpop.trf.xlu0
    %v1883 = vpop.trf.xlu0
    %v1884 = vpop.trf.xlu0
    %v1885 = vpop.trf.xlu0
    %v1886 = vpop.trf.xlu0
    %v1887 = vpop.trf.xlu0
    %v1888 = vpop.trf.xlu0
    %v1889 = vpop.trf.xlu0
    %v1890 = vpop.trf.xlu0
    %v1891 = vpop.trf.xlu0
    %v1892 = vpop.trf.xlu0
    %v1893 = vpop.trf.xlu0
    %v1894 = vpop.trf.xlu0
    %v1895 = vpop.trf.xlu0
    %v1896 = vpop.trf.xlu0
    %v1897 = vpop.trf.xlu0
    %v1899 = vsel %vm906, %v1882, 0
    %v1902 = vsel %vm906, %v1883, 0
    %1904 = vmatprep.subr.mxu0 0.0
    %1905 = vmatpush1.msra.mxu0 0.0
    %1906 = vmatprep.subr.mxu0 0.0
    %1907 = vmatpush1.msra.mxu0 0.0
    %1908 = vmatprep.subr.mxu0 0.0
    %1909 = vmatpush1.msra.mxu0 0.0
    %1910 = vmatprep.subr.mxu0 0.0
    %1911 = vmatpush1.msra.mxu0 0.0
    %1912 = vmatprep.subr.mxu0 0.0
    %1913 = vmatpush1.msra.mxu0 0.0
    %1914 = vmatprep.subr.mxu0 0.0
    %1915 = vmatpush1.msra.mxu0 0.0
    %1916 = vmatprep.subr.mxu0 0.0
    %1917 = vmatpush1.msra.mxu0 0.0
    %1918 = vmatprep.subr.mxu0 0.0
    %1919 = vmatpush1.msra.mxu0 0.0
    %1920 = vmatprep.subr.mxu0 0.0
    %1921 = vmatpush1.msra.mxu0 0.0
    %1922 = vmatprep.subr.mxu0 0.0
    %1923 = vmatpush1.msra.mxu0 0.0
    %1924 = vmatprep.subr.mxu0 0.0
    %1925 = vmatpush1.msra.mxu0 0.0
    %1926 = vmatprep.subr.mxu0 0.0
    %1927 = vmatpush1.msra.mxu0 0.0
    %1928 = vmatprep.subr.mxu0 0.0
    %1929 = vmatpush1.msra.mxu0 %v793
    %1930 = vmatprep.subr.mxu0 0.0
    %1931 = vmatpush1.msra.mxu0 %v792
    %1932 = vmatprep.subr.mxu0 0.0
    %1933 = vmatpush1.msra.mxu0 %v791
    %1934 = vmatprep.subr.mxu0 0.0
    %1935 = vmatpush1.msra.mxu0 %v790
    %1936 = vmatprep.subr.mxu0 0.0
    %1937 = vmatpush2.msra.mxu0 0.0
    %1938 = vmatprep.subr.mxu0 0.0
    %1939 = vmatpush2.msra.mxu0 0.0
    %1940 = vmatprep.subr.mxu0 0.0
    %1941 = vmatpush2.msra.mxu0 0.0
    %1942 = vmatprep.subr.mxu0 0.0
    %1943 = vmatpush2.msra.mxu0 0.0
    %1944 = vmatprep.subr.mxu0 0.0
    %1945 = vmatpush2.msra.mxu0 0.0
    %1946 = vmatprep.subr.mxu0 0.0
    %1947 = vmatpush2.msra.mxu0 0.0
    %1948 = vmatprep.subr.mxu0 0.0
    %1949 = vmatpush2.msra.mxu0 0.0
    %1950 = vmatprep.subr.mxu0 0.0
    %1951 = vmatpush2.msra.mxu0 0.0
    %1952 = vmatprep.subr.mxu0 0.0
    %1953 = vmatpush2.msra.mxu0 0.0
    %1954 = vmatprep.subr.mxu0 0.0
    %1955 = vmatpush2.msra.mxu0 0.0
    %1956 = vmatprep.subr.mxu0 0.0
    %1957 = vmatpush2.msra.mxu0 0.0
    %1958 = vmatprep.subr.mxu0 0.0
    %1959 = vmatpush2.msra.mxu0 0.0
    %1960 = vmatprep.subr.mxu0 0.0
    %1961 = vmatpush2.msra.mxu0 0.0
    %1962 = vmatprep.subr.mxu0 0.0
    %1963 = vmatpush2.msra.mxu0 0.0
    %1964 = vmatprep.subr.mxu0 0.0
    %1965 = vmatpush2.msra.mxu0 0.0
    %1966 = vmatprep.subr.mxu0 0.0
    %1967 = vmatpush2.msra.mxu0 0.0
    %1968 = vmatprep.mubr.f32.mxu0 0.0
    %1969 = vmatmul.mubr.f32.gmra.mxu0 %v1899
    %v1970 = vpop.f32.mrf.mxu0
    %v1971 = vadd.f32 %v794, %v1970
    %v1972 = vpop.f32.mrf.mxu0
    %1973 = vmatprep.mubr.f32.mxu0 0.0
    %1974 = vmatmul.mubr.f32.gmra.mxu0 %v1902
    %v1975 = vpop.f32.mrf.mxu0
    %v1976 = vadd.f32 %v795, %v1975
    %v1977 = vpop.f32.mrf.mxu0
    %1978 = vdwg.mxu0
    %1979 = vst.msk [vmem:[#allocation2] sm:$0xff] %vm62, %v1971
    %1980 = vst.msk [vmem:[#allocation2 + $0x8] sm:$0xff] %vm62, %v1976
    %v1982 = vsel %vm796, %v174, 0
    %v1985 = vsel %vm796, %v179, 0
    %v1988 = vsel %vm796, %v184, 0
    %v1991 = vsel %vm796, %v189, 0
    %v1994 = vsel %vm796, %v288, 0
    %v1997 = vsel %vm796, %v293, 0
    %v2000 = vsel %vm796, %v298, 0
    %v2003 = vsel %vm796, %v303, 0
    %2005 = vmatprep.subr.mxu0 0.0
    %2006 = vmatpush1.xpose.msra.mxu0 0.0
    %2007 = vmatprep.subr.mxu0 0.0
    %2008 = vmatpush1.xpose.msra.mxu0 0.0
    %2009 = vmatprep.subr.mxu0 0.0
    %2010 = vmatpush1.xpose.msra.mxu0 0.0
    %2011 = vmatprep.subr.mxu0 0.0
    %2012 = vmatpush1.xpose.msra.mxu0 0.0
    %2013 = vmatprep.subr.mxu0 0.0
    %2014 = vmatpush1.xpose.msra.mxu0 0.0
    %2015 = vmatprep.subr.mxu0 0.0
    %2016 = vmatpush1.xpose.msra.mxu0 0.0
    %2017 = vmatprep.subr.mxu0 0.0
    %2018 = vmatpush1.xpose.msra.mxu0 0.0
    %2019 = vmatprep.subr.mxu0 0.0
    %2020 = vmatpush1.xpose.msra.mxu0 0.0
    %2021 = vmatprep.subr.mxu0 0.0
    %2022 = vmatpush1.xpose.msra.mxu0 0.0
    %2023 = vmatprep.subr.mxu0 0.0
    %2024 = vmatpush1.xpose.msra.mxu0 0.0
    %2025 = vmatprep.subr.mxu0 0.0
    %2026 = vmatpush1.xpose.msra.mxu0 0.0
    %2027 = vmatprep.subr.mxu0 0.0
    %2028 = vmatpush1.xpose.msra.mxu0 0.0
    %2029 = vmatprep.subr.mxu0 0.0
    %2030 = vmatpush1.xpose.msra.mxu0 %v2003
    %2031 = vmatprep.subr.mxu0 0.0
    %2032 = vmatpush1.xpose.msra.mxu0 %v2000
    %2033 = vmatprep.subr.mxu0 0.0
    %2034 = vmatpush1.xpose.msra.mxu0 %v1997
    %2035 = vmatprep.subr.mxu0 0.0
    %2036 = vmatpush1.xpose.msra.mxu0 %v1994
    %2037 = vmatprep.subr.mxu0 0.0
    %2038 = vmatpush2.xpose.msra.mxu0 0.0
    %2039 = vmatprep.subr.mxu0 0.0
    %2040 = vmatpush2.xpose.msra.mxu0 0.0
    %2041 = vmatprep.subr.mxu0 0.0
    %2042 = vmatpush2.xpose.msra.mxu0 0.0
    %2043 = vmatprep.subr.mxu0 0.0
    %2044 = vmatpush2.xpose.msra.mxu0 0.0
    %2045 = vmatprep.subr.mxu0 0.0
    %2046 = vmatpush2.xpose.msra.mxu0 0.0
    %2047 = vmatprep.subr.mxu0 0.0
    %2048 = vmatpush2.xpose.msra.mxu0 0.0
    %2049 = vmatprep.subr.mxu0 0.0
    %2050 = vmatpush2.xpose.msra.mxu0 0.0
    %2051 = vmatprep.subr.mxu0 0.0
    %2052 = vmatpush2.xpose.msra.mxu0 0.0
    %2053 = vmatprep.subr.mxu0 0.0
    %2054 = vmatpush2.xpose.msra.mxu0 0.0
    %2055 = vmatprep.subr.mxu0 0.0
    %2056 = vmatpush2.xpose.msra.mxu0 0.0
    %2057 = vmatprep.subr.mxu0 0.0
    %2058 = vmatpush2.xpose.msra.mxu0 0.0
    %2059 = vmatprep.subr.mxu0 0.0
    %2060 = vmatpush2.xpose.msra.mxu0 0.0
    %2061 = vmatprep.subr.mxu0 0.0
    %2062 = vmatpush2.xpose.msra.mxu0 0.0
    %2063 = vmatprep.subr.mxu0 0.0
    %2064 = vmatpush2.xpose.msra.mxu0 0.0
    %2065 = vmatprep.subr.mxu0 0.0
    %2066 = vmatpush2.xpose.msra.mxu0 0.0
    %2067 = vmatprep.subr.mxu0 0.0
    %2068 = vmatpush2.xpose.msra.mxu0 0.0
    %2069 = vmatprep.mubr.f32.mxu0 0.0
    %2070 = vmatmul.mubr.f32.gmra.mxu0 %v1982
    %v2071 = vpop.f32.mrf.mxu0
    %v2072 = vadd.f32 0.0, %v2071
    %v2073 = vpop.f32.mrf.mxu0
    %2074 = vmatprep.mubr.f32.mxu0 0.0
    %2075 = vmatmul.mubr.f32.gmra.mxu0 %v1985
    %v2076 = vpop.f32.mrf.mxu0
    %v2077 = vadd.f32 0.0, %v2076
    %v2078 = vpop.f32.mrf.mxu0
    %2079 = vmatprep.mubr.f32.mxu0 0.0
    %2080 = vmatmul.mubr.f32.gmra.mxu0 %v1988
    %v2081 = vpop.f32.mrf.mxu0
    %v2082 = vadd.f32 0.0, %v2081
    %v2083 = vpop.f32.mrf.mxu0
    %2084 = vmatprep.mubr.f32.mxu0 0.0
    %2085 = vmatmul.mubr.f32.gmra.mxu0 %v1991
    %v2086 = vpop.f32.mrf.mxu0
    %v2087 = vadd.f32 0.0, %v2086
    %v2088 = vpop.f32.mrf.mxu0
    %2089 = vdwg.mxu0
    %v2090 = vsel %vm906, %v2072, -inf
    %2091 = vmax.xlane.f32.xlu0 %v2090
    %v2092 = vpop.xlane.xlu0 %2091
    %v2093 = vsel %vm906, %v2077, -inf
    %2094 = vmax.xlane.f32.xlu0 %v2093
    %v2095 = vpop.xlane.xlu0 %2094
    %v2096 = vsel %vm906, %v2082, -inf
    %2097 = vmax.xlane.f32.xlu0 %v2096
    %v2098 = vpop.xlane.xlu0 %2097
    %v2099 = vsel %vm906, %v2087, -inf
    %2100 = vmax.xlane.f32.xlu0 %v2099
    %v2101 = vpop.xlane.xlu0 %2100
    %v2102 = vsub.f32 %v2072, %v2092
    %v2103 = vsub.f32 %v2077, %v2095
    %v2104 = vsub.f32 %v2082, %v2098
    %v2105 = vsub.f32 %v2087, %v2101
    %v2106 = vmul.f32 %v2102, 1.442695
    %v2107 = vpow.pop %v2106
    %v2108 = vmul.f32 %v2103, 1.442695
    %v2109 = vpow.pop %v2108
    %v2110 = vmul.f32 %v2104, 1.442695
    %v2111 = vpow.pop %v2110
    %v2112 = vmul.f32 %v2105, 1.442695
    %v2113 = vpow.pop %v2112
    %v2114 = vsel %vm906, %v2107, 0.0
    %2115 = vadd.xlane.f32.xlu0 %v2114
    %v2116 = vpop.xlane.xlu0 %2115
    %v2117 = vsel %vm906, %v2109, 0.0
    %2118 = vadd.xlane.f32.xlu0 %v2117
    %v2119 = vpop.xlane.xlu0 %2118
    %v2120 = vsel %vm906, %v2111, 0.0
    %2121 = vadd.xlane.f32.xlu0 %v2120
    %v2122 = vpop.xlane.xlu0 %2121
    %v2123 = vsel %vm906, %v2113, 0.0
    %2124 = vadd.xlane.f32.xlu0 %v2123
    %v2125 = vpop.xlane.xlu0 %2124
    %v2126 = vrcp.pop %v2116
    %v2127 = vrcp.pop %v2119
    %v2128 = vrcp.pop %v2122
    %v2129 = vrcp.pop %v2125
    %v2130 = vmul.f32 %v2107, %v2126
    %v2131 = vmul.f32 %v2109, %v2127
    %v2132 = vmul.f32 %v2111, %v2128
    %v2133 = vmul.f32 %v2113, %v2129
    %v2135 = vsel %vm906, %v2130, 0
    %v2138 = vsel %vm906, %v2131, 0
    %v2141 = vsel %vm906, %v2132, 0
    %v2144 = vsel %vm906, %v2133, 0
    %2146 = vmatprep.subr.mxu0 0.0
    %2147 = vmatpush1.msra.mxu0 0.0
    %2148 = vmatprep.subr.mxu0 0.0
    %2149 = vmatpush1.msra.mxu0 0.0
    %2150 = vmatprep.subr.mxu0 0.0
    %2151 = vmatpush1.msra.mxu0 0.0
    %2152 = vmatprep.subr.mxu0 0.0
    %2153 = vmatpush1.msra.mxu0 0.0
    %2154 = vmatprep.subr.mxu0 0.0
    %2155 = vmatpush1.msra.mxu0 0.0
    %2156 = vmatprep.subr.mxu0 0.0
    %2157 = vmatpush1.msra.mxu0 0.0
    %2158 = vmatprep.subr.mxu0 0.0
    %2159 = vmatpush1.msra.mxu0 0.0
    %2160 = vmatprep.subr.mxu0 0.0
    %2161 = vmatpush1.msra.mxu0 0.0
    %2162 = vmatprep.subr.mxu0 0.0
    %2163 = vmatpush1.msra.mxu0 0.0
    %2164 = vmatprep.subr.mxu0 0.0
    %2165 = vmatpush1.msra.mxu0 0.0
    %2166 = vmatprep.subr.mxu0 0.0
    %2167 = vmatpush1.msra.mxu0 0.0
    %2168 = vmatprep.subr.mxu0 0.0
    %2169 = vmatpush1.msra.mxu0 0.0
    %2170 = vmatprep.subr.mxu0 0.0
    %2171 = vmatpush1.msra.mxu0 %v417
    %2172 = vmatprep.subr.mxu0 0.0
    %2173 = vmatpush1.msra.mxu0 %v412
    %2174 = vmatprep.subr.mxu0 0.0
    %2175 = vmatpush1.msra.mxu0 %v407
    %2176 = vmatprep.subr.mxu0 0.0
    %2177 = vmatpush1.msra.mxu0 %v402
    %2178 = vmatprep.subr.mxu0 0.0
    %2179 = vmatpush2.msra.mxu0 0.0
    %2180 = vmatprep.subr.mxu0 0.0
    %2181 = vmatpush2.msra.mxu0 0.0
    %2182 = vmatprep.subr.mxu0 0.0
    %2183 = vmatpush2.msra.mxu0 0.0
    %2184 = vmatprep.subr.mxu0 0.0
    %2185 = vmatpush2.msra.mxu0 0.0
    %2186 = vmatprep.subr.mxu0 0.0
    %2187 = vmatpush2.msra.mxu0 0.0
    %2188 = vmatprep.subr.mxu0 0.0
    %2189 = vmatpush2.msra.mxu0 0.0
    %2190 = vmatprep.subr.mxu0 0.0
    %2191 = vmatpush2.msra.mxu0 0.0
    %2192 = vmatprep.subr.mxu0 0.0
    %2193 = vmatpush2.msra.mxu0 0.0
    %2194 = vmatprep.subr.mxu0 0.0
    %2195 = vmatpush2.msra.mxu0 0.0
    %2196 = vmatprep.subr.mxu0 0.0
    %2197 = vmatpush2.msra.mxu0 0.0
    %2198 = vmatprep.subr.mxu0 0.0
    %2199 = vmatpush2.msra.mxu0 0.0
    %2200 = vmatprep.subr.mxu0 0.0
    %2201 = vmatpush2.msra.mxu0 0.0
    %2202 = vmatprep.subr.mxu0 0.0
    %2203 = vmatpush2.msra.mxu0 0.0
    %2204 = vmatprep.subr.mxu0 0.0
    %2205 = vmatpush2.msra.mxu0 0.0
    %2206 = vmatprep.subr.mxu0 0.0
    %2207 = vmatpush2.msra.mxu0 0.0
    %2208 = vmatprep.subr.mxu0 0.0
    %2209 = vmatpush2.msra.mxu0 0.0
    %2210 = vmatprep.mubr.f32.mxu0 0.0
    %2211 = vmatmul.mubr.f32.gmra.mxu0 %v2135
    %v2212 = vpop.f32.mrf.mxu0
    %v2213 = vadd.f32 0.0, %v2212
    %v2214 = vpop.f32.mrf.mxu0
    %2215 = vmatprep.mubr.f32.mxu0 0.0
    %2216 = vmatmul.mubr.f32.gmra.mxu0 %v2138
    %v2217 = vpop.f32.mrf.mxu0
    %v2218 = vadd.f32 0.0, %v2217
    %v2219 = vpop.f32.mrf.mxu0
    %2220 = vmatprep.mubr.f32.mxu0 0.0
    %2221 = vmatmul.mubr.f32.gmra.mxu0 %v2141
    %v2222 = vpop.f32.mrf.mxu0
    %v2223 = vadd.f32 0.0, %v2222
    %v2224 = vpop.f32.mrf.mxu0
    %2225 = vmatprep.mubr.f32.mxu0 0.0
    %2226 = vmatmul.mubr.f32.gmra.mxu0 %v2144
    %v2227 = vpop.f32.mrf.mxu0
    %v2228 = vadd.f32 0.0, %v2227
    %v2229 = vpop.f32.mrf.mxu0
    %2230 = vdwg.mxu0
    %v2231 = vld [vmem:[%s7] sm:$0xff]
    %v2232 = vld [vmem:[%s7 + $0x8] sm:$0xff]
    %v2233 = vadd.f32 %v402, 3.0
    %v2234 = vadd.f32 %v407, 3.0
    %v2235 = vmax.f32 %v2233, 0.0
    %v2236 = vmax.f32 %v2234, 0.0
    %v2237 = vmin.f32 %v2235, 6.0
    %v2238 = vmin.f32 %v2236, 6.0
    %v2239 = vmul.f32 %v402, %v2237
    %v2240 = vmul.f32 %v407, %v2238
    %v2241 = vmul.f32 %v2239, 0.16666667
    %v2242 = vmul.f32 %v2240, 0.16666667
    %v2244 = vsel %vm62, %v2241, 0
    %v2247 = vsel %vm62, %v2242, 0
    %2249 = vmatprep.subr.mxu0 0.0
    %2250 = vmatpush1.msra.mxu0 0.0
    %2251 = vmatprep.subr.mxu0 0.0
    %2252 = vmatpush1.msra.mxu0 0.0
    %2253 = vmatprep.subr.mxu0 0.0
    %2254 = vmatpush1.msra.mxu0 0.0
    %2255 = vmatprep.subr.mxu0 0.0
    %2256 = vmatpush1.msra.mxu0 0.0
    %2257 = vmatprep.subr.mxu0 0.0
    %2258 = vmatpush1.msra.mxu0 0.0
    %2259 = vmatprep.subr.mxu0 0.0
    %2260 = vmatpush1.msra.mxu0 0.0
    %2261 = vmatprep.subr.mxu0 0.0
    %2262 = vmatpush1.msra.mxu0 0.0
    %2263 = vmatprep.subr.mxu0 0.0
    %2264 = vmatpush1.msra.mxu0 0.0
    %2265 = vmatprep.subr.mxu0 0.0
    %2266 = vmatpush1.msra.mxu0 0.0
    %2267 = vmatprep.subr.mxu0 0.0
    %2268 = vmatpush1.msra.mxu0 0.0
    %2269 = vmatprep.subr.mxu0 0.0
    %2270 = vmatpush1.msra.mxu0 0.0
    %2271 = vmatprep.subr.mxu0 0.0
    %2272 = vmatpush1.msra.mxu0 0.0
    %2273 = vmatprep.subr.mxu0 0.0
    %2274 = vmatpush1.msra.mxu0 0.0
    %2275 = vmatprep.subr.mxu0 0.0
    %2276 = vmatpush1.msra.mxu0 0.0
    %2277 = vmatprep.subr.mxu0 %v771
    %2278 = vmatpush1.msra.mxu0 %v770
    %2279 = vmatprep.subr.mxu0 %v769
    %2280 = vmatpush1.msra.mxu0 %v768
    %2281 = vmatprep.subr.mxu0 0.0
    %2282 = vmatpush2.msra.mxu0 0.0
    %2283 = vmatprep.subr.mxu0 0.0
    %2284 = vmatpush2.msra.mxu0 0.0
    %2285 = vmatprep.subr.mxu0 0.0
    %2286 = vmatpush2.msra.mxu0 0.0
    %2287 = vmatprep.subr.mxu0 0.0
    %2288 = vmatpush2.msra.mxu0 0.0
    %2289 = vmatprep.subr.mxu0 0.0
    %2290 = vmatpush2.msra.mxu0 0.0
    %2291 = vmatprep.subr.mxu0 0.0
    %2292 = vmatpush2.msra.mxu0 0.0
    %2293 = vmatprep.subr.mxu0 0.0
    %2294 = vmatpush2.msra.mxu0 0.0
    %2295 = vmatprep.subr.mxu0 0.0
    %2296 = vmatpush2.msra.mxu0 0.0
    %2297 = vmatprep.subr.mxu0 0.0
    %2298 = vmatpush2.msra.mxu0 0.0
    %2299 = vmatprep.subr.mxu0 0.0
    %2300 = vmatpush2.msra.mxu0 0.0
    %2301 = vmatprep.subr.mxu0 0.0
    %2302 = vmatpush2.msra.mxu0 0.0
    %2303 = vmatprep.subr.mxu0 0.0
    %2304 = vmatpush2.msra.mxu0 0.0
    %2305 = vmatprep.subr.mxu0 0.0
    %2306 = vmatpush2.msra.mxu0 0.0
    %2307 = vmatprep.subr.mxu0 0.0
    %2308 = vmatpush2.msra.mxu0 0.0
    %2309 = vmatprep.subr.mxu0 0.0
    %2310 = vmatpush2.msra.mxu0 0.0
    %2311 = vmatprep.subr.mxu0 0.0
    %2312 = vmatpush2.msra.mxu0 0.0
    %2313 = vmatprep.mubr.f32.mxu0 0.0
    %2314 = vmatmul.mubr.f32.gmra.mxu0 %v2244
    %v2315 = vpop.f32.mrf.mxu0
    %v2316 = vadd.f32 0.0, %v2315
    %v2317 = vpop.f32.mrf.mxu0
    %v2318 = vadd.f32 0.0, %v2317
    %2319 = vmatprep.mubr.f32.mxu0 0.0
    %2320 = vmatmul.mubr.f32.gmra.mxu0 %v2247
    %v2321 = vpop.f32.mrf.mxu0
    %v2322 = vadd.f32 0.0, %v2321
    %v2323 = vpop.f32.mrf.mxu0
    %v2324 = vadd.f32 0.0, %v2323
    %2325 = vdwg.mxu0
    %v2326 = vld [vmem:[%s8] sm:$0xff]
    %v2327 = vld [vmem:[%s8 + $0x8] sm:$0xff]
    %v2328 = vld [vmem:[%s8 + $0x10] sm:$0xff]
    %v2329 = vld [vmem:[%s8 + $0x18] sm:$0xff]
    %v2330 = vmul.f32 %v2316, %v2326
    %v2331 = vmul.f32 %v2318, %v2327
    %v2332 = vmul.f32 %v2322, %v2328
    %v2333 = vmul.f32 %v2324, %v2329
    %v2335 = vsel %vm62, %v2331, 0
    %v2338 = vsel %vm62, %v2333, 0
    %2340 = vmatprep.subr.mxu0 0.0
    %2341 = vmatpush1.msra.mxu0 %v787
    %2342 = vmatprep.subr.mxu0 0.0
    %2343 = vmatpush1.msra.mxu0 %v786
    %2344 = vmatprep.subr.mxu0 0.0
    %2345 = vmatpush1.msra.mxu0 %v785
    %2346 = vmatprep.subr.mxu0 0.0
    %2347 = vmatpush1.msra.mxu0 %v784
    %2348 = vmatprep.subr.mxu0 0.0
    %2349 = vmatpush1.msra.mxu0 %v783
    %2350 = vmatprep.subr.mxu0 0.0
    %2351 = vmatpush1.msra.mxu0 %v782
    %2352 = vmatprep.subr.mxu0 0.0
    %2353 = vmatpush1.msra.mxu0 %v781
    %2354 = vmatprep.subr.mxu0 0.0
    %2355 = vmatpush1.msra.mxu0 %v780
    %2356 = vmatprep.subr.mxu0 0.0
    %2357 = vmatpush1.msra.mxu0 %v779
    %2358 = vmatprep.subr.mxu0 0.0
    %2359 = vmatpush1.msra.mxu0 %v778
    %2360 = vmatprep.subr.mxu0 0.0
    %2361 = vmatpush1.msra.mxu0 %v777
    %2362 = vmatprep.subr.mxu0 0.0
    %2363 = vmatpush1.msra.mxu0 %v776
    %2364 = vmatprep.subr.mxu0 0.0
    %2365 = vmatpush1.msra.mxu0 %v775
    %2366 = vmatprep.subr.mxu0 0.0
    %2367 = vmatpush1.msra.mxu0 %v774
    %2368 = vmatprep.subr.mxu0 0.0
    %2369 = vmatpush1.msra.mxu0 %v773
    %2370 = vmatprep.subr.mxu0 0.0
    %2371 = vmatpush1.msra.mxu0 %v772
    %2372 = vmatprep.subr.mxu0 0.0
    %2373 = vmatpush2.msra.mxu0 0.0
    %2374 = vmatprep.subr.mxu0 0.0
    %2375 = vmatpush2.msra.mxu0 0.0
    %2376 = vmatprep.subr.mxu0 0.0
    %2377 = vmatpush2.msra.mxu0 0.0
    %2378 = vmatprep.subr.mxu0 0.0
    %2379 = vmatpush2.msra.mxu0 0.0
    %2380 = vmatprep.subr.mxu0 0.0
    %2381 = vmatpush2.msra.mxu0 0.0
    %2382 = vmatprep.subr.mxu0 0.0
    %2383 = vmatpush2.msra.mxu0 0.0
    %2384 = vmatprep.subr.mxu0 0.0
    %2385 = vmatpush2.msra.mxu0 0.0
    %2386 = vmatprep.subr.mxu0 0.0
    %2387 = vmatpush2.msra.mxu0 0.0
    %2388 = vmatprep.subr.mxu0 0.0
    %2389 = vmatpush2.msra.mxu0 0.0
    %2390 = vmatprep.subr.mxu0 0.0
    %2391 = vmatpush2.msra.mxu0 0.0
    %2392 = vmatprep.subr.mxu0 0.0
    %2393 = vmatpush2.msra.mxu0 0.0
    %2394 = vmatprep.subr.mxu0 0.0
    %2395 = vmatpush2.msra.mxu0 0.0
    %2396 = vmatprep.subr.mxu0 0.0
    %2397 = vmatpush2.msra.mxu0 0.0
    %2398 = vmatprep.subr.mxu0 0.0
    %2399 = vmatpush2.msra.mxu0 0.0
    %2400 = vmatprep.subr.mxu0 0.0
    %2401 = vmatpush2.msra.mxu0 %v789
    %2402 = vmatprep.subr.mxu0 0.0
    %2403 = vmatpush2.msra.mxu0 %v788
    %2404 = vmatprep.mubr.f32.mxu0 %v2335
    %2405 = vmatmul.mubr.f32.gmra.mxu0 %v2330
    %v2406 = vpop.f32.mrf.mxu0
    %v2407 = vadd.f32 0.0, %v2406
    %v2408 = vpop.f32.mrf.mxu0
    %2409 = vmatprep.mubr.f32.mxu0 %v2338
    %2410 = vmatmul.mubr.f32.gmra.mxu0 %v2332
    %v2411 = vpop.f32.mrf.mxu0
    %v2412 = vadd.f32 0.0, %v2411
    %v2413 = vpop.f32.mrf.mxu0
    %2414 = vdwg.mxu0
    %v2416 = vsel %vm796, %v518, 0
    %v2419 = vsel %vm796, %v523, 0
    %v2422 = vsel %vm796, %v528, 0
    %v2425 = vsel %vm796, %v533, 0
    %v2428 = vsel %vm796, %v634, 0
    %v2431 = vsel %vm796, %v639, 0
    %v2434 = vsel %vm796, %v644, 0
    %v2437 = vsel %vm796, %v649, 0
    %2439 = vmatprep.subr.mxu0 0.0
    %2440 = vmatpush1.xpose.msra.mxu0 0.0
    %2441 = vmatprep.subr.mxu0 0.0
    %2442 = vmatpush1.xpose.msra.mxu0 0.0
    %2443 = vmatprep.subr.mxu0 0.0
    %2444 = vmatpush1.xpose.msra.mxu0 0.0
    %2445 = vmatprep.subr.mxu0 0.0
    %2446 = vmatpush1.xpose.msra.mxu0 0.0
    %2447 = vmatprep.subr.mxu0 0.0
    %2448 = vmatpush1.xpose.msra.mxu0 0.0
    %2449 = vmatprep.subr.mxu0 0.0
    %2450 = vmatpush1.xpose.msra.mxu0 0.0
    %2451 = vmatprep.subr.mxu0 0.0
    %2452 = vmatpush1.xpose.msra.mxu0 0.0
    %2453 = vmatprep.subr.mxu0 0.0
    %2454 = vmatpush1.xpose.msra.mxu0 0.0
    %2455 = vmatprep.subr.mxu0 0.0
    %2456 = vmatpush1.xpose.msra.mxu0 0.0
    %2457 = vmatprep.subr.mxu0 0.0
    %2458 = vmatpush1.xpose.msra.mxu0 0.0
    %2459 = vmatprep.subr.mxu0 0.0
    %2460 = vmatpush1.xpose.msra.mxu0 0.0
    %2461 = vmatprep.subr.mxu0 0.0
    %2462 = vmatpush1.xpose.msra.mxu0 0.0
    %2463 = vmatprep.subr.mxu0 0.0
    %2464 = vmatpush1.xpose.msra.mxu0 %v2437
    %2465 = vmatprep.subr.mxu0 0.0
    %2466 = vmatpush1.xpose.msra.mxu0 %v2434
    %2467 = vmatprep.subr.mxu0 0.0
    %2468 = vmatpush1.xpose.msra.mxu0 %v2431
    %2469 = vmatprep.subr.mxu0 0.0
    %2470 = vmatpush1.xpose.msra.mxu0 %v2428
    %2471 = vmatprep.subr.mxu0 0.0
    %2472 = vmatpush2.xpose.msra.mxu0 0.0
    %2473 = vmatprep.subr.mxu0 0.0
    %2474 = vmatpush2.xpose.msra.mxu0 0.0
    %2475 = vmatprep.subr.mxu0 0.0
    %2476 = vmatpush2.xpose.msra.mxu0 0.0
    %2477 = vmatprep.subr.mxu0 0.0
    %2478 = vmatpush2.xpose.msra.mxu0 0.0
    %2479 = vmatprep.subr.mxu0 0.0
    %2480 = vmatpush2.xpose.msra.mxu0 0.0
    %2481 = vmatprep.subr.mxu0 0.0
    %2482 = vmatpush2.xpose.msra.mxu0 0.0
    %2483 = vmatprep.subr.mxu0 0.0
    %2484 = vmatpush2.xpose.msra.mxu0 0.0
    %2485 = vmatprep.subr.mxu0 0.0
    %2486 = vmatpush2.xpose.msra.mxu0 0.0
    %2487 = vmatprep.subr.mxu0 0.0
    %2488 = vmatpush2.xpose.msra.mxu0 0.0
    %2489 = vmatprep.subr.mxu0 0.0
    %2490 = vmatpush2.xpose.msra.mxu0 0.0
    %2491 = vmatprep.subr.mxu0 0.0
    %2492 = vmatpush2.xpose.msra.mxu0 0.0
    %2493 = vmatprep.subr.mxu0 0.0
    %2494 = vmatpush2.xpose.msra.mxu0 0.0
    %2495 = vmatprep.subr.mxu0 0.0
    %2496 = vmatpush2.xpose.msra.mxu0 0.0
    %2497 = vmatprep.subr.mxu0 0.0
    %2498 = vmatpush2.xpose.msra.mxu0 0.0
    %2499 = vmatprep.subr.mxu0 0.0
    %2500 = vmatpush2.xpose.msra.mxu0 0.0
    %2501 = vmatprep.subr.mxu0 0.0
    %2502 = vmatpush2.xpose.msra.mxu0 0.0
    %2503 = vmatprep.mubr.f32.mxu0 0.0
    %2504 = vmatmul.mubr.f32.gmra.mxu0 %v2416
    %v2505 = vpop.f32.mrf.mxu0
    %v2506 = vadd.f32 0.0, %v2505
    %v2507 = vpop.f32.mrf.mxu0
    %2508 = vmatprep.mubr.f32.mxu0 0.0
    %2509 = vmatmul.mubr.f32.gmra.mxu0 %v2419
    %v2510 = vpop.f32.mrf.mxu0
    %v2511 = vadd.f32 0.0, %v2510
    %v2512 = vpop.f32.mrf.mxu0
    %2513 = vmatprep.mubr.f32.mxu0 0.0
    %2514 = vmatmul.mubr.f32.gmra.mxu0 %v2422
    %v2515 = vpop.f32.mrf.mxu0
    %v2516 = vadd.f32 0.0, %v2515
    %v2517 = vpop.f32.mrf.mxu0
    %2518 = vmatprep.mubr.f32.mxu0 0.0
    %2519 = vmatmul.mubr.f32.gmra.mxu0 %v2425
    %v2520 = vpop.f32.mrf.mxu0
    %v2521 = vadd.f32 0.0, %v2520
    %v2522 = vpop.f32.mrf.mxu0
    %2523 = vdwg.mxu0
    %v2524 = vsel %vm906, %v2506, -inf
    %2525 = vmax.xlane.f32.xlu0 %v2524
    %v2526 = vpop.xlane.xlu0 %2525
    %v2527 = vsel %vm906, %v2511, -inf
    %2528 = vmax.xlane.f32.xlu0 %v2527
    %v2529 = vpop.xlane.xlu0 %2528
    %v2530 = vsel %vm906, %v2516, -inf
    %2531 = vmax.xlane.f32.xlu0 %v2530
    %v2532 = vpop.xlane.xlu0 %2531
    %v2533 = vsel %vm906, %v2521, -inf
    %2534 = vmax.xlane.f32.xlu0 %v2533
    %v2535 = vpop.xlane.xlu0 %2534
    %v2536 = vsub.f32 %v2506, %v2526
    %v2537 = vsub.f32 %v2511, %v2529
    %v2538 = vsub.f32 %v2516, %v2532
    %v2539 = vsub.f32 %v2521, %v2535
    %v2540 = vmul.f32 %v2536, 1.442695
    %v2541 = vpow.pop %v2540
    %v2542 = vmul.f32 %v2537, 1.442695
    %v2543 = vpow.pop %v2542
    %v2544 = vmul.f32 %v2538, 1.442695
    %v2545 = vpow.pop %v2544
    %v2546 = vmul.f32 %v2539, 1.442695
    %v2547 = vpow.pop %v2546
    %v2548 = vsel %vm906, %v2541, 0.0
    %2549 = vadd.xlane.f32.xlu0 %v2548
    %v2550 = vpop.xlane.xlu0 %2549
    %v2551 = vsel %vm906, %v2543, 0.0
    %2552 = vadd.xlane.f32.xlu0 %v2551
    %v2553 = vpop.xlane.xlu0 %2552
    %v2554 = vsel %vm906, %v2545, 0.0
    %2555 = vadd.xlane.f32.xlu0 %v2554
    %v2556 = vpop.xlane.xlu0 %2555
    %v2557 = vsel %vm906, %v2547, 0.0
    %2558 = vadd.xlane.f32.xlu0 %v2557
    %v2559 = vpop.xlane.xlu0 %2558
    %v2560 = vrcp.pop %v2550
    %v2561 = vrcp.pop %v2553
    %v2562 = vrcp.pop %v2556
    %v2563 = vrcp.pop %v2559
    %v2564 = vmul.f32 %v2541, %v2560
    %v2565 = vmul.f32 %v2543, %v2561
    %v2566 = vmul.f32 %v2545, %v2562
    %v2567 = vmul.f32 %v2547, %v2563
    %v2569 = vsel %vm906, %v2564, 0
    %v2572 = vsel %vm906, %v2565, 0
    %v2575 = vsel %vm906, %v2566, 0
    %v2578 = vsel %vm906, %v2567, 0
    %2580 = vmatprep.subr.mxu0 0.0
    %2581 = vmatpush1.msra.mxu0 0.0
    %2582 = vmatprep.subr.mxu0 0.0
    %2583 = vmatpush1.msra.mxu0 0.0
    %2584 = vmatprep.subr.mxu0 0.0
    %2585 = vmatpush1.msra.mxu0 0.0
    %2586 = vmatprep.subr.mxu0 0.0
    %2587 = vmatpush1.msra.mxu0 0.0
    %2588 = vmatprep.subr.mxu0 0.0
    %2589 = vmatpush1.msra.mxu0 0.0
    %2590 = vmatprep.subr.mxu0 0.0
    %2591 = vmatpush1.msra.mxu0 0.0
    %2592 = vmatprep.subr.mxu0 0.0
    %2593 = vmatpush1.msra.mxu0 0.0
    %2594 = vmatprep.subr.mxu0 0.0
    %2595 = vmatpush1.msra.mxu0 0.0
    %2596 = vmatprep.subr.mxu0 0.0
    %2597 = vmatpush1.msra.mxu0 0.0
    %2598 = vmatprep.subr.mxu0 0.0
    %2599 = vmatpush1.msra.mxu0 0.0
    %2600 = vmatprep.subr.mxu0 0.0
    %2601 = vmatpush1.msra.mxu0 0.0
    %2602 = vmatprep.subr.mxu0 0.0
    %2603 = vmatpush1.msra.mxu0 0.0
    %2604 = vmatprep.subr.mxu0 0.0
    %2605 = vmatpush1.msra.mxu0 %v765
    %2606 = vmatprep.subr.mxu0 0.0
    %2607 = vmatpush1.msra.mxu0 %v760
    %2608 = vmatprep.subr.mxu0 0.0
    %2609 = vmatpush1.msra.mxu0 %v755
    %2610 = vmatprep.subr.mxu0 0.0
    %2611 = vmatpush1.msra.mxu0 %v750
    %2612 = vmatprep.subr.mxu0 0.0
    %2613 = vmatpush2.msra.mxu0 0.0
    %2614 = vmatprep.subr.mxu0 0.0
    %2615 = vmatpush2.msra.mxu0 0.0
    %2616 = vmatprep.subr.mxu0 0.0
    %2617 = vmatpush2.msra.mxu0 0.0
    %2618 = vmatprep.subr.mxu0 0.0
    %2619 = vmatpush2.msra.mxu0 0.0
    %2620 = vmatprep.subr.mxu0 0.0
    %2621 = vmatpush2.msra.mxu0 0.0
    %2622 = vmatprep.subr.mxu0 0.0
    %2623 = vmatpush2.msra.mxu0 0.0
    %2624 = vmatprep.subr.mxu0 0.0
    %2625 = vmatpush2.msra.mxu0 0.0
    %2626 = vmatprep.subr.mxu0 0.0
    %2627 = vmatpush2.msra.mxu0 0.0
    %2628 = vmatprep.subr.mxu0 0.0
    %2629 = vmatpush2.msra.mxu0 0.0
    %2630 = vmatprep.subr.mxu0 0.0
    %2631 = vmatpush2.msra.mxu0 0.0
    %2632 = vmatprep.subr.mxu0 0.0
    %2633 = vmatpush2.msra.mxu0 0.0
    %2634 = vmatprep.subr.mxu0 0.0
    %2635 = vmatpush2.msra.mxu0 0.0
    %2636 = vmatprep.subr.mxu0 0.0
    %2637 = vmatpush2.msra.mxu0 0.0
    %2638 = vmatprep.subr.mxu0 0.0
    %2639 = vmatpush2.msra.mxu0 0.0
    %2640 = vmatprep.subr.mxu0 0.0
    %2641 = vmatpush2.msra.mxu0 0.0
    %2642 = vmatprep.subr.mxu0 0.0
    %2643 = vmatpush2.msra.mxu0 0.0
    %2644 = vmatprep.mubr.f32.mxu0 0.0
    %2645 = vmatmul.mubr.f32.gmra.mxu0 %v2569
    %v2646 = vpop.f32.mrf.mxu0
    %v2647 = vadd.f32 0.0, %v2646
    %v2648 = vpop.f32.mrf.mxu0
    %2649 = vmatprep.mubr.f32.mxu0 0.0
    %2650 = vmatmul.mubr.f32.gmra.mxu0 %v2572
    %v2651 = vpop.f32.mrf.mxu0
    %v2652 = vadd.f32 0.0, %v2651
    %v2653 = vpop.f32.mrf.mxu0
    %2654 = vmatprep.mubr.f32.mxu0 0.0
    %2655 = vmatmul.mubr.f32.gmra.mxu0 %v2575
    %v2656 = vpop.f32.mrf.mxu0
    %v2657 = vadd.f32 0.0, %v2656
    %v2658 = vpop.f32.mrf.mxu0
    %2659 = vmatprep.mubr.f32.mxu0 0.0
    %2660 = vmatmul.mubr.f32.gmra.mxu0 %v2578
    %v2661 = vpop.f32.mrf.mxu0
    %v2662 = vadd.f32 0.0, %v2661
    %v2663 = vpop.f32.mrf.mxu0
    %2664 = vdwg.mxu0
    %v2665 = vld [vmem:[%s1482] sm:$0xff]
    %v2666 = vld [vmem:[%s1482 + $0x8] sm:$0xff]
    %v2668 = vsel %vm62, %v2647, 0
    %v2671 = vsel %vm62, %v2652, 0
    %v2674 = vsel %vm62, %v2657, 0
    %v2677 = vsel %vm62, %v2662, 0
    %2679 = vmatprep.subr.mxu0 0.0
    %2680 = vmatpush1.msra.mxu0 0.0
    %2681 = vmatprep.subr.mxu0 0.0
    %2682 = vmatpush1.msra.mxu0 0.0
    %2683 = vmatprep.subr.mxu0 0.0
    %2684 = vmatpush1.msra.mxu0 0.0
    %2685 = vmatprep.subr.mxu0 0.0
    %2686 = vmatpush1.msra.mxu0 0.0
    %2687 = vmatprep.subr.mxu0 0.0
    %2688 = vmatpush1.msra.mxu0 0.0
    %2689 = vmatprep.subr.mxu0 0.0
    %2690 = vmatpush1.msra.mxu0 0.0
    %2691 = vmatprep.subr.mxu0 0.0
    %2692 = vmatpush1.msra.mxu0 0.0
    %2693 = vmatprep.subr.mxu0 0.0
    %2694 = vmatpush1.msra.mxu0 0.0
    %2695 = vmatprep.subr.mxu0 0.0
    %2696 = vmatpush1.msra.mxu0 0.0
    %2697 = vmatprep.subr.mxu0 0.0
    %2698 = vmatpush1.msra.mxu0 0.0
    %2699 = vmatprep.subr.mxu0 0.0
    %2700 = vmatpush1.msra.mxu0 0.0
    %2701 = vmatprep.subr.mxu0 0.0
    %2702 = vmatpush1.msra.mxu0 0.0
    %2703 = vmatprep.subr.mxu0 0.0
    %2704 = vmatpush1.msra.mxu0 0.0
    %2705 = vmatprep.subr.mxu0 0.0
    %2706 = vmatpush1.msra.mxu0 0.0
    %2707 = vmatprep.subr.mxu0 0.0
    %2708 = vmatpush1.msra.mxu0 %v2666
    %2709 = vmatprep.subr.mxu0 0.0
    %2710 = vmatpush1.msra.mxu0 %v2665
    %2711 = vmatprep.subr.mxu0 0.0
    %2712 = vmatpush2.msra.mxu0 0.0
    %2713 = vmatprep.subr.mxu0 0.0
    %2714 = vmatpush2.msra.mxu0 0.0
    %2715 = vmatprep.subr.mxu0 0.0
    %2716 = vmatpush2.msra.mxu0 0.0
    %2717 = vmatprep.subr.mxu0 0.0
    %2718 = vmatpush2.msra.mxu0 0.0
    %2719 = vmatprep.subr.mxu0 0.0
    %2720 = vmatpush2.msra.mxu0 0.0
    %2721 = vmatprep.subr.mxu0 0.0
    %2722 = vmatpush2.msra.mxu0 0.0
    %2723 = vmatprep.subr.mxu0 0.0
    %2724 = vmatpush2.msra.mxu0 0.0
    %2725 = vmatprep.subr.mxu0 0.0
    %2726 = vmatpush2.msra.mxu0 0.0
    %2727 = vmatprep.subr.mxu0 0.0
    %2728 = vmatpush2.msra.mxu0 0.0
    %2729 = vmatprep.subr.mxu0 0.0
    %2730 = vmatpush2.msra.mxu0 0.0
    %2731 = vmatprep.subr.mxu0 0.0
    %2732 = vmatpush2.msra.mxu0 0.0
    %2733 = vmatprep.subr.mxu0 0.0
    %2734 = vmatpush2.msra.mxu0 0.0
    %2735 = vmatprep.subr.mxu0 0.0
    %2736 = vmatpush2.msra.mxu0 0.0
    %2737 = vmatprep.subr.mxu0 0.0
    %2738 = vmatpush2.msra.mxu0 0.0
    %2739 = vmatprep.subr.mxu0 0.0
    %2740 = vmatpush2.msra.mxu0 0.0
    %2741 = vmatprep.subr.mxu0 0.0
    %2742 = vmatpush2.msra.mxu0 0.0
    %2743 = vmatprep.mubr.f32.mxu0 0.0
    %2744 = vmatmul.mubr.f32.gmra.mxu0 %v2668
    %v2745 = vpop.f32.mrf.mxu0
    %v2746 = vadd.f32 0.0, %v2745
    %v2747 = vpop.f32.mrf.mxu0
    %2748 = vmatprep.mubr.f32.mxu0 0.0
    %2749 = vmatmul.mubr.f32.gmra.mxu0 %v2671
    %v2750 = vpop.f32.mrf.mxu0
    %v2751 = vadd.f32 0.0, %v2750
    %v2752 = vpop.f32.mrf.mxu0
    %2753 = vmatprep.mubr.f32.mxu0 0.0
    %2754 = vmatmul.mubr.f32.gmra.mxu0 %v2674
    %v2755 = vpop.f32.mrf.mxu0
    %v2756 = vadd.f32 0.0, %v2755
    %v2757 = vpop.f32.mrf.mxu0
    %2758 = vmatprep.mubr.f32.mxu0 0.0
    %2759 = vmatmul.mubr.f32.gmra.mxu0 %v2677
    %v2760 = vpop.f32.mrf.mxu0
    %v2761 = vadd.f32 0.0, %v2760
    %v2762 = vpop.f32.mrf.mxu0
    %2763 = vdwg.mxu0
    %v2765 = vsel %vm62, %v2213, 0
    %v2768 = vsel %vm62, %v2218, 0
    %v2771 = vsel %vm62, %v2223, 0
    %v2774 = vsel %vm62, %v2228, 0
    %2776 = vmatprep.subr.mxu0 0.0
    %2777 = vmatpush1.msra.mxu0 0.0
    %2778 = vmatprep.subr.mxu0 0.0
    %2779 = vmatpush1.msra.mxu0 0.0
    %2780 = vmatprep.subr.mxu0 0.0
    %2781 = vmatpush1.msra.mxu0 0.0
    %2782 = vmatprep.subr.mxu0 0.0
    %2783 = vmatpush1.msra.mxu0 0.0
    %2784 = vmatprep.subr.mxu0 0.0
    %2785 = vmatpush1.msra.mxu0 0.0
    %2786 = vmatprep.subr.mxu0 0.0
    %2787 = vmatpush1.msra.mxu0 0.0
    %2788 = vmatprep.subr.mxu0 0.0
    %2789 = vmatpush1.msra.mxu0 0.0
    %2790 = vmatprep.subr.mxu0 0.0
    %2791 = vmatpush1.msra.mxu0 0.0
    %2792 = vmatprep.subr.mxu0 0.0
    %2793 = vmatpush1.msra.mxu0 0.0
    %2794 = vmatprep.subr.mxu0 0.0
    %2795 = vmatpush1.msra.mxu0 0.0
    %2796 = vmatprep.subr.mxu0 0.0
    %2797 = vmatpush1.msra.mxu0 0.0
    %2798 = vmatprep.subr.mxu0 0.0
    %2799 = vmatpush1.msra.mxu0 0.0
    %2800 = vmatprep.subr.mxu0 0.0
    %2801 = vmatpush1.msra.mxu0 0.0
    %2802 = vmatprep.subr.mxu0 0.0
    %2803 = vmatpush1.msra.mxu0 0.0
    %2804 = vmatprep.subr.mxu0 0.0
    %2805 = vmatpush1.msra.mxu0 %v2232
    %2806 = vmatprep.subr.mxu0 0.0
    %2807 = vmatpush1.msra.mxu0 %v2231
    %2808 = vmatprep.subr.mxu0 0.0
    %2809 = vmatpush2.msra.mxu0 0.0
    %2810 = vmatprep.subr.mxu0 0.0
    %2811 = vmatpush2.msra.mxu0 0.0
    %2812 = vmatprep.subr.mxu0 0.0
    %2813 = vmatpush2.msra.mxu0 0.0
    %2814 = vmatprep.subr.mxu0 0.0
    %2815 = vmatpush2.msra.mxu0 0.0
    %2816 = vmatprep.subr.mxu0 0.0
    %2817 = vmatpush2.msra.mxu0 0.0
    %2818 = vmatprep.subr.mxu0 0.0
    %2819 = vmatpush2.msra.mxu0 0.0
    %2820 = vmatprep.subr.mxu0 0.0
    %2821 = vmatpush2.msra.mxu0 0.0
    %2822 = vmatprep.subr.mxu0 0.0
    %2823 = vmatpush2.msra.mxu0 0.0
    %2824 = vmatprep.subr.mxu0 0.0
    %2825 = vmatpush2.msra.mxu0 0.0
    %2826 = vmatprep.subr.mxu0 0.0
    %2827 = vmatpush2.msra.mxu0 0.0
    %2828 = vmatprep.subr.mxu0 0.0
    %2829 = vmatpush2.msra.mxu0 0.0
    %2830 = vmatprep.subr.mxu0 0.0
    %2831 = vmatpush2.msra.mxu0 0.0
    %2832 = vmatprep.subr.mxu0 0.0
    %2833 = vmatpush2.msra.mxu0 0.0
    %2834 = vmatprep.subr.mxu0 0.0
    %2835 = vmatpush2.msra.mxu0 0.0
    %2836 = vmatprep.subr.mxu0 0.0
    %2837 = vmatpush2.msra.mxu0 0.0
    %2838 = vmatprep.subr.mxu0 0.0
    %2839 = vmatpush2.msra.mxu0 0.0
    %2840 = vmatprep.mubr.f32.mxu0 0.0
    %2841 = vmatmul.mubr.f32.gmra.mxu0 %v2765
    %v2842 = vpop.f32.mrf.mxu0
    %v2843 = vadd.f32 %v2746, %v2842
    %v2844 = vpop.f32.mrf.mxu0
    %2845 = vmatprep.mubr.f32.mxu0 0.0
    %2846 = vmatmul.mubr.f32.gmra.mxu0 %v2768
    %v2847 = vpop.f32.mrf.mxu0
    %v2848 = vadd.f32 %v2751, %v2847
    %v2849 = vpop.f32.mrf.mxu0
    %2850 = vmatprep.mubr.f32.mxu0 0.0
    %2851 = vmatmul.mubr.f32.gmra.mxu0 %v2771
    %v2852 = vpop.f32.mrf.mxu0
    %v2853 = vadd.f32 %v2756, %v2852
    %v2854 = vpop.f32.mrf.mxu0
    %2855 = vmatprep.mubr.f32.mxu0 0.0
    %2856 = vmatmul.mubr.f32.gmra.mxu0 %v2774
    %v2857 = vpop.f32.mrf.mxu0
    %v2858 = vadd.f32 %v2761, %v2857
    %v2859 = vpop.f32.mrf.mxu0
    %2860 = vdwg.mxu0
    %v2861 = vadd.f32 %v750, 3.0
    %v2862 = vadd.f32 %v755, 3.0
    %v2863 = vmax.f32 %v2861, 0.0
    %v2864 = vmax.f32 %v2862, 0.0
    %v2865 = vmin.f32 %v2863, 6.0
    %v2866 = vmin.f32 %v2864, 6.0
    %v2867 = vmul.f32 %v750, %v2865
    %v2868 = vmul.f32 %v755, %v2866
    %v2869 = vmul.f32 %v2867, 0.16666667
    %v2870 = vmul.f32 %v2868, 0.16666667
    %v2872 = vsel %vm62, %v2869, 0
    %v2875 = vsel %vm62, %v2870, 0
    %2877 = vmatprep.subr.mxu0 0.0
    %2878 = vmatpush1.msra.mxu0 0.0
    %2879 = vmatprep.subr.mxu0 0.0
    %2880 = vmatpush1.msra.mxu0 0.0
    %2881 = vmatprep.subr.mxu0 0.0
    %2882 = vmatpush1.msra.mxu0 0.0
    %2883 = vmatprep.subr.mxu0 0.0
    %2884 = vmatpush1.msra.mxu0 0.0
    %2885 = vmatprep.subr.mxu0 0.0
    %2886 = vmatpush1.msra.mxu0 0.0
    %2887 = vmatprep.subr.mxu0 0.0
    %2888 = vmatpush1.msra.mxu0 0.0
    %2889 = vmatprep.subr.mxu0 0.0
    %2890 = vmatpush1.msra.mxu0 0.0
    %2891 = vmatprep.subr.mxu0 0.0
    %2892 = vmatpush1.msra.mxu0 0.0
    %2893 = vmatprep.subr.mxu0 0.0
    %2894 = vmatpush1.msra.mxu0 0.0
    %2895 = vmatprep.subr.mxu0 0.0
    %2896 = vmatpush1.msra.mxu0 0.0
    %2897 = vmatprep.subr.mxu0 0.0
    %2898 = vmatpush1.msra.mxu0 0.0
    %2899 = vmatprep.subr.mxu0 0.0
    %2900 = vmatpush1.msra.mxu0 0.0
    %2901 = vmatprep.subr.mxu0 0.0
    %2902 = vmatpush1.msra.mxu0 0.0
    %2903 = vmatprep.subr.mxu0 0.0
    %2904 = vmatpush1.msra.mxu0 0.0
    %2905 = vmatprep.subr.mxu0 %v771
    %2906 = vmatpush1.msra.mxu0 %v770
    %2907 = vmatprep.subr.mxu0 %v769
    %2908 = vmatpush1.msra.mxu0 %v768
    %2909 = vmatprep.subr.mxu0 0.0
    %2910 = vmatpush2.msra.mxu0 0.0
    %2911 = vmatprep.subr.mxu0 0.0
    %2912 = vmatpush2.msra.mxu0 0.0
    %2913 = vmatprep.subr.mxu0 0.0
    %2914 = vmatpush2.msra.mxu0 0.0
    %2915 = vmatprep.subr.mxu0 0.0
    %2916 = vmatpush2.msra.mxu0 0.0
    %2917 = vmatprep.subr.mxu0 0.0
    %2918 = vmatpush2.msra.mxu0 0.0
    %2919 = vmatprep.subr.mxu0 0.0
    %2920 = vmatpush2.msra.mxu0 0.0
    %2921 = vmatprep.subr.mxu0 0.0
    %2922 = vmatpush2.msra.mxu0 0.0
    %2923 = vmatprep.subr.mxu0 0.0
    %2924 = vmatpush2.msra.mxu0 0.0
    %2925 = vmatprep.subr.mxu0 0.0
    %2926 = vmatpush2.msra.mxu0 0.0
    %2927 = vmatprep.subr.mxu0 0.0
    %2928 = vmatpush2.msra.mxu0 0.0
    %2929 = vmatprep.subr.mxu0 0.0
    %2930 = vmatpush2.msra.mxu0 0.0
    %2931 = vmatprep.subr.mxu0 0.0
    %2932 = vmatpush2.msra.mxu0 0.0
    %2933 = vmatprep.subr.mxu0 0.0
    %2934 = vmatpush2.msra.mxu0 0.0
    %2935 = vmatprep.subr.mxu0 0.0
    %2936 = vmatpush2.msra.mxu0 0.0
    %2937 = vmatprep.subr.mxu0 0.0
    %2938 = vmatpush2.msra.mxu0 0.0
    %2939 = vmatprep.subr.mxu0 0.0
    %2940 = vmatpush2.msra.mxu0 0.0
    %2941 = vmatprep.mubr.f32.mxu0 0.0
    %2942 = vmatmul.mubr.f32.gmra.mxu0 %v2872
    %v2943 = vpop.f32.mrf.mxu0
    %v2944 = vadd.f32 0.0, %v2943
    %v2945 = vpop.f32.mrf.mxu0
    %v2946 = vadd.f32 0.0, %v2945
    %2947 = vmatprep.mubr.f32.mxu0 0.0
    %2948 = vmatmul.mubr.f32.gmra.mxu0 %v2875
    %v2949 = vpop.f32.mrf.mxu0
    %v2950 = vadd.f32 0.0, %v2949
    %v2951 = vpop.f32.mrf.mxu0
    %v2952 = vadd.f32 0.0, %v2951
    %2953 = vdwg.mxu0
    %v2954 = vld [vmem:[%s1772] sm:$0xff]
    %v2955 = vld [vmem:[%s1772 + $0x8] sm:$0xff]
    %v2956 = vld [vmem:[%s1772 + $0x10] sm:$0xff]
    %v2957 = vld [vmem:[%s1772 + $0x18] sm:$0xff]
    %v2958 = vmul.f32 %v2944, %v2954
    %v2959 = vmul.f32 %v2946, %v2955
    %v2960 = vmul.f32 %v2950, %v2956
    %v2961 = vmul.f32 %v2952, %v2957
    %v2963 = vsel %vm62, %v2959, 0
    %v2966 = vsel %vm62, %v2961, 0
    %2968 = vmatprep.subr.mxu0 0.0
    %2969 = vmatpush1.msra.mxu0 %v787
    %2970 = vmatprep.subr.mxu0 0.0
    %2971 = vmatpush1.msra.mxu0 %v786
    %2972 = vmatprep.subr.mxu0 0.0
    %2973 = vmatpush1.msra.mxu0 %v785
    %2974 = vmatprep.subr.mxu0 0.0
    %2975 = vmatpush1.msra.mxu0 %v784
    %2976 = vmatprep.subr.mxu0 0.0
    %2977 = vmatpush1.msra.mxu0 %v783
    %2978 = vmatprep.subr.mxu0 0.0
    %2979 = vmatpush1.msra.mxu0 %v782
    %2980 = vmatprep.subr.mxu0 0.0
    %2981 = vmatpush1.msra.mxu0 %v781
    %2982 = vmatprep.subr.mxu0 0.0
    %2983 = vmatpush1.msra.mxu0 %v780
    %2984 = vmatprep.subr.mxu0 0.0
    %2985 = vmatpush1.msra.mxu0 %v779
    %2986 = vmatprep.subr.mxu0 0.0
    %2987 = vmatpush1.msra.mxu0 %v778
    %2988 = vmatprep.subr.mxu0 0.0
    %2989 = vmatpush1.msra.mxu0 %v777
    %2990 = vmatprep.subr.mxu0 0.0
    %2991 = vmatpush1.msra.mxu0 %v776
    %2992 = vmatprep.subr.mxu0 0.0
    %2993 = vmatpush1.msra.mxu0 %v775
    %2994 = vmatprep.subr.mxu0 0.0
    %2995 = vmatpush1.msra.mxu0 %v774
    %2996 = vmatprep.subr.mxu0 0.0
    %2997 = vmatpush1.msra.mxu0 %v773
    %2998 = vmatprep.subr.mxu0 0.0
    %2999 = vmatpush1.msra.mxu0 %v772
    %3000 = vmatprep.subr.mxu0 0.0
    %3001 = vmatpush2.msra.mxu0 0.0
    %3002 = vmatprep.subr.mxu0 0.0
    %3003 = vmatpush2.msra.mxu0 0.0
    %3004 = vmatprep.subr.mxu0 0.0
    %3005 = vmatpush2.msra.mxu0 0.0
    %3006 = vmatprep.subr.mxu0 0.0
    %3007 = vmatpush2.msra.mxu0 0.0
    %3008 = vmatprep.subr.mxu0 0.0
    %3009 = vmatpush2.msra.mxu0 0.0
    %3010 = vmatprep.subr.mxu0 0.0
    %3011 = vmatpush2.msra.mxu0 0.0
    %3012 = vmatprep.subr.mxu0 0.0
    %3013 = vmatpush2.msra.mxu0 0.0
    %3014 = vmatprep.subr.mxu0 0.0
    %3015 = vmatpush2.msra.mxu0 0.0
    %3016 = vmatprep.subr.mxu0 0.0
    %3017 = vmatpush2.msra.mxu0 0.0
    %3018 = vmatprep.subr.mxu0 0.0
    %3019 = vmatpush2.msra.mxu0 0.0
    %3020 = vmatprep.subr.mxu0 0.0
    %3021 = vmatpush2.msra.mxu0 0.0
    %3022 = vmatprep.subr.mxu0 0.0
    %3023 = vmatpush2.msra.mxu0 0.0
    %3024 = vmatprep.subr.mxu0 0.0
    %3025 = vmatpush2.msra.mxu0 0.0
    %3026 = vmatprep.subr.mxu0 0.0
    %3027 = vmatpush2.msra.mxu0 0.0
    %3028 = vmatprep.subr.mxu0 0.0
    %3029 = vmatpush2.msra.mxu0 %v789
    %3030 = vmatprep.subr.mxu0 0.0
    %3031 = vmatpush2.msra.mxu0 %v788
    %3032 = vmatprep.mubr.f32.mxu0 %v2963
    %3033 = vmatmul.mubr.f32.gmra.mxu0 %v2958
    %v3034 = vpop.f32.mrf.mxu0
    %v3035 = vadd.f32 0.0, %v3034
    %v3036 = vpop.f32.mrf.mxu0
    %3037 = vmatprep.mubr.f32.mxu0 %v2966
    %3038 = vmatmul.mubr.f32.gmra.mxu0 %v2960
    %v3039 = vpop.f32.mrf.mxu0
    %v3040 = vadd.f32 0.0, %v3039
    %v3041 = vpop.f32.mrf.mxu0
    %3042 = vdwg.mxu0
    %v3043 = vadd.f32 %v2843, %v2407
    %v3044 = vadd.f32 %v2848, %v2412
    %v3045 = vadd.f32 %v2853, %v3035
    %v3046 = vadd.f32 %v2858, %v3040
    %3047 = vxpose.xlu0.b32.start [1/16] %v3043, 128
    %3048 = vxpose.xlu0.b32.cont [2/16] %v3044, 128
    %3049 = vxpose.xlu0.b32.cont [3/16] %v3045, 128
    %3050 = vxpose.xlu0.b32.cont [4/16] %v3046, 128
    %3051 = vxpose.xlu0.b32.cont [5/16] 0.0, 128
    %3052 = vxpose.xlu0.b32.cont [6/16] 0.0, 128
    %3053 = vxpose.xlu0.b32.cont [7/16] 0.0, 128
    %3054 = vxpose.xlu0.b32.cont [8/16] 0.0, 128
    %3055 = vxpose.xlu0.b32.cont [9/16] 0.0, 128
    %3056 = vxpose.xlu0.b32.cont [10/16] 0.0, 128
    %3057 = vxpose.xlu0.b32.cont [11/16] 0.0, 128
    %3058 = vxpose.xlu0.b32.cont [12/16] 0.0, 128
    %3059 = vxpose.xlu0.b32.cont [13/16] 0.0, 128
    %3060 = vxpose.xlu0.b32.cont [14/16] 0.0, 128
    %3061 = vxpose.xlu0.b32.cont [15/16] 0.0, 128
    %3062 = vxpose.xlu0.b32.end [16/16] 0.0, 128
    %v3063 = vpop.trf.xlu0
    %v3064 = vpop.trf.xlu0
    %v3065 = vpop.trf.xlu0
    %v3066 = vpop.trf.xlu0
    %v3067 = vpop.trf.xlu0
    %v3068 = vpop.trf.xlu0
    %v3069 = vpop.trf.xlu0
    %v3070 = vpop.trf.xlu0
    %v3071 = vpop.trf.xlu0
    %v3072 = vpop.trf.xlu0
    %v3073 = vpop.trf.xlu0
    %v3074 = vpop.trf.xlu0
    %v3075 = vpop.trf.xlu0
    %v3076 = vpop.trf.xlu0
    %v3077 = vpop.trf.xlu0
    %v3078 = vpop.trf.xlu0
    %v3080 = vsel %vm906, %v3063, 0
    %v3083 = vsel %vm906, %v3064, 0
    %3085 = vmatprep.subr.mxu0 0.0
    %3086 = vmatpush1.msra.mxu0 0.0
    %3087 = vmatprep.subr.mxu0 0.0
    %3088 = vmatpush1.msra.mxu0 0.0
    %3089 = vmatprep.subr.mxu0 0.0
    %3090 = vmatpush1.msra.mxu0 0.0
    %3091 = vmatprep.subr.mxu0 0.0
    %3092 = vmatpush1.msra.mxu0 0.0
    %3093 = vmatprep.subr.mxu0 0.0
    %3094 = vmatpush1.msra.mxu0 0.0
    %3095 = vmatprep.subr.mxu0 0.0
    %3096 = vmatpush1.msra.mxu0 0.0
    %3097 = vmatprep.subr.mxu0 0.0
    %3098 = vmatpush1.msra.mxu0 0.0
    %3099 = vmatprep.subr.mxu0 0.0
    %3100 = vmatpush1.msra.mxu0 0.0
    %3101 = vmatprep.subr.mxu0 0.0
    %3102 = vmatpush1.msra.mxu0 0.0
    %3103 = vmatprep.subr.mxu0 0.0
    %3104 = vmatpush1.msra.mxu0 0.0
    %3105 = vmatprep.subr.mxu0 0.0
    %3106 = vmatpush1.msra.mxu0 0.0
    %3107 = vmatprep.subr.mxu0 0.0
    %3108 = vmatpush1.msra.mxu0 0.0
    %3109 = vmatprep.subr.mxu0 0.0
    %3110 = vmatpush1.msra.mxu0 %v793
    %3111 = vmatprep.subr.mxu0 0.0
    %3112 = vmatpush1.msra.mxu0 %v792
    %3113 = vmatprep.subr.mxu0 0.0
    %3114 = vmatpush1.msra.mxu0 %v791
    %3115 = vmatprep.subr.mxu0 0.0
    %3116 = vmatpush1.msra.mxu0 %v790
    %3117 = vmatprep.subr.mxu0 0.0
    %3118 = vmatpush2.msra.mxu0 0.0
    %3119 = vmatprep.subr.mxu0 0.0
    %3120 = vmatpush2.msra.mxu0 0.0
    %3121 = vmatprep.subr.mxu0 0.0
    %3122 = vmatpush2.msra.mxu0 0.0
    %3123 = vmatprep.subr.mxu0 0.0
    %3124 = vmatpush2.msra.mxu0 0.0
    %3125 = vmatprep.subr.mxu0 0.0
    %3126 = vmatpush2.msra.mxu0 0.0
    %3127 = vmatprep.subr.mxu0 0.0
    %3128 = vmatpush2.msra.mxu0 0.0
    %3129 = vmatprep.subr.mxu0 0.0
    %3130 = vmatpush2.msra.mxu0 0.0
    %3131 = vmatprep.subr.mxu0 0.0
    %3132 = vmatpush2.msra.mxu0 0.0
    %3133 = vmatprep.subr.mxu0 0.0
    %3134 = vmatpush2.msra.mxu0 0.0
    %3135 = vmatprep.subr.mxu0 0.0
    %3136 = vmatpush2.msra.mxu0 0.0
    %3137 = vmatprep.subr.mxu0 0.0
    %3138 = vmatpush2.msra.mxu0 0.0
    %3139 = vmatprep.subr.mxu0 0.0
    %3140 = vmatpush2.msra.mxu0 0.0
    %3141 = vmatprep.subr.mxu0 0.0
    %3142 = vmatpush2.msra.mxu0 0.0
    %3143 = vmatprep.subr.mxu0 0.0
    %3144 = vmatpush2.msra.mxu0 0.0
    %3145 = vmatprep.subr.mxu0 0.0
    %3146 = vmatpush2.msra.mxu0 0.0
    %3147 = vmatprep.subr.mxu0 0.0
    %3148 = vmatpush2.msra.mxu0 0.0
    %3149 = vmatprep.mubr.f32.mxu0 0.0
    %3150 = vmatmul.mubr.f32.gmra.mxu0 %v3080
    %v3151 = vpop.f32.mrf.mxu0
    %v3152 = vadd.f32 %v794, %v3151
    %v3153 = vpop.f32.mrf.mxu0
    %3154 = vmatprep.mubr.f32.mxu0 0.0
    %3155 = vmatmul.mubr.f32.gmra.mxu0 %v3083
    %v3156 = vpop.f32.mrf.mxu0
    %v3157 = vadd.f32 %v795, %v3156
    %v3158 = vpop.f32.mrf.mxu0
    %3159 = vdwg.mxu0
    %s3160 = scalar_lea.vmem [#allocation2], 16
    %3161 = vst.msk [vmem:[%s3160] sm:$0xff] %vm62, %v3152
    %3162 = vst.msk [vmem:[%s3160 + $0x8] sm:$0xff] %vm62, %v3157
    // Predicated region
    $region54: #{attention_forward.1} parent=1 // pred_check
      _
    $region55: #{attention_forward.1} parent=1 // pred_check_branch
      %3164 = sbr.rel (0) target = $region57
    $region56: #{attention_forward.1} parent=1 // pred_region
      %s3166 = ssub.s32 512, 512
      %3167 = vsyncadd [#allocation3], %s3166
      %s3168 = sshll.u32 [#allocation2], 4
      %s3169 = int_to_ptr.vmem [resolvable:$true] %s3168
      %3174 = dma.vmem_to_hbm [thread:$0]  %s3169, 512, %s13, [#allocation3], 128, 128, 8
    $region57: #{attention_forward.1} parent=1 // pred_fallthru
      _
    // Predicated region
    $region58: #{attention_forward.1} parent=1 // pred_check
      _
    $region59: #{attention_forward.1} parent=1 // pred_check_branch
      %3176 = sbr.rel (0) target = $region61
    $region60: #{attention_forward.1} parent=1 // pred_region
      %3177 = dma.done [#allocation3], 512
    $region61: #{attention_forward.1} parent=1 // pred_fallthru
      _
    %3178 = vsyncpa [#allocation3], 1

</llo_original>
